<compile_context>
chip_gen: v5e
topology: v5e:2x2
jax: 0.10.0
libtpu: 0.0.40
codegen_flags: <defaults>
</compile_context>

<pallas_src>
import functools

import jax
import jax.numpy as jnp
from jax import lax
from jax.experimental import pallas as pl
from jax.experimental.pallas import tpu as pltpu


# --------------------------------------------------------------------------
# small in-kernel helpers
# --------------------------------------------------------------------------
def _layer_norm(x, gamma, beta, eps=1e-5):
    mu = jnp.mean(x, axis=-1, keepdims=True)
    var = jnp.mean(jnp.square(x - mu), axis=-1, keepdims=True)
    return (x - mu) * lax.rsqrt(var + eps) * gamma + beta


def _sigmoid(x):
    # manual logistic (exp + div only) to keep the Mosaic lowering trivial
    return 1.0 / (1.0 + jnp.exp(-x))


# --------------------------------------------------------------------------
# fused kernel: encode (LayerNorm -> k/v -> pos_enc) + slot-iteration loop,
# one batch element per grid step; k_pos / v_pos never leave VMEM.
# --------------------------------------------------------------------------
def _slot_attention_kernel(
    x_ref,                      # (1, N, F+2)  unsplit input: [features | grid(2)]
    slots0_ref,                 # (1, K, S)    learnable slot init (shared across batch)
    ln_in_g, ln_in_b,           # (1, F)
    w_kv_ref,                   # (F, 2S)      [Wk^T | Wv^T] fused
    wpa_ref, bpa_ref,           # (2, S), (1, S)   ProjectAdd linear
    ln_pe_g, ln_pe_b,           # (1, S)
    pe_w1, pe_b1,               # (S, H), (1, H)
    pe_w2, pe_b2,               # (H, S), (1, S)
    ln_s_g, ln_s_b,             # (1, S)
    wq_ref,                     # (S, S)
    w_ih_ref, w_hh_ref,         # (S, 3S)
    b_ih_ref, b_hh_ref,         # (1, 3S)
    ln_m_g, ln_m_b,             # (1, S)
    mlp_w1, mlp_b1,             # (S, H), (1, H)
    mlp_w2, mlp_b2,             # (H, S), (1, S)
    out_ref,                    # (1, K, S)
    *, in_features, slot_size, num_iterations, epsilon,
):
    F = in_features
    S = slot_size

    # ---------------- encode: LayerNorm -> fused k|v projection ----------------
    x = x_ref[0].astype(jnp.float32)                 # (N, F+2)
    N = x.shape[0]
    feats = x[:, :F]                                  # static in-kernel slices
    g0 = x[:, F:F + 1]                                # grid coord 0
    g1 = x[:, F + 1:F + 2]                            # grid coord 1

    xn = _layer_norm(feats, ln_in_g[...], ln_in_b[...])
    kv = jnp.dot(xn, w_kv_ref[...], preferred_element_type=jnp.float32)   # (N, 2S)

    # ProjectAdd term from the grids: K=2 contraction as two VPU broadcast-FMAs.
    pa = g0 * wpa_ref[0:1, :] + g1 * wpa_ref[1:2, :] + bpa_ref[...]        # (N, S)

    # ---------------- pos_enc once on the row-stacked [k; v] ----------------
    kv_rows = jnp.concatenate([kv[:, :S], kv[:, S:2 * S]], axis=0)         # (2N, S)
    pa2 = jnp.concatenate([pa, pa], axis=0)                                # (2N, S)
    y = _layer_norm(kv_rows + pa2, ln_pe_g[...], ln_pe_b[...])
    h = jnp.maximum(
        jnp.dot(y, pe_w1[...], preferred_element_type=jnp.float32) + pe_b1[...],
        0.0)
    kv_pos = jnp.dot(h, pe_w2[...], preferred_element_type=jnp.float32) + pe_b2[...]

    k_pos = kv_pos[:N]                               # (N, S)
    v_pos = kv_pos[N:]                               # (N, S)
    kpT = k_pos.T                                    # (S, N) — hoisted out of the loop

    # ---------------- iterative slot updates ----------------
    slots = slots0_ref[0].astype(jnp.float32)        # (K, S)
    scale = float(S) ** -0.5

    for _ in range(num_iterations):                  # small static trip count
        slots_prev = slots
        sn = _layer_norm(slots, ln_s_g[...], ln_s_b[...])
        q = jnp.dot(sn, wq_ref[...], preferred_element_type=jnp.float32)   # (K, S)

        # attention in (K, N) orientation: logits[k, n] = scale * <q_k, kpos_n>
        logits = scale * jnp.dot(q, kpT, preferred_element_type=jnp.float32)  # (K, N)

        # softmax over slots (axis 0): tiny sublane reduce
        m = jnp.max(logits, axis=0, keepdims=True)
        e = jnp.exp(logits - m)
        attn = e * pl.reciprocal(jnp.sum(e, axis=0, keepdims=True), approx=True)
        attn = attn + epsilon
        # normalize over inputs (axis 1): lane reduce
        attn = attn * pl.reciprocal(jnp.sum(attn, axis=1, keepdims=True), approx=True)

        # weighted mean: (K, N) @ (N, S) — no per-iteration transpose needed
        updates = jnp.dot(attn, v_pos, preferred_element_type=jnp.float32)  # (K, S)

        # GRUCell (PyTorch gate order: r, z, n)
        gi = jnp.dot(updates, w_ih_ref[...],
                     preferred_element_type=jnp.float32) + b_ih_ref[...]
        gh = jnp.dot(slots_prev, w_hh_ref[...],
                     preferred_element_type=jnp.float32) + b_hh_ref[...]
        r = _sigmoid(gi[:, 0:S] + gh[:, 0:S])
        z = _sigmoid(gi[:, S:2 * S] + gh[:, S:2 * S])
        n = jnp.tanh(gi[:, 2 * S:3 * S] + r * gh[:, 2 * S:3 * S])
        slots = (1.0 - z) * n + z * slots_prev

        # residual MLP
        mn = _layer_norm(slots, ln_m_g[...], ln_m_b[...])
        hm = jnp.maximum(
            jnp.dot(mn, mlp_w1[...], preferred_element_type=jnp.float32) + mlp_b1[...],
            0.0)
        slots = slots + jnp.dot(hm, mlp_w2[...],
                                preferred_element_type=jnp.float32) + mlp_b2[...]

    out_ref[0] = slots.astype(out_ref.dtype)


# --------------------------------------------------------------------------
# parameter preparation (run ONCE, outside the jitted forward)
# --------------------------------------------------------------------------
_PARAM_ORDER = (
    'ln_in_g', 'ln_in_b', 'w_kv', 'pa_w', 'pa_b', 'ln_pe_g', 'ln_pe_b',
    'pe_w1', 'pe_b1', 'pe_w2', 'pe_b2',
    'ln_s_g', 'ln_s_b', 'w_q', 'gru_w_ih', 'gru_w_hh', 'gru_b_ih', 'gru_b_hh',
    'ln_m_g', 'ln_m_b', 'mlp_w1', 'mlp_b1', 'mlp_w2', 'mlp_b2',
)


def prepare_slot_attention_params(params):
    """Pre-transpose / pre-fuse the torch-layout weights once (eagerly)."""
    f32 = jnp.float32

    def row(a):
        return jnp.asarray(a, f32).reshape(1, -1)

    def mat(a):
        return jnp.asarray(a, f32)

    prepared = {
        'ln_in_g': row(params['ln_in_g']), 'ln_in_b': row(params['ln_in_b']),
        # fused [Wk^T | Wv^T]  -> (F, 2S)
        'w_kv': jnp.concatenate([mat(params['w_k']).T, mat(params['w_v']).T], axis=1),
        'pa_w': mat(params['pa_w']).T,                 # (2, S)
        'pa_b': row(params['pa_b']),
        'ln_pe_g': row(params['ln_pe_g']), 'ln_pe_b': row(params['ln_pe_b']),
        'pe_w1': mat(params['pe_w1']).T, 'pe_b1': row(params['pe_b1']),
        'pe_w2': mat(params['pe_w2']).T, 'pe_b2': row(params['pe_b2']),
        'ln_s_g': row(params['ln_s_g']), 'ln_s_b': row(params['ln_s_b']),
        'w_q': mat(params['w_q']).T,                   # (S, S)
        'gru_w_ih': mat(params['gru_w_ih']).T,         # (S, 3S)
        'gru_w_hh': mat(params['gru_w_hh']).T,         # (S, 3S)
        'gru_b_ih': row(params['gru_b_ih']), 'gru_b_hh': row(params['gru_b_hh']),
        'ln_m_g': row(params['ln_m_g']), 'ln_m_b': row(params['ln_m_b']),
        'mlp_w1': mat(params['mlp_w1']).T, 'mlp_b1': row(params['mlp_b1']),
        'mlp_w2': mat(params['mlp_w2']).T, 'mlp_b2': row(params['mlp_b2']),
        # learnable slot init, shared across the batch (no HBM broadcast needed)
        'slots0': mat(params['slots']),                # (1, K, S)
    }
    return prepared


# --------------------------------------------------------------------------
# wrapper: single fused pallas_call, grid over the batch
# --------------------------------------------------------------------------
def slot_attention_forward(inputs, prepared, *, num_iterations, num_slots,
                           slot_size, mlp_hidden_size, epsilon=1e-8):
    B, N, Fin = inputs.shape
    in_features = Fin - 2
    S = slot_size
    dtype = inputs.dtype

    weights = [prepared[name] for name in _PARAM_ORDER]     # all 2-D, f32
    slots0 = prepared['slots0']                              # (1, K, S)

    in_specs = [
        pl.BlockSpec((1, N, Fin), lambda b: (b, 0, 0)),          # per-batch tokens
        pl.BlockSpec((1, num_slots, S), lambda b: (0, 0, 0)),    # shared slot init
    ]
    # weights: full-array blocks, constant index_map -> resident in VMEM
    in_specs += [pl.BlockSpec(w.shape, lambda b: (0, 0)) for w in weights]

    # NOTE(v7x): if a trace shows one TensorCore idle, switch this axis to
    # pltpu.CORE_PARALLEL; plain "parallel" is kept here for portability.
    out = pl.pallas_call(
        functools.partial(
            _slot_attention_kernel,
            in_features=in_features, slot_size=S,
            num_iterations=num_iterations, epsilon=epsilon),
        out_shape=jax.ShapeDtypeStruct((B, num_slots, S), dtype),
        grid=(B,),
        in_specs=in_specs,
        out_specs=pl.BlockSpec((1, num_slots, S), lambda b: (b, 0, 0)),
        compiler_params=pltpu.CompilerParams(dimension_semantics=("parallel",)),
    )(inputs, slots0, *weights)
    return out


# --------------------------------------------------------------------------
# pure-JAX reference (mirrors the PyTorch module)
# --------------------------------------------------------------------------
def slot_attention_reference(inputs, params, *, num_iterations, num_slots,
                             slot_size, mlp_hidden_size, epsilon=1e-8):
    B, N, Fin = inputs.shape
    in_f = Fin - 2
    S = slot_size

    def ln(x, g, b, eps=1e-5):
        mu = x.mean(-1, keepdims=True)
        var = ((x - mu) ** 2).mean(-1, keepdims=True)
        return (x - mu) / jnp.sqrt(var + eps) * g + b

    feats, grids = inputs[..., :in_f], inputs[..., in_f:]
    xn = ln(feats, params['ln_in_g'], params['ln_in_b'])
    k = xn @ params['w_k'].T
    v = xn @ params['w_v'].T

    def pos_enc(h):
        y = h + grids @ params['pa_w'].T + params['pa_b']          # ProjectAdd
        y = ln(y, params['ln_pe_g'], params['ln_pe_b'])
        y = jnp.maximum(y @ params['pe_w1'].T + params['pe_b1'], 0.0)
        return y @ params['pe_w2'].T + params['pe_b2']

    k_pos, v_pos = pos_enc(k), pos_enc(v)
    slots = jnp.broadcast_to(params['slots'], (B, num_slots, S))

    for _ in range(num_iterations):
        slots_prev = slots
        sn = ln(slots, params['ln_s_g'], params['ln_s_b'])
        q = sn @ params['w_q'].T
        logits = (S ** -0.5) * jnp.einsum('bnd,bkd->bnk', k_pos, q)
        attn = jax.nn.softmax(logits, axis=-1) + epsilon
        attn = attn / attn.sum(axis=1, keepdims=True)
        updates = jnp.einsum('bnk,bnd->bkd', attn, v_pos)
        u2 = updates.reshape(B * num_slots, S)
        h2 = slots_prev.reshape(B * num_slots, S)
        gi = u2 @ params['gru_w_ih'].T + params['gru_b_ih']
        gh = h2 @ params['gru_w_hh'].T + params['gru_b_hh']
        r = jax.nn.sigmoid(gi[:, :S] + gh[:, :S])
        z = jax.nn.sigmoid(gi[:, S:2 * S] + gh[:, S:2 * S])
        n = jnp.tanh(gi[:, 2 * S:] + r * gh[:, 2 * S:])
        slots = ((1.0 - z) * n + z * h2).reshape(B, num_slots, S)
        mn = ln(slots, params['ln_m_g'], params['ln_m_b'])
        slots = slots + jnp.maximum(
            mn @ params['mlp_w1'].T + params['mlp_b1'], 0.0) @ params['mlp_w2'].T + params['mlp_b2']
    return slots


# --------------------------------------------------------------------------
if __name__ == "__main__":
    # Small shapes consistent with the module: batch=2, 8x8 spatial -> 64 tokens,
    # in_features=32 (+2 grid coords), slot_size=32, mlp_hidden=32, 4 slots, 3 iters.
    in_features = 32
    slot_size = 32
    mlp_hidden = 32
    num_slots = 4
    num_iterations = 3
    batch, num_inputs = 2, 64

    key = jax.random.PRNGKey(0)
    ks = jax.random.split(key, 16)

    def w(k, shape, scale=0.1):
        return jax.random.normal(k, shape, dtype=jnp.float32) * scale

    S, H, F = slot_size, mlp_hidden, in_features
    params = {
        'ln_in_g': jnp.ones((F,), jnp.float32), 'ln_in_b': jnp.zeros((F,), jnp.float32),
        'w_k': w(ks[0], (S, F)), 'w_v': w(ks[1], (S, F)),
        'pa_w': w(ks[2], (S, 2)), 'pa_b': w(ks[3], (S,)),
        'ln_pe_g': jnp.ones((S,), jnp.float32), 'ln_pe_b': jnp.zeros((S,), jnp.float32),
        'pe_w1': w(ks[4], (H, S)), 'pe_b1': w(ks[5], (H,)),
        'pe_w2': w(ks[6], (S, H)), 'pe_b2': w(ks[7], (S,)),
        'slots': jax.random.normal(ks[8], (1, num_slots, S), dtype=jnp.float32),
        'ln_s_g': jnp.ones((S,), jnp.float32), 'ln_s_b': jnp.zeros((S,), jnp.float32),
        'w_q': w(ks[9], (S, S)),
        'gru_w_ih': w(ks[10], (3 * S, S)), 'gru_w_hh': w(ks[11], (3 * S, S)),
        'gru_b_ih': w(ks[12], (3 * S,)), 'gru_b_hh': w(ks[13], (3 * S,)),
        'ln_m_g': jnp.ones((S,), jnp.float32), 'ln_m_b': jnp.zeros((S,), jnp.float32),
        'mlp_w1': w(ks[14], (H, S)), 'mlp_b1': jnp.zeros((H,), jnp.float32),
        'mlp_w2': w(ks[15], (S, H)), 'mlp_b2': jnp.zeros((S,), jnp.float32),
    }

    inputs = jax.random.normal(key, (batch, num_inputs, in_features + 2),
                               dtype=jnp.float32)

    # weight prep done ONCE, eagerly, outside the jitted forward
    prepared = prepare_slot_attention_params(params)

    fwd = jax.jit(functools.partial(
        slot_attention_forward, num_iterations=num_iterations,
        num_slots=num_slots, slot_size=slot_size, mlp_hidden_size=mlp_hidden))
    out = jax.block_until_ready(fwd(inputs, prepared))

    ref = slot_attention_reference(
        inputs, params, num_iterations=num_iterations, num_slots=num_slots,
        slot_size=slot_size, mlp_hidden_size=mlp_hidden)

    assert out.shape == (batch, num_slots, slot_size)
    assert bool(jnp.all(jnp.isfinite(out)))
    max_err = float(jnp.max(jnp.abs(out - ref)))
    assert jnp.allclose(out, ref, atol=2e-2, rtol=2e-2), f"max |diff| = {max_err}"

    print("KERNEL_OK")
</pallas_src>

<mosaic_0001>
module attributes {stable_mosaic.version = 11 : i64} {
  func.func @_slot_attention_kernel(%arg0: i32, %arg1: memref<1x64x34xf32, #tpu.memory_space<vmem>>, %arg2: memref<1x4x32xf32, #tpu.memory_space<vmem>>, %arg3: memref<1x32xf32, #tpu.memory_space<vmem>>, %arg4: memref<1x32xf32, #tpu.memory_space<vmem>>, %arg5: memref<32x64xf32, #tpu.memory_space<vmem>>, %arg6: memref<2x32xf32, #tpu.memory_space<vmem>>, %arg7: memref<1x32xf32, #tpu.memory_space<vmem>>, %arg8: memref<1x32xf32, #tpu.memory_space<vmem>>, %arg9: memref<1x32xf32, #tpu.memory_space<vmem>>, %arg10: memref<32x32xf32, #tpu.memory_space<vmem>>, %arg11: memref<1x32xf32, #tpu.memory_space<vmem>>, %arg12: memref<32x32xf32, #tpu.memory_space<vmem>>, %arg13: memref<1x32xf32, #tpu.memory_space<vmem>>, %arg14: memref<1x32xf32, #tpu.memory_space<vmem>>, %arg15: memref<1x32xf32, #tpu.memory_space<vmem>>, %arg16: memref<32x32xf32, #tpu.memory_space<vmem>>, %arg17: memref<32x96xf32, #tpu.memory_space<vmem>>, %arg18: memref<32x96xf32, #tpu.memory_space<vmem>>, %arg19: memref<1x96xf32, #tpu.memory_space<vmem>>, %arg20: memref<1x96xf32, #tpu.memory_space<vmem>>, %arg21: memref<1x32xf32, #tpu.memory_space<vmem>>, %arg22: memref<1x32xf32, #tpu.memory_space<vmem>>, %arg23: memref<32x32xf32, #tpu.memory_space<vmem>>, %arg24: memref<1x32xf32, #tpu.memory_space<vmem>>, %arg25: memref<32x32xf32, #tpu.memory_space<vmem>>, %arg26: memref<1x32xf32, #tpu.memory_space<vmem>>, %arg27: memref<1x4x32xf32, #tpu.memory_space<vmem>>) attributes {dimension_semantics = [#tpu.dimension_semantics<parallel>], iteration_bounds = array<i64: 2>, scalar_prefetch = 0 : i64, scratch_operands = 0 : i64, tpu.core_type = #tpu.core_type<tc>, window_params = [{transform_indices = @transform_0, window_bounds = array<i64: 1, 64, 34>}, {pipeline_mode = #tpu.pipeline_mode<synchronous>, transform_indices = @transform_1, window_bounds = array<i64: 1, 4, 32>}, {pipeline_mode = #tpu.pipeline_mode<synchronous>, transform_indices = @transform_2, window_bounds = array<i64: 1, 32>}, {pipeline_mode = #tpu.pipeline_mode<synchronous>, transform_indices = @transform_3, window_bounds = array<i64: 1, 32>}, {pipeline_mode = #tpu.pipeline_mode<synchronous>, transform_indices = @transform_4, window_bounds = array<i64: 32, 64>}, {pipeline_mode = #tpu.pipeline_mode<synchronous>, transform_indices = @transform_5, window_bounds = array<i64: 2, 32>}, {pipeline_mode = #tpu.pipeline_mode<synchronous>, transform_indices = @transform_6, window_bounds = array<i64: 1, 32>}, {pipeline_mode = #tpu.pipeline_mode<synchronous>, transform_indices = @transform_7, window_bounds = array<i64: 1, 32>}, {pipeline_mode = #tpu.pipeline_mode<synchronous>, transform_indices = @transform_8, window_bounds = array<i64: 1, 32>}, {pipeline_mode = #tpu.pipeline_mode<synchronous>, transform_indices = @transform_9, window_bounds = array<i64: 32, 32>}, {pipeline_mode = #tpu.pipeline_mode<synchronous>, transform_indices = @transform_10, window_bounds = array<i64: 1, 32>}, {pipeline_mode = #tpu.pipeline_mode<synchronous>, transform_indices = @transform_11, window_bounds = array<i64: 32, 32>}, {pipeline_mode = #tpu.pipeline_mode<synchronous>, transform_indices = @transform_12, window_bounds = array<i64: 1, 32>}, {pipeline_mode = #tpu.pipeline_mode<synchronous>, transform_indices = @transform_13, window_bounds = array<i64: 1, 32>}, {pipeline_mode = #tpu.pipeline_mode<synchronous>, transform_indices = @transform_14, window_bounds = array<i64: 1, 32>}, {pipeline_mode = #tpu.pipeline_mode<synchronous>, transform_indices = @transform_15, window_bounds = array<i64: 32, 32>}, {pipeline_mode = #tpu.pipeline_mode<synchronous>, transform_indices = @transform_16, window_bounds = array<i64: 32, 96>}, {pipeline_mode = #tpu.pipeline_mode<synchronous>, transform_indices = @transform_17, window_bounds = array<i64: 32, 96>}, {pipeline_mode = #tpu.pipeline_mode<synchronous>, transform_indices = @transform_18, window_bounds = array<i64: 1, 96>}, {pipeline_mode = #tpu.pipeline_mode<synchronous>, transform_indices = @transform_19, window_bounds = array<i64: 1, 96>}, {pipeline_mode = #tpu.pipeline_mode<synchronous>, transform_indices = @transform_20, window_bounds = array<i64: 1, 32>}, {pipeline_mode = #tpu.pipeline_mode<synchronous>, transform_indices = @transform_21, window_bounds = array<i64: 1, 32>}, {pipeline_mode = #tpu.pipeline_mode<synchronous>, transform_indices = @transform_22, window_bounds = array<i64: 32, 32>}, {pipeline_mode = #tpu.pipeline_mode<synchronous>, transform_indices = @transform_23, window_bounds = array<i64: 1, 32>}, {pipeline_mode = #tpu.pipeline_mode<synchronous>, transform_indices = @transform_24, window_bounds = array<i64: 32, 32>}, {pipeline_mode = #tpu.pipeline_mode<synchronous>, transform_indices = @transform_25, window_bounds = array<i64: 1, 32>}, {transform_indices = @transform_26, window_bounds = array<i64: 1, 4, 32>}]} {
    %c0 = arith.constant 0 : index
    %c0_0 = arith.constant 0 : index
    %c0_1 = arith.constant 0 : index
    %0 = vector.load %arg1[%c0, %c0_0, %c0_1] : memref<1x64x34xf32, #tpu.memory_space<vmem>>, vector<1x64x34xf32>
    %1 = vector.shape_cast %0 : vector<1x64x34xf32> to vector<64x34xf32>
    %2 = vector.extract_strided_slice %1 {offsets = [0, 0], sizes = [64, 32], strides = [1, 1]} : vector<64x34xf32> to vector<64x32xf32>
    %3 = vector.extract_strided_slice %1 {offsets = [0, 32], sizes = [64, 1], strides = [1, 1]} : vector<64x34xf32> to vector<64x1xf32>
    %4 = vector.extract_strided_slice %1 {offsets = [0, 33], sizes = [64, 1], strides = [1, 1]} : vector<64x34xf32> to vector<64x1xf32>
    %c0_2 = arith.constant 0 : index
    %c0_3 = arith.constant 0 : index
    %5 = vector.load %arg3[%c0_2, %c0_3] : memref<1x32xf32, #tpu.memory_space<vmem>>, vector<1x32xf32>
    %c0_4 = arith.constant 0 : index
    %c0_5 = arith.constant 0 : index
    %6 = vector.load %arg4[%c0_4, %c0_5] : memref<1x32xf32, #tpu.memory_space<vmem>>, vector<1x32xf32>
    %cst = arith.constant dense<0.000000e+00> : vector<64xf32>
    %7 = vector.multi_reduction <add>, %2, %cst [1] : vector<64x32xf32> to vector<64xf32>
    %8 = vector.shape_cast %7 : vector<64xf32> to vector<64x1xf32>
    %cst_6 = arith.constant 3.200000e+01 : f32
    %9 = vector.broadcast %cst_6 : f32 to vector<64x1xf32>
    %10 = arith.divf %8, %9 : vector<64x1xf32>
    %11 = vector.broadcast %10 : vector<64x1xf32> to vector<64x32xf32>
    %12 = arith.subf %2, %11 : vector<64x32xf32>
    %13 = arith.mulf %12, %12 : vector<64x32xf32>
    %cst_7 = arith.constant dense<0.000000e+00> : vector<64xf32>
    %14 = vector.multi_reduction <add>, %13, %cst_7 [1] : vector<64x32xf32> to vector<64xf32>
    %15 = vector.shape_cast %14 : vector<64xf32> to vector<64x1xf32>
    %cst_8 = arith.constant 3.200000e+01 : f32
    %16 = vector.broadcast %cst_8 : f32 to vector<64x1xf32>
    %17 = arith.divf %15, %16 : vector<64x1xf32>
    %18 = vector.broadcast %10 : vector<64x1xf32> to vector<64x32xf32>
    %19 = arith.subf %2, %18 : vector<64x32xf32>
    %cst_9 = arith.constant 9.99999974E-6 : f32
    %20 = vector.broadcast %cst_9 : f32 to vector<64x1xf32>
    %21 = arith.addf %17, %20 : vector<64x1xf32>
    %22 = math.rsqrt %21 : vector<64x1xf32>
    %23 = vector.broadcast %22 : vector<64x1xf32> to vector<64x32xf32>
    %24 = arith.mulf %19, %23 : vector<64x32xf32>
    %25 = vector.broadcast %5 : vector<1x32xf32> to vector<64x32xf32>
    %26 = arith.mulf %24, %25 : vector<64x32xf32>
    %27 = vector.broadcast %6 : vector<1x32xf32> to vector<64x32xf32>
    %28 = arith.addf %26, %27 : vector<64x32xf32>
    %c0_10 = arith.constant 0 : index
    %c0_11 = arith.constant 0 : index
    %29 = vector.load %arg5[%c0_10, %c0_11] : memref<32x64xf32, #tpu.memory_space<vmem>>, vector<32x64xf32>
    %cst_12 = arith.constant dense<0.000000e+00> : vector<64x64xf32>
    %30 = tpu.matmul %28, %29, %cst_12 {dimension_numbers = #tpu.dot_dimension_numbers<[1], [0], [0], [1], [0, 0, 1, 1], [], []>} : vector<64x32xf32>, vector<32x64xf32>, vector<64x64xf32> -> vector<64x64xf32>
    %c0_13 = arith.constant 0 : index
    %c0_14 = arith.constant 0 : index
    %31 = vector.load %arg6[%c0_13, %c0_14] : memref<2x32xf32, #tpu.memory_space<vmem>>, vector<1x32xf32>
    %32 = vector.broadcast %3 : vector<64x1xf32> to vector<64x32xf32>
    %33 = vector.broadcast %31 : vector<1x32xf32> to vector<64x32xf32>
    %34 = arith.mulf %32, %33 : vector<64x32xf32>
    %c1 = arith.constant 1 : index
    %c0_15 = arith.constant 0 : index
    %35 = vector.load %arg6[%c1, %c0_15] : memref<2x32xf32, #tpu.memory_space<vmem>>, vector<1x32xf32>
    %36 = vector.broadcast %4 : vector<64x1xf32> to vector<64x32xf32>
    %37 = vector.broadcast %35 : vector<1x32xf32> to vector<64x32xf32>
    %38 = arith.mulf %36, %37 : vector<64x32xf32>
    %39 = arith.addf %34, %38 : vector<64x32xf32>
    %c0_16 = arith.constant 0 : index
    %c0_17 = arith.constant 0 : index
    %40 = vector.load %arg7[%c0_16, %c0_17] : memref<1x32xf32, #tpu.memory_space<vmem>>, vector<1x32xf32>
    %41 = vector.broadcast %40 : vector<1x32xf32> to vector<64x32xf32>
    %42 = arith.addf %39, %41 : vector<64x32xf32>
    %43 = vector.extract_strided_slice %30 {offsets = [0, 0], sizes = [64, 32], strides = [1, 1]} : vector<64x64xf32> to vector<64x32xf32>
    %44 = vector.extract_strided_slice %30 {offsets = [0, 32], sizes = [64, 32], strides = [1, 1]} : vector<64x64xf32> to vector<64x32xf32>
    %45 = tpu.concatenate %43, %44 in 0 : vector<64x32xf32>, vector<64x32xf32> -> vector<128x32xf32>
    %46 = tpu.concatenate %42, %42 in 0 : vector<64x32xf32>, vector<64x32xf32> -> vector<128x32xf32>
    %47 = arith.addf %45, %46 : vector<128x32xf32>
    %c0_18 = arith.constant 0 : index
    %c0_19 = arith.constant 0 : index
    %48 = vector.load %arg8[%c0_18, %c0_19] : memref<1x32xf32, #tpu.memory_space<vmem>>, vector<1x32xf32>
    %c0_20 = arith.constant 0 : index
    %c0_21 = arith.constant 0 : index
    %49 = vector.load %arg9[%c0_20, %c0_21] : memref<1x32xf32, #tpu.memory_space<vmem>>, vector<1x32xf32>
    %cst_22 = arith.constant dense<0.000000e+00> : vector<128xf32>
    %50 = vector.multi_reduction <add>, %47, %cst_22 [1] : vector<128x32xf32> to vector<128xf32>
    %51 = vector.shape_cast %50 : vector<128xf32> to vector<128x1xf32>
    %cst_23 = arith.constant 3.200000e+01 : f32
    %52 = vector.broadcast %cst_23 : f32 to vector<128x1xf32>
    %53 = arith.divf %51, %52 : vector<128x1xf32>
    %54 = vector.broadcast %53 : vector<128x1xf32> to vector<128x32xf32>
    %55 = arith.subf %47, %54 : vector<128x32xf32>
    %56 = arith.mulf %55, %55 : vector<128x32xf32>
    %cst_24 = arith.constant dense<0.000000e+00> : vector<128xf32>
    %57 = vector.multi_reduction <add>, %56, %cst_24 [1] : vector<128x32xf32> to vector<128xf32>
    %58 = vector.shape_cast %57 : vector<128xf32> to vector<128x1xf32>
    %cst_25 = arith.constant 3.200000e+01 : f32
    %59 = vector.broadcast %cst_25 : f32 to vector<128x1xf32>
    %60 = arith.divf %58, %59 : vector<128x1xf32>
    %61 = vector.broadcast %53 : vector<128x1xf32> to vector<128x32xf32>
    %62 = arith.subf %47, %61 : vector<128x32xf32>
    %cst_26 = arith.constant 9.99999974E-6 : f32
    %63 = vector.broadcast %cst_26 : f32 to vector<128x1xf32>
    %64 = arith.addf %60, %63 : vector<128x1xf32>
    %65 = math.rsqrt %64 : vector<128x1xf32>
    %66 = vector.broadcast %65 : vector<128x1xf32> to vector<128x32xf32>
    %67 = arith.mulf %62, %66 : vector<128x32xf32>
    %68 = vector.broadcast %48 : vector<1x32xf32> to vector<128x32xf32>
    %69 = arith.mulf %67, %68 : vector<128x32xf32>
    %70 = vector.broadcast %49 : vector<1x32xf32> to vector<128x32xf32>
    %71 = arith.addf %69, %70 : vector<128x32xf32>
    %c0_27 = arith.constant 0 : index
    %c0_28 = arith.constant 0 : index
    %72 = vector.load %arg10[%c0_27, %c0_28] : memref<32x32xf32, #tpu.memory_space<vmem>>, vector<32x32xf32>
    %cst_29 = arith.constant dense<0.000000e+00> : vector<128x32xf32>
    %73 = tpu.matmul %71, %72, %cst_29 {dimension_numbers = #tpu.dot_dimension_numbers<[1], [0], [0], [1], [0, 0, 1, 1], [], []>} : vector<128x32xf32>, vector<32x32xf32>, vector<128x32xf32> -> vector<128x32xf32>
    %c0_30 = arith.constant 0 : index
    %c0_31 = arith.constant 0 : index
    %74 = vector.load %arg11[%c0_30, %c0_31] : memref<1x32xf32, #tpu.memory_space<vmem>>, vector<1x32xf32>
    %75 = vector.broadcast %74 : vector<1x32xf32> to vector<128x32xf32>
    %76 = arith.addf %73, %75 : vector<128x32xf32>
    %cst_32 = arith.constant 0.000000e+00 : f32
    %77 = vector.broadcast %cst_32 : f32 to vector<128x32xf32>
    %78 = arith.maximumf %76, %77 : vector<128x32xf32>
    %c0_33 = arith.constant 0 : index
    %c0_34 = arith.constant 0 : index
    %79 = vector.load %arg12[%c0_33, %c0_34] : memref<32x32xf32, #tpu.memory_space<vmem>>, vector<32x32xf32>
    %cst_35 = arith.constant dense<0.000000e+00> : vector<128x32xf32>
    %80 = tpu.matmul %78, %79, %cst_35 {dimension_numbers = #tpu.dot_dimension_numbers<[1], [0], [0], [1], [0, 0, 1, 1], [], []>} : vector<128x32xf32>, vector<32x32xf32>, vector<128x32xf32> -> vector<128x32xf32>
    %c0_36 = arith.constant 0 : index
    %c0_37 = arith.constant 0 : index
    %81 = vector.load %arg13[%c0_36, %c0_37] : memref<1x32xf32, #tpu.memory_space<vmem>>, vector<1x32xf32>
    %82 = vector.broadcast %81 : vector<1x32xf32> to vector<128x32xf32>
    %83 = arith.addf %80, %82 : vector<128x32xf32>
    %84 = vector.extract_strided_slice %83 {offsets = [0, 0], sizes = [64, 32], strides = [1, 1]} : vector<128x32xf32> to vector<64x32xf32>
    %85 = vector.extract_strided_slice %83 {offsets = [64, 0], sizes = [64, 32], strides = [1, 1]} : vector<128x32xf32> to vector<64x32xf32>
    %86 = tpu.transpose %84, [1, 0] : vector<64x32xf32> -> vector<32x64xf32>
    %c0_38 = arith.constant 0 : index
    %c0_39 = arith.constant 0 : index
    %c0_40 = arith.constant 0 : index
    %87 = vector.load %arg2[%c0_38, %c0_39, %c0_40] : memref<1x4x32xf32, #tpu.memory_space<vmem>>, vector<1x4x32xf32>
    %88 = vector.shape_cast %87 : vector<1x4x32xf32> to vector<4x32xf32>
    %c0_41 = arith.constant 0 : index
    %c0_42 = arith.constant 0 : index
    %89 = vector.load %arg14[%c0_41, %c0_42] : memref<1x32xf32, #tpu.memory_space<vmem>>, vector<1x32xf32>
    %c0_43 = arith.constant 0 : index
    %c0_44 = arith.constant 0 : index
    %90 = vector.load %arg15[%c0_43, %c0_44] : memref<1x32xf32, #tpu.memory_space<vmem>>, vector<1x32xf32>
    %cst_45 = arith.constant dense<0.000000e+00> : vector<4xf32>
    %91 = vector.multi_reduction <add>, %88, %cst_45 [1] : vector<4x32xf32> to vector<4xf32>
    %92 = vector.shape_cast %91 : vector<4xf32> to vector<4x1xf32>
    %cst_46 = arith.constant 3.200000e+01 : f32
    %93 = vector.broadcast %cst_46 : f32 to vector<4x1xf32>
    %94 = arith.divf %92, %93 : vector<4x1xf32>
    %95 = vector.broadcast %94 : vector<4x1xf32> to vector<4x32xf32>
    %96 = arith.subf %88, %95 : vector<4x32xf32>
    %97 = arith.mulf %96, %96 : vector<4x32xf32>
    %cst_47 = arith.constant dense<0.000000e+00> : vector<4xf32>
    %98 = vector.multi_reduction <add>, %97, %cst_47 [1] : vector<4x32xf32> to vector<4xf32>
    %99 = vector.shape_cast %98 : vector<4xf32> to vector<4x1xf32>
    %cst_48 = arith.constant 3.200000e+01 : f32
    %100 = vector.broadcast %cst_48 : f32 to vector<4x1xf32>
    %101 = arith.divf %99, %100 : vector<4x1xf32>
    %102 = vector.broadcast %94 : vector<4x1xf32> to vector<4x32xf32>
    %103 = arith.subf %88, %102 : vector<4x32xf32>
    %cst_49 = arith.constant 9.99999974E-6 : f32
    %104 = vector.broadcast %cst_49 : f32 to vector<4x1xf32>
    %105 = arith.addf %101, %104 : vector<4x1xf32>
    %106 = math.rsqrt %105 : vector<4x1xf32>
    %107 = vector.broadcast %106 : vector<4x1xf32> to vector<4x32xf32>
    %108 = arith.mulf %103, %107 : vector<4x32xf32>
    %109 = vector.broadcast %89 : vector<1x32xf32> to vector<4x32xf32>
    %110 = arith.mulf %108, %109 : vector<4x32xf32>
    %111 = vector.broadcast %90 : vector<1x32xf32> to vector<4x32xf32>
    %112 = arith.addf %110, %111 : vector<4x32xf32>
    %c0_50 = arith.constant 0 : index
    %c0_51 = arith.constant 0 : index
    %113 = vector.load %arg16[%c0_50, %c0_51] : memref<32x32xf32, #tpu.memory_space<vmem>>, vector<32x32xf32>
    %cst_52 = arith.constant dense<0.000000e+00> : vector<4x32xf32>
    %114 = tpu.matmul %112, %113, %cst_52 {dimension_numbers = #tpu.dot_dimension_numbers<[1], [0], [0], [1], [0, 0, 1, 1], [], []>} : vector<4x32xf32>, vector<32x32xf32>, vector<4x32xf32> -> vector<4x32xf32>
    %cst_53 = arith.constant dense<0.000000e+00> : vector<4x64xf32>
    %115 = tpu.matmul %114, %86, %cst_53 {dimension_numbers = #tpu.dot_dimension_numbers<[1], [0], [0], [1], [0, 0, 1, 1], [], []>} : vector<4x32xf32>, vector<32x64xf32>, vector<4x64xf32> -> vector<4x64xf32>
    %cst_54 = arith.constant 0.176776692 : f32
    %116 = vector.broadcast %cst_54 : f32 to vector<4x64xf32>
    %117 = arith.mulf %116, %115 : vector<4x64xf32>
    %cst_55 = arith.constant dense<0xFF800000> : vector<64xf32>
    %118 = vector.multi_reduction <maximumf>, %117, %cst_55 [0] : vector<4x64xf32> to vector<64xf32>
    %119 = vector.shape_cast %118 : vector<64xf32> to vector<1x64xf32>
    %120 = vector.broadcast %119 : vector<1x64xf32> to vector<4x64xf32>
    %121 = arith.subf %117, %120 : vector<4x64xf32>
    %122 = math.exp %121 : vector<4x64xf32>
    %cst_56 = arith.constant dense<0.000000e+00> : vector<64xf32>
    %123 = vector.multi_reduction <add>, %122, %cst_56 [0] : vector<4x64xf32> to vector<64xf32>
    %124 = vector.shape_cast %123 : vector<64xf32> to vector<1x64xf32>
    %125 = tpu.reciprocal %124 {approx = true} : vector<1x64xf32> -> vector<1x64xf32>
    %126 = vector.broadcast %125 : vector<1x64xf32> to vector<4x64xf32>
    %127 = arith.mulf %122, %126 : vector<4x64xf32>
    %cst_57 = arith.constant 9.99999993E-9 : f32
    %128 = vector.broadcast %cst_57 : f32 to vector<4x64xf32>
    %129 = arith.addf %127, %128 : vector<4x64xf32>
    %cst_58 = arith.constant dense<0.000000e+00> : vector<4xf32>
    %130 = vector.multi_reduction <add>, %129, %cst_58 [1] : vector<4x64xf32> to vector<4xf32>
    %131 = vector.shape_cast %130 : vector<4xf32> to vector<4x1xf32>
    %132 = tpu.reciprocal %131 {approx = true} : vector<4x1xf32> -> vector<4x1xf32>
    %133 = vector.broadcast %132 : vector<4x1xf32> to vector<4x64xf32>
    %134 = arith.mulf %129, %133 : vector<4x64xf32>
    %cst_59 = arith.constant dense<0.000000e+00> : vector<4x32xf32>
    %135 = tpu.matmul %134, %85, %cst_59 {dimension_numbers = #tpu.dot_dimension_numbers<[1], [0], [0], [1], [0, 0, 1, 1], [], []>} : vector<4x64xf32>, vector<64x32xf32>, vector<4x32xf32> -> vector<4x32xf32>
    %c0_60 = arith.constant 0 : index
    %c0_61 = arith.constant 0 : index
    %136 = vector.load %arg17[%c0_60, %c0_61] : memref<32x96xf32, #tpu.memory_space<vmem>>, vector<32x96xf32>
    %cst_62 = arith.constant dense<0.000000e+00> : vector<4x96xf32>
    %137 = tpu.matmul %135, %136, %cst_62 {dimension_numbers = #tpu.dot_dimension_numbers<[1], [0], [0], [1], [0, 0, 1, 1], [], []>} : vector<4x32xf32>, vector<32x96xf32>, vector<4x96xf32> -> vector<4x96xf32>
    %c0_63 = arith.constant 0 : index
    %c0_64 = arith.constant 0 : index
    %138 = vector.load %arg19[%c0_63, %c0_64] : memref<1x96xf32, #tpu.memory_space<vmem>>, vector<1x96xf32>
    %139 = vector.broadcast %138 : vector<1x96xf32> to vector<4x96xf32>
    %140 = arith.addf %137, %139 : vector<4x96xf32>
    %c0_65 = arith.constant 0 : index
    %c0_66 = arith.constant 0 : index
    %141 = vector.load %arg18[%c0_65, %c0_66] : memref<32x96xf32, #tpu.memory_space<vmem>>, vector<32x96xf32>
    %cst_67 = arith.constant dense<0.000000e+00> : vector<4x96xf32>
    %142 = tpu.matmul %88, %141, %cst_67 {dimension_numbers = #tpu.dot_dimension_numbers<[1], [0], [0], [1], [0, 0, 1, 1], [], []>} : vector<4x32xf32>, vector<32x96xf32>, vector<4x96xf32> -> vector<4x96xf32>
    %c0_68 = arith.constant 0 : index
    %c0_69 = arith.constant 0 : index
    %143 = vector.load %arg20[%c0_68, %c0_69] : memref<1x96xf32, #tpu.memory_space<vmem>>, vector<1x96xf32>
    %144 = vector.broadcast %143 : vector<1x96xf32> to vector<4x96xf32>
    %145 = arith.addf %142, %144 : vector<4x96xf32>
    %146 = vector.extract_strided_slice %140 {offsets = [0, 0], sizes = [4, 32], strides = [1, 1]} : vector<4x96xf32> to vector<4x32xf32>
    %147 = vector.extract_strided_slice %145 {offsets = [0, 0], sizes = [4, 32], strides = [1, 1]} : vector<4x96xf32> to vector<4x32xf32>
    %148 = arith.addf %146, %147 : vector<4x32xf32>
    %cst_70 = arith.constant 0.000000e+00 : f32
    %149 = vector.broadcast %cst_70 : f32 to vector<4x32xf32>
    %150 = arith.subf %149, %148 : vector<4x32xf32>
    %151 = math.exp %150 : vector<4x32xf32>
    %cst_71 = arith.constant 1.000000e+00 : f32
    %152 = vector.broadcast %cst_71 : f32 to vector<4x32xf32>
    %153 = arith.addf %152, %151 : vector<4x32xf32>
    %cst_72 = arith.constant 1.000000e+00 : f32
    %154 = vector.broadcast %cst_72 : f32 to vector<4x32xf32>
    %155 = arith.divf %154, %153 : vector<4x32xf32>
    %156 = vector.extract_strided_slice %140 {offsets = [0, 32], sizes = [4, 32], strides = [1, 1]} : vector<4x96xf32> to vector<4x32xf32>
    %157 = vector.extract_strided_slice %145 {offsets = [0, 32], sizes = [4, 32], strides = [1, 1]} : vector<4x96xf32> to vector<4x32xf32>
    %158 = arith.addf %156, %157 : vector<4x32xf32>
    %cst_73 = arith.constant 0.000000e+00 : f32
    %159 = vector.broadcast %cst_73 : f32 to vector<4x32xf32>
    %160 = arith.subf %159, %158 : vector<4x32xf32>
    %161 = math.exp %160 : vector<4x32xf32>
    %cst_74 = arith.constant 1.000000e+00 : f32
    %162 = vector.broadcast %cst_74 : f32 to vector<4x32xf32>
    %163 = arith.addf %162, %161 : vector<4x32xf32>
    %cst_75 = arith.constant 1.000000e+00 : f32
    %164 = vector.broadcast %cst_75 : f32 to vector<4x32xf32>
    %165 = arith.divf %164, %163 : vector<4x32xf32>
    %166 = vector.extract_strided_slice %140 {offsets = [0, 64], sizes = [4, 32], strides = [1, 1]} : vector<4x96xf32> to vector<4x32xf32>
    %167 = vector.extract_strided_slice %145 {offsets = [0, 64], sizes = [4, 32], strides = [1, 1]} : vector<4x96xf32> to vector<4x32xf32>
    %168 = arith.mulf %155, %167 : vector<4x32xf32>
    %169 = arith.addf %166, %168 : vector<4x32xf32>
    %170 = math.tanh %169 : vector<4x32xf32>
    %cst_76 = arith.constant 1.000000e+00 : f32
    %171 = vector.broadcast %cst_76 : f32 to vector<4x32xf32>
    %172 = arith.subf %171, %165 : vector<4x32xf32>
    %173 = arith.mulf %172, %170 : vector<4x32xf32>
    %174 = arith.mulf %165, %88 : vector<4x32xf32>
    %175 = arith.addf %173, %174 : vector<4x32xf32>
    %c0_77 = arith.constant 0 : index
    %c0_78 = arith.constant 0 : index
    %176 = vector.load %arg21[%c0_77, %c0_78] : memref<1x32xf32, #tpu.memory_space<vmem>>, vector<1x32xf32>
    %c0_79 = arith.constant 0 : index
    %c0_80 = arith.constant 0 : index
    %177 = vector.load %arg22[%c0_79, %c0_80] : memref<1x32xf32, #tpu.memory_space<vmem>>, vector<1x32xf32>
    %cst_81 = arith.constant dense<0.000000e+00> : vector<4xf32>
    %178 = vector.multi_reduction <add>, %175, %cst_81 [1] : vector<4x32xf32> to vector<4xf32>
    %179 = vector.shape_cast %178 : vector<4xf32> to vector<4x1xf32>
    %cst_82 = arith.constant 3.200000e+01 : f32
    %180 = vector.broadcast %cst_82 : f32 to vector<4x1xf32>
    %181 = arith.divf %179, %180 : vector<4x1xf32>
    %182 = vector.broadcast %181 : vector<4x1xf32> to vector<4x32xf32>
    %183 = arith.subf %175, %182 : vector<4x32xf32>
    %184 = arith.mulf %183, %183 : vector<4x32xf32>
    %cst_83 = arith.constant dense<0.000000e+00> : vector<4xf32>
    %185 = vector.multi_reduction <add>, %184, %cst_83 [1] : vector<4x32xf32> to vector<4xf32>
    %186 = vector.shape_cast %185 : vector<4xf32> to vector<4x1xf32>
    %cst_84 = arith.constant 3.200000e+01 : f32
    %187 = vector.broadcast %cst_84 : f32 to vector<4x1xf32>
    %188 = arith.divf %186, %187 : vector<4x1xf32>
    %189 = vector.broadcast %181 : vector<4x1xf32> to vector<4x32xf32>
    %190 = arith.subf %175, %189 : vector<4x32xf32>
    %cst_85 = arith.constant 9.99999974E-6 : f32
    %191 = vector.broadcast %cst_85 : f32 to vector<4x1xf32>
    %192 = arith.addf %188, %191 : vector<4x1xf32>
    %193 = math.rsqrt %192 : vector<4x1xf32>
    %194 = vector.broadcast %193 : vector<4x1xf32> to vector<4x32xf32>
    %195 = arith.mulf %190, %194 : vector<4x32xf32>
    %196 = vector.broadcast %176 : vector<1x32xf32> to vector<4x32xf32>
    %197 = arith.mulf %195, %196 : vector<4x32xf32>
    %198 = vector.broadcast %177 : vector<1x32xf32> to vector<4x32xf32>
    %199 = arith.addf %197, %198 : vector<4x32xf32>
    %c0_86 = arith.constant 0 : index
    %c0_87 = arith.constant 0 : index
    %200 = vector.load %arg23[%c0_86, %c0_87] : memref<32x32xf32, #tpu.memory_space<vmem>>, vector<32x32xf32>
    %cst_88 = arith.constant dense<0.000000e+00> : vector<4x32xf32>
    %201 = tpu.matmul %199, %200, %cst_88 {dimension_numbers = #tpu.dot_dimension_numbers<[1], [0], [0], [1], [0, 0, 1, 1], [], []>} : vector<4x32xf32>, vector<32x32xf32>, vector<4x32xf32> -> vector<4x32xf32>
    %c0_89 = arith.constant 0 : index
    %c0_90 = arith.constant 0 : index
    %202 = vector.load %arg24[%c0_89, %c0_90] : memref<1x32xf32, #tpu.memory_space<vmem>>, vector<1x32xf32>
    %203 = vector.broadcast %202 : vector<1x32xf32> to vector<4x32xf32>
    %204 = arith.addf %201, %203 : vector<4x32xf32>
    %cst_91 = arith.constant 0.000000e+00 : f32
    %205 = vector.broadcast %cst_91 : f32 to vector<4x32xf32>
    %206 = arith.maximumf %204, %205 : vector<4x32xf32>
    %c0_92 = arith.constant 0 : index
    %c0_93 = arith.constant 0 : index
    %207 = vector.load %arg25[%c0_92, %c0_93] : memref<32x32xf32, #tpu.memory_space<vmem>>, vector<32x32xf32>
    %cst_94 = arith.constant dense<0.000000e+00> : vector<4x32xf32>
    %208 = tpu.matmul %206, %207, %cst_94 {dimension_numbers = #tpu.dot_dimension_numbers<[1], [0], [0], [1], [0, 0, 1, 1], [], []>} : vector<4x32xf32>, vector<32x32xf32>, vector<4x32xf32> -> vector<4x32xf32>
    %209 = arith.addf %175, %208 : vector<4x32xf32>
    %c0_95 = arith.constant 0 : index
    %c0_96 = arith.constant 0 : index
    %210 = vector.load %arg26[%c0_95, %c0_96] : memref<1x32xf32, #tpu.memory_space<vmem>>, vector<1x32xf32>
    %211 = vector.broadcast %210 : vector<1x32xf32> to vector<4x32xf32>
    %212 = arith.addf %209, %211 : vector<4x32xf32>
    %c0_97 = arith.constant 0 : index
    %c0_98 = arith.constant 0 : index
    %213 = vector.load %arg14[%c0_97, %c0_98] : memref<1x32xf32, #tpu.memory_space<vmem>>, vector<1x32xf32>
    %c0_99 = arith.constant 0 : index
    %c0_100 = arith.constant 0 : index
    %214 = vector.load %arg15[%c0_99, %c0_100] : memref<1x32xf32, #tpu.memory_space<vmem>>, vector<1x32xf32>
    %cst_101 = arith.constant dense<0.000000e+00> : vector<4xf32>
    %215 = vector.multi_reduction <add>, %212, %cst_101 [1] : vector<4x32xf32> to vector<4xf32>
    %216 = vector.shape_cast %215 : vector<4xf32> to vector<4x1xf32>
    %cst_102 = arith.constant 3.200000e+01 : f32
    %217 = vector.broadcast %cst_102 : f32 to vector<4x1xf32>
    %218 = arith.divf %216, %217 : vector<4x1xf32>
    %219 = vector.broadcast %218 : vector<4x1xf32> to vector<4x32xf32>
    %220 = arith.subf %212, %219 : vector<4x32xf32>
    %221 = arith.mulf %220, %220 : vector<4x32xf32>
    %cst_103 = arith.constant dense<0.000000e+00> : vector<4xf32>
    %222 = vector.multi_reduction <add>, %221, %cst_103 [1] : vector<4x32xf32> to vector<4xf32>
    %223 = vector.shape_cast %222 : vector<4xf32> to vector<4x1xf32>
    %cst_104 = arith.constant 3.200000e+01 : f32
    %224 = vector.broadcast %cst_104 : f32 to vector<4x1xf32>
    %225 = arith.divf %223, %224 : vector<4x1xf32>
    %226 = vector.broadcast %218 : vector<4x1xf32> to vector<4x32xf32>
    %227 = arith.subf %212, %226 : vector<4x32xf32>
    %cst_105 = arith.constant 9.99999974E-6 : f32
    %228 = vector.broadcast %cst_105 : f32 to vector<4x1xf32>
    %229 = arith.addf %225, %228 : vector<4x1xf32>
    %230 = math.rsqrt %229 : vector<4x1xf32>
    %231 = vector.broadcast %230 : vector<4x1xf32> to vector<4x32xf32>
    %232 = arith.mulf %227, %231 : vector<4x32xf32>
    %233 = vector.broadcast %213 : vector<1x32xf32> to vector<4x32xf32>
    %234 = arith.mulf %232, %233 : vector<4x32xf32>
    %235 = vector.broadcast %214 : vector<1x32xf32> to vector<4x32xf32>
    %236 = arith.addf %234, %235 : vector<4x32xf32>
    %c0_106 = arith.constant 0 : index
    %c0_107 = arith.constant 0 : index
    %237 = vector.load %arg16[%c0_106, %c0_107] : memref<32x32xf32, #tpu.memory_space<vmem>>, vector<32x32xf32>
    %cst_108 = arith.constant dense<0.000000e+00> : vector<4x32xf32>
    %238 = tpu.matmul %236, %237, %cst_108 {dimension_numbers = #tpu.dot_dimension_numbers<[1], [0], [0], [1], [0, 0, 1, 1], [], []>} : vector<4x32xf32>, vector<32x32xf32>, vector<4x32xf32> -> vector<4x32xf32>
    %cst_109 = arith.constant dense<0.000000e+00> : vector<4x64xf32>
    %239 = tpu.matmul %238, %86, %cst_109 {dimension_numbers = #tpu.dot_dimension_numbers<[1], [0], [0], [1], [0, 0, 1, 1], [], []>} : vector<4x32xf32>, vector<32x64xf32>, vector<4x64xf32> -> vector<4x64xf32>
    %cst_110 = arith.constant 0.176776692 : f32
    %240 = vector.broadcast %cst_110 : f32 to vector<4x64xf32>
    %241 = arith.mulf %240, %239 : vector<4x64xf32>
    %cst_111 = arith.constant dense<0xFF800000> : vector<64xf32>
    %242 = vector.multi_reduction <maximumf>, %241, %cst_111 [0] : vector<4x64xf32> to vector<64xf32>
    %243 = vector.shape_cast %242 : vector<64xf32> to vector<1x64xf32>
    %244 = vector.broadcast %243 : vector<1x64xf32> to vector<4x64xf32>
    %245 = arith.subf %241, %244 : vector<4x64xf32>
    %246 = math.exp %245 : vector<4x64xf32>
    %cst_112 = arith.constant dense<0.000000e+00> : vector<64xf32>
    %247 = vector.multi_reduction <add>, %246, %cst_112 [0] : vector<4x64xf32> to vector<64xf32>
    %248 = vector.shape_cast %247 : vector<64xf32> to vector<1x64xf32>
    %249 = tpu.reciprocal %248 {approx = true} : vector<1x64xf32> -> vector<1x64xf32>
    %250 = vector.broadcast %249 : vector<1x64xf32> to vector<4x64xf32>
    %251 = arith.mulf %246, %250 : vector<4x64xf32>
    %cst_113 = arith.constant 9.99999993E-9 : f32
    %252 = vector.broadcast %cst_113 : f32 to vector<4x64xf32>
    %253 = arith.addf %251, %252 : vector<4x64xf32>
    %cst_114 = arith.constant dense<0.000000e+00> : vector<4xf32>
    %254 = vector.multi_reduction <add>, %253, %cst_114 [1] : vector<4x64xf32> to vector<4xf32>
    %255 = vector.shape_cast %254 : vector<4xf32> to vector<4x1xf32>
    %256 = tpu.reciprocal %255 {approx = true} : vector<4x1xf32> -> vector<4x1xf32>
    %257 = vector.broadcast %256 : vector<4x1xf32> to vector<4x64xf32>
    %258 = arith.mulf %253, %257 : vector<4x64xf32>
    %cst_115 = arith.constant dense<0.000000e+00> : vector<4x32xf32>
    %259 = tpu.matmul %258, %85, %cst_115 {dimension_numbers = #tpu.dot_dimension_numbers<[1], [0], [0], [1], [0, 0, 1, 1], [], []>} : vector<4x64xf32>, vector<64x32xf32>, vector<4x32xf32> -> vector<4x32xf32>
    %c0_116 = arith.constant 0 : index
    %c0_117 = arith.constant 0 : index
    %260 = vector.load %arg17[%c0_116, %c0_117] : memref<32x96xf32, #tpu.memory_space<vmem>>, vector<32x96xf32>
    %cst_118 = arith.constant dense<0.000000e+00> : vector<4x96xf32>
    %261 = tpu.matmul %259, %260, %cst_118 {dimension_numbers = #tpu.dot_dimension_numbers<[1], [0], [0], [1], [0, 0, 1, 1], [], []>} : vector<4x32xf32>, vector<32x96xf32>, vector<4x96xf32> -> vector<4x96xf32>
    %c0_119 = arith.constant 0 : index
    %c0_120 = arith.constant 0 : index
    %262 = vector.load %arg19[%c0_119, %c0_120] : memref<1x96xf32, #tpu.memory_space<vmem>>, vector<1x96xf32>
    %263 = vector.broadcast %262 : vector<1x96xf32> to vector<4x96xf32>
    %264 = arith.addf %261, %263 : vector<4x96xf32>
    %c0_121 = arith.constant 0 : index
    %c0_122 = arith.constant 0 : index
    %265 = vector.load %arg18[%c0_121, %c0_122] : memref<32x96xf32, #tpu.memory_space<vmem>>, vector<32x96xf32>
    %cst_123 = arith.constant dense<0.000000e+00> : vector<4x96xf32>
    %266 = tpu.matmul %212, %265, %cst_123 {dimension_numbers = #tpu.dot_dimension_numbers<[1], [0], [0], [1], [0, 0, 1, 1], [], []>} : vector<4x32xf32>, vector<32x96xf32>, vector<4x96xf32> -> vector<4x96xf32>
    %c0_124 = arith.constant 0 : index
    %c0_125 = arith.constant 0 : index
    %267 = vector.load %arg20[%c0_124, %c0_125] : memref<1x96xf32, #tpu.memory_space<vmem>>, vector<1x96xf32>
    %268 = vector.broadcast %267 : vector<1x96xf32> to vector<4x96xf32>
    %269 = arith.addf %266, %268 : vector<4x96xf32>
    %270 = vector.extract_strided_slice %264 {offsets = [0, 0], sizes = [4, 32], strides = [1, 1]} : vector<4x96xf32> to vector<4x32xf32>
    %271 = vector.extract_strided_slice %269 {offsets = [0, 0], sizes = [4, 32], strides = [1, 1]} : vector<4x96xf32> to vector<4x32xf32>
    %272 = arith.addf %270, %271 : vector<4x32xf32>
    %cst_126 = arith.constant 0.000000e+00 : f32
    %273 = vector.broadcast %cst_126 : f32 to vector<4x32xf32>
    %274 = arith.subf %273, %272 : vector<4x32xf32>
    %275 = math.exp %274 : vector<4x32xf32>
    %cst_127 = arith.constant 1.000000e+00 : f32
    %276 = vector.broadcast %cst_127 : f32 to vector<4x32xf32>
    %277 = arith.addf %276, %275 : vector<4x32xf32>
    %cst_128 = arith.constant 1.000000e+00 : f32
    %278 = vector.broadcast %cst_128 : f32 to vector<4x32xf32>
    %279 = arith.divf %278, %277 : vector<4x32xf32>
    %280 = vector.extract_strided_slice %264 {offsets = [0, 32], sizes = [4, 32], strides = [1, 1]} : vector<4x96xf32> to vector<4x32xf32>
    %281 = vector.extract_strided_slice %269 {offsets = [0, 32], sizes = [4, 32], strides = [1, 1]} : vector<4x96xf32> to vector<4x32xf32>
    %282 = arith.addf %280, %281 : vector<4x32xf32>
    %cst_129 = arith.constant 0.000000e+00 : f32
    %283 = vector.broadcast %cst_129 : f32 to vector<4x32xf32>
    %284 = arith.subf %283, %282 : vector<4x32xf32>
    %285 = math.exp %284 : vector<4x32xf32>
    %cst_130 = arith.constant 1.000000e+00 : f32
    %286 = vector.broadcast %cst_130 : f32 to vector<4x32xf32>
    %287 = arith.addf %286, %285 : vector<4x32xf32>
    %cst_131 = arith.constant 1.000000e+00 : f32
    %288 = vector.broadcast %cst_131 : f32 to vector<4x32xf32>
    %289 = arith.divf %288, %287 : vector<4x32xf32>
    %290 = vector.extract_strided_slice %264 {offsets = [0, 64], sizes = [4, 32], strides = [1, 1]} : vector<4x96xf32> to vector<4x32xf32>
    %291 = vector.extract_strided_slice %269 {offsets = [0, 64], sizes = [4, 32], strides = [1, 1]} : vector<4x96xf32> to vector<4x32xf32>
    %292 = arith.mulf %279, %291 : vector<4x32xf32>
    %293 = arith.addf %290, %292 : vector<4x32xf32>
    %294 = math.tanh %293 : vector<4x32xf32>
    %cst_132 = arith.constant 1.000000e+00 : f32
    %295 = vector.broadcast %cst_132 : f32 to vector<4x32xf32>
    %296 = arith.subf %295, %289 : vector<4x32xf32>
    %297 = arith.mulf %296, %294 : vector<4x32xf32>
    %298 = arith.mulf %289, %212 : vector<4x32xf32>
    %299 = arith.addf %297, %298 : vector<4x32xf32>
    %c0_133 = arith.constant 0 : index
    %c0_134 = arith.constant 0 : index
    %300 = vector.load %arg21[%c0_133, %c0_134] : memref<1x32xf32, #tpu.memory_space<vmem>>, vector<1x32xf32>
    %c0_135 = arith.constant 0 : index
    %c0_136 = arith.constant 0 : index
    %301 = vector.load %arg22[%c0_135, %c0_136] : memref<1x32xf32, #tpu.memory_space<vmem>>, vector<1x32xf32>
    %cst_137 = arith.constant dense<0.000000e+00> : vector<4xf32>
    %302 = vector.multi_reduction <add>, %299, %cst_137 [1] : vector<4x32xf32> to vector<4xf32>
    %303 = vector.shape_cast %302 : vector<4xf32> to vector<4x1xf32>
    %cst_138 = arith.constant 3.200000e+01 : f32
    %304 = vector.broadcast %cst_138 : f32 to vector<4x1xf32>
    %305 = arith.divf %303, %304 : vector<4x1xf32>
    %306 = vector.broadcast %305 : vector<4x1xf32> to vector<4x32xf32>
    %307 = arith.subf %299, %306 : vector<4x32xf32>
    %308 = arith.mulf %307, %307 : vector<4x32xf32>
    %cst_139 = arith.constant dense<0.000000e+00> : vector<4xf32>
    %309 = vector.multi_reduction <add>, %308, %cst_139 [1] : vector<4x32xf32> to vector<4xf32>
    %310 = vector.shape_cast %309 : vector<4xf32> to vector<4x1xf32>
    %cst_140 = arith.constant 3.200000e+01 : f32
    %311 = vector.broadcast %cst_140 : f32 to vector<4x1xf32>
    %312 = arith.divf %310, %311 : vector<4x1xf32>
    %313 = vector.broadcast %305 : vector<4x1xf32> to vector<4x32xf32>
    %314 = arith.subf %299, %313 : vector<4x32xf32>
    %cst_141 = arith.constant 9.99999974E-6 : f32
    %315 = vector.broadcast %cst_141 : f32 to vector<4x1xf32>
    %316 = arith.addf %312, %315 : vector<4x1xf32>
    %317 = math.rsqrt %316 : vector<4x1xf32>
    %318 = vector.broadcast %317 : vector<4x1xf32> to vector<4x32xf32>
    %319 = arith.mulf %314, %318 : vector<4x32xf32>
    %320 = vector.broadcast %300 : vector<1x32xf32> to vector<4x32xf32>
    %321 = arith.mulf %319, %320 : vector<4x32xf32>
    %322 = vector.broadcast %301 : vector<1x32xf32> to vector<4x32xf32>
    %323 = arith.addf %321, %322 : vector<4x32xf32>
    %c0_142 = arith.constant 0 : index
    %c0_143 = arith.constant 0 : index
    %324 = vector.load %arg23[%c0_142, %c0_143] : memref<32x32xf32, #tpu.memory_space<vmem>>, vector<32x32xf32>
    %cst_144 = arith.constant dense<0.000000e+00> : vector<4x32xf32>
    %325 = tpu.matmul %323, %324, %cst_144 {dimension_numbers = #tpu.dot_dimension_numbers<[1], [0], [0], [1], [0, 0, 1, 1], [], []>} : vector<4x32xf32>, vector<32x32xf32>, vector<4x32xf32> -> vector<4x32xf32>
    %c0_145 = arith.constant 0 : index
    %c0_146 = arith.constant 0 : index
    %326 = vector.load %arg24[%c0_145, %c0_146] : memref<1x32xf32, #tpu.memory_space<vmem>>, vector<1x32xf32>
    %327 = vector.broadcast %326 : vector<1x32xf32> to vector<4x32xf32>
    %328 = arith.addf %325, %327 : vector<4x32xf32>
    %cst_147 = arith.constant 0.000000e+00 : f32
    %329 = vector.broadcast %cst_147 : f32 to vector<4x32xf32>
    %330 = arith.maximumf %328, %329 : vector<4x32xf32>
    %c0_148 = arith.constant 0 : index
    %c0_149 = arith.constant 0 : index
    %331 = vector.load %arg25[%c0_148, %c0_149] : memref<32x32xf32, #tpu.memory_space<vmem>>, vector<32x32xf32>
    %cst_150 = arith.constant dense<0.000000e+00> : vector<4x32xf32>
    %332 = tpu.matmul %330, %331, %cst_150 {dimension_numbers = #tpu.dot_dimension_numbers<[1], [0], [0], [1], [0, 0, 1, 1], [], []>} : vector<4x32xf32>, vector<32x32xf32>, vector<4x32xf32> -> vector<4x32xf32>
    %333 = arith.addf %299, %332 : vector<4x32xf32>
    %c0_151 = arith.constant 0 : index
    %c0_152 = arith.constant 0 : index
    %334 = vector.load %arg26[%c0_151, %c0_152] : memref<1x32xf32, #tpu.memory_space<vmem>>, vector<1x32xf32>
    %335 = vector.broadcast %334 : vector<1x32xf32> to vector<4x32xf32>
    %336 = arith.addf %333, %335 : vector<4x32xf32>
    %c0_153 = arith.constant 0 : index
    %c0_154 = arith.constant 0 : index
    %337 = vector.load %arg14[%c0_153, %c0_154] : memref<1x32xf32, #tpu.memory_space<vmem>>, vector<1x32xf32>
    %c0_155 = arith.constant 0 : index
    %c0_156 = arith.constant 0 : index
    %338 = vector.load %arg15[%c0_155, %c0_156] : memref<1x32xf32, #tpu.memory_space<vmem>>, vector<1x32xf32>
    %cst_157 = arith.constant dense<0.000000e+00> : vector<4xf32>
    %339 = vector.multi_reduction <add>, %336, %cst_157 [1] : vector<4x32xf32> to vector<4xf32>
    %340 = vector.shape_cast %339 : vector<4xf32> to vector<4x1xf32>
    %cst_158 = arith.constant 3.200000e+01 : f32
    %341 = vector.broadcast %cst_158 : f32 to vector<4x1xf32>
    %342 = arith.divf %340, %341 : vector<4x1xf32>
    %343 = vector.broadcast %342 : vector<4x1xf32> to vector<4x32xf32>
    %344 = arith.subf %336, %343 : vector<4x32xf32>
    %345 = arith.mulf %344, %344 : vector<4x32xf32>
    %cst_159 = arith.constant dense<0.000000e+00> : vector<4xf32>
    %346 = vector.multi_reduction <add>, %345, %cst_159 [1] : vector<4x32xf32> to vector<4xf32>
    %347 = vector.shape_cast %346 : vector<4xf32> to vector<4x1xf32>
    %cst_160 = arith.constant 3.200000e+01 : f32
    %348 = vector.broadcast %cst_160 : f32 to vector<4x1xf32>
    %349 = arith.divf %347, %348 : vector<4x1xf32>
    %350 = vector.broadcast %342 : vector<4x1xf32> to vector<4x32xf32>
    %351 = arith.subf %336, %350 : vector<4x32xf32>
    %cst_161 = arith.constant 9.99999974E-6 : f32
    %352 = vector.broadcast %cst_161 : f32 to vector<4x1xf32>
    %353 = arith.addf %349, %352 : vector<4x1xf32>
    %354 = math.rsqrt %353 : vector<4x1xf32>
    %355 = vector.broadcast %354 : vector<4x1xf32> to vector<4x32xf32>
    %356 = arith.mulf %351, %355 : vector<4x32xf32>
    %357 = vector.broadcast %337 : vector<1x32xf32> to vector<4x32xf32>
    %358 = arith.mulf %356, %357 : vector<4x32xf32>
    %359 = vector.broadcast %338 : vector<1x32xf32> to vector<4x32xf32>
    %360 = arith.addf %358, %359 : vector<4x32xf32>
    %c0_162 = arith.constant 0 : index
    %c0_163 = arith.constant 0 : index
    %361 = vector.load %arg16[%c0_162, %c0_163] : memref<32x32xf32, #tpu.memory_space<vmem>>, vector<32x32xf32>
    %cst_164 = arith.constant dense<0.000000e+00> : vector<4x32xf32>
    %362 = tpu.matmul %360, %361, %cst_164 {dimension_numbers = #tpu.dot_dimension_numbers<[1], [0], [0], [1], [0, 0, 1, 1], [], []>} : vector<4x32xf32>, vector<32x32xf32>, vector<4x32xf32> -> vector<4x32xf32>
    %cst_165 = arith.constant dense<0.000000e+00> : vector<4x64xf32>
    %363 = tpu.matmul %362, %86, %cst_165 {dimension_numbers = #tpu.dot_dimension_numbers<[1], [0], [0], [1], [0, 0, 1, 1], [], []>} : vector<4x32xf32>, vector<32x64xf32>, vector<4x64xf32> -> vector<4x64xf32>
    %cst_166 = arith.constant 0.176776692 : f32
    %364 = vector.broadcast %cst_166 : f32 to vector<4x64xf32>
    %365 = arith.mulf %364, %363 : vector<4x64xf32>
    %cst_167 = arith.constant dense<0xFF800000> : vector<64xf32>
    %366 = vector.multi_reduction <maximumf>, %365, %cst_167 [0] : vector<4x64xf32> to vector<64xf32>
    %367 = vector.shape_cast %366 : vector<64xf32> to vector<1x64xf32>
    %368 = vector.broadcast %367 : vector<1x64xf32> to vector<4x64xf32>
    %369 = arith.subf %365, %368 : vector<4x64xf32>
    %370 = math.exp %369 : vector<4x64xf32>
    %cst_168 = arith.constant dense<0.000000e+00> : vector<64xf32>
    %371 = vector.multi_reduction <add>, %370, %cst_168 [0] : vector<4x64xf32> to vector<64xf32>
    %372 = vector.shape_cast %371 : vector<64xf32> to vector<1x64xf32>
    %373 = tpu.reciprocal %372 {approx = true} : vector<1x64xf32> -> vector<1x64xf32>
    %374 = vector.broadcast %373 : vector<1x64xf32> to vector<4x64xf32>
    %375 = arith.mulf %370, %374 : vector<4x64xf32>
    %cst_169 = arith.constant 9.99999993E-9 : f32
    %376 = vector.broadcast %cst_169 : f32 to vector<4x64xf32>
    %377 = arith.addf %375, %376 : vector<4x64xf32>
    %cst_170 = arith.constant dense<0.000000e+00> : vector<4xf32>
    %378 = vector.multi_reduction <add>, %377, %cst_170 [1] : vector<4x64xf32> to vector<4xf32>
    %379 = vector.shape_cast %378 : vector<4xf32> to vector<4x1xf32>
    %380 = tpu.reciprocal %379 {approx = true} : vector<4x1xf32> -> vector<4x1xf32>
    %381 = vector.broadcast %380 : vector<4x1xf32> to vector<4x64xf32>
    %382 = arith.mulf %377, %381 : vector<4x64xf32>
    %cst_171 = arith.constant dense<0.000000e+00> : vector<4x32xf32>
    %383 = tpu.matmul %382, %85, %cst_171 {dimension_numbers = #tpu.dot_dimension_numbers<[1], [0], [0], [1], [0, 0, 1, 1], [], []>} : vector<4x64xf32>, vector<64x32xf32>, vector<4x32xf32> -> vector<4x32xf32>
    %c0_172 = arith.constant 0 : index
    %c0_173 = arith.constant 0 : index
    %384 = vector.load %arg17[%c0_172, %c0_173] : memref<32x96xf32, #tpu.memory_space<vmem>>, vector<32x96xf32>
    %cst_174 = arith.constant dense<0.000000e+00> : vector<4x96xf32>
    %385 = tpu.matmul %383, %384, %cst_174 {dimension_numbers = #tpu.dot_dimension_numbers<[1], [0], [0], [1], [0, 0, 1, 1], [], []>} : vector<4x32xf32>, vector<32x96xf32>, vector<4x96xf32> -> vector<4x96xf32>
    %c0_175 = arith.constant 0 : index
    %c0_176 = arith.constant 0 : index
    %386 = vector.load %arg19[%c0_175, %c0_176] : memref<1x96xf32, #tpu.memory_space<vmem>>, vector<1x96xf32>
    %387 = vector.broadcast %386 : vector<1x96xf32> to vector<4x96xf32>
    %388 = arith.addf %385, %387 : vector<4x96xf32>
    %c0_177 = arith.constant 0 : index
    %c0_178 = arith.constant 0 : index
    %389 = vector.load %arg18[%c0_177, %c0_178] : memref<32x96xf32, #tpu.memory_space<vmem>>, vector<32x96xf32>
    %cst_179 = arith.constant dense<0.000000e+00> : vector<4x96xf32>
    %390 = tpu.matmul %336, %389, %cst_179 {dimension_numbers = #tpu.dot_dimension_numbers<[1], [0], [0], [1], [0, 0, 1, 1], [], []>} : vector<4x32xf32>, vector<32x96xf32>, vector<4x96xf32> -> vector<4x96xf32>
    %c0_180 = arith.constant 0 : index
    %c0_181 = arith.constant 0 : index
    %391 = vector.load %arg20[%c0_180, %c0_181] : memref<1x96xf32, #tpu.memory_space<vmem>>, vector<1x96xf32>
    %392 = vector.broadcast %391 : vector<1x96xf32> to vector<4x96xf32>
    %393 = arith.addf %390, %392 : vector<4x96xf32>
    %394 = vector.extract_strided_slice %388 {offsets = [0, 0], sizes = [4, 32], strides = [1, 1]} : vector<4x96xf32> to vector<4x32xf32>
    %395 = vector.extract_strided_slice %393 {offsets = [0, 0], sizes = [4, 32], strides = [1, 1]} : vector<4x96xf32> to vector<4x32xf32>
    %396 = arith.addf %394, %395 : vector<4x32xf32>
    %cst_182 = arith.constant 0.000000e+00 : f32
    %397 = vector.broadcast %cst_182 : f32 to vector<4x32xf32>
    %398 = arith.subf %397, %396 : vector<4x32xf32>
    %399 = math.exp %398 : vector<4x32xf32>
    %cst_183 = arith.constant 1.000000e+00 : f32
    %400 = vector.broadcast %cst_183 : f32 to vector<4x32xf32>
    %401 = arith.addf %400, %399 : vector<4x32xf32>
    %cst_184 = arith.constant 1.000000e+00 : f32
    %402 = vector.broadcast %cst_184 : f32 to vector<4x32xf32>
    %403 = arith.divf %402, %401 : vector<4x32xf32>
    %404 = vector.extract_strided_slice %388 {offsets = [0, 32], sizes = [4, 32], strides = [1, 1]} : vector<4x96xf32> to vector<4x32xf32>
    %405 = vector.extract_strided_slice %393 {offsets = [0, 32], sizes = [4, 32], strides = [1, 1]} : vector<4x96xf32> to vector<4x32xf32>
    %406 = arith.addf %404, %405 : vector<4x32xf32>
    %cst_185 = arith.constant 0.000000e+00 : f32
    %407 = vector.broadcast %cst_185 : f32 to vector<4x32xf32>
    %408 = arith.subf %407, %406 : vector<4x32xf32>
    %409 = math.exp %408 : vector<4x32xf32>
    %cst_186 = arith.constant 1.000000e+00 : f32
    %410 = vector.broadcast %cst_186 : f32 to vector<4x32xf32>
    %411 = arith.addf %410, %409 : vector<4x32xf32>
    %cst_187 = arith.constant 1.000000e+00 : f32
    %412 = vector.broadcast %cst_187 : f32 to vector<4x32xf32>
    %413 = arith.divf %412, %411 : vector<4x32xf32>
    %414 = vector.extract_strided_slice %388 {offsets = [0, 64], sizes = [4, 32], strides = [1, 1]} : vector<4x96xf32> to vector<4x32xf32>
    %415 = vector.extract_strided_slice %393 {offsets = [0, 64], sizes = [4, 32], strides = [1, 1]} : vector<4x96xf32> to vector<4x32xf32>
    %416 = arith.mulf %403, %415 : vector<4x32xf32>
    %417 = arith.addf %414, %416 : vector<4x32xf32>
    %418 = math.tanh %417 : vector<4x32xf32>
    %cst_188 = arith.constant 1.000000e+00 : f32
    %419 = vector.broadcast %cst_188 : f32 to vector<4x32xf32>
    %420 = arith.subf %419, %413 : vector<4x32xf32>
    %421 = arith.mulf %420, %418 : vector<4x32xf32>
    %422 = arith.mulf %413, %336 : vector<4x32xf32>
    %423 = arith.addf %421, %422 : vector<4x32xf32>
    %c0_189 = arith.constant 0 : index
    %c0_190 = arith.constant 0 : index
    %424 = vector.load %arg21[%c0_189, %c0_190] : memref<1x32xf32, #tpu.memory_space<vmem>>, vector<1x32xf32>
    %c0_191 = arith.constant 0 : index
    %c0_192 = arith.constant 0 : index
    %425 = vector.load %arg22[%c0_191, %c0_192] : memref<1x32xf32, #tpu.memory_space<vmem>>, vector<1x32xf32>
    %cst_193 = arith.constant dense<0.000000e+00> : vector<4xf32>
    %426 = vector.multi_reduction <add>, %423, %cst_193 [1] : vector<4x32xf32> to vector<4xf32>
    %427 = vector.shape_cast %426 : vector<4xf32> to vector<4x1xf32>
    %cst_194 = arith.constant 3.200000e+01 : f32
    %428 = vector.broadcast %cst_194 : f32 to vector<4x1xf32>
    %429 = arith.divf %427, %428 : vector<4x1xf32>
    %430 = vector.broadcast %429 : vector<4x1xf32> to vector<4x32xf32>
    %431 = arith.subf %423, %430 : vector<4x32xf32>
    %432 = arith.mulf %431, %431 : vector<4x32xf32>
    %cst_195 = arith.constant dense<0.000000e+00> : vector<4xf32>
    %433 = vector.multi_reduction <add>, %432, %cst_195 [1] : vector<4x32xf32> to vector<4xf32>
    %434 = vector.shape_cast %433 : vector<4xf32> to vector<4x1xf32>
    %cst_196 = arith.constant 3.200000e+01 : f32
    %435 = vector.broadcast %cst_196 : f32 to vector<4x1xf32>
    %436 = arith.divf %434, %435 : vector<4x1xf32>
    %437 = vector.broadcast %429 : vector<4x1xf32> to vector<4x32xf32>
    %438 = arith.subf %423, %437 : vector<4x32xf32>
    %cst_197 = arith.constant 9.99999974E-6 : f32
    %439 = vector.broadcast %cst_197 : f32 to vector<4x1xf32>
    %440 = arith.addf %436, %439 : vector<4x1xf32>
    %441 = math.rsqrt %440 : vector<4x1xf32>
    %442 = vector.broadcast %441 : vector<4x1xf32> to vector<4x32xf32>
    %443 = arith.mulf %438, %442 : vector<4x32xf32>
    %444 = vector.broadcast %424 : vector<1x32xf32> to vector<4x32xf32>
    %445 = arith.mulf %443, %444 : vector<4x32xf32>
    %446 = vector.broadcast %425 : vector<1x32xf32> to vector<4x32xf32>
    %447 = arith.addf %445, %446 : vector<4x32xf32>
    %c0_198 = arith.constant 0 : index
    %c0_199 = arith.constant 0 : index
    %448 = vector.load %arg23[%c0_198, %c0_199] : memref<32x32xf32, #tpu.memory_space<vmem>>, vector<32x32xf32>
    %cst_200 = arith.constant dense<0.000000e+00> : vector<4x32xf32>
    %449 = tpu.matmul %447, %448, %cst_200 {dimension_numbers = #tpu.dot_dimension_numbers<[1], [0], [0], [1], [0, 0, 1, 1], [], []>} : vector<4x32xf32>, vector<32x32xf32>, vector<4x32xf32> -> vector<4x32xf32>
    %c0_201 = arith.constant 0 : index
    %c0_202 = arith.constant 0 : index
    %450 = vector.load %arg24[%c0_201, %c0_202] : memref<1x32xf32, #tpu.memory_space<vmem>>, vector<1x32xf32>
    %451 = vector.broadcast %450 : vector<1x32xf32> to vector<4x32xf32>
    %452 = arith.addf %449, %451 : vector<4x32xf32>
    %cst_203 = arith.constant 0.000000e+00 : f32
    %453 = vector.broadcast %cst_203 : f32 to vector<4x32xf32>
    %454 = arith.maximumf %452, %453 : vector<4x32xf32>
    %c0_204 = arith.constant 0 : index
    %c0_205 = arith.constant 0 : index
    %455 = vector.load %arg25[%c0_204, %c0_205] : memref<32x32xf32, #tpu.memory_space<vmem>>, vector<32x32xf32>
    %cst_206 = arith.constant dense<0.000000e+00> : vector<4x32xf32>
    %456 = tpu.matmul %454, %455, %cst_206 {dimension_numbers = #tpu.dot_dimension_numbers<[1], [0], [0], [1], [0, 0, 1, 1], [], []>} : vector<4x32xf32>, vector<32x32xf32>, vector<4x32xf32> -> vector<4x32xf32>
    %457 = arith.addf %423, %456 : vector<4x32xf32>
    %c0_207 = arith.constant 0 : index
    %c0_208 = arith.constant 0 : index
    %458 = vector.load %arg26[%c0_207, %c0_208] : memref<1x32xf32, #tpu.memory_space<vmem>>, vector<1x32xf32>
    %459 = vector.broadcast %458 : vector<1x32xf32> to vector<4x32xf32>
    %460 = arith.addf %457, %459 : vector<4x32xf32>
    %c0_209 = arith.constant 0 : index
    %c0_210 = arith.constant 0 : index
    %c0_211 = arith.constant 0 : index
    %461 = vector.load %arg27[%c0_209, %c0_210, %c0_211] : memref<1x4x32xf32, #tpu.memory_space<vmem>>, vector<1x4x32xf32>
    %462 = vector.shape_cast %461 : vector<1x4x32xf32> to vector<4x32xf32>
    %463 = vector.shape_cast %460 : vector<4x32xf32> to vector<1x4x32xf32>
    tpu.vector_store %arg27[%c0_209, %c0_210, %c0_211], %463 {strides = array<i32>} : memref<1x4x32xf32, #tpu.memory_space<vmem>>, vector<1x4x32xf32>,
    return
  }
  func.func @transform_0(%arg0: i32) -> (i32, i32, i32) {
    %c0_i32 = arith.constant 0 : i32
    %c0_i32_0 = arith.constant 0 : i32
    %c0_i32_1 = arith.constant 0 : i32
    return %arg0, %c0_i32, %c0_i32_0 : i32, i32, i32
  }
  func.func @transform_1(%arg0: i32) -> (i32, i32, i32) {
    %c0_i32 = arith.constant 0 : i32
    %c0_i32_0 = arith.constant 0 : i32
    %c0_i32_1 = arith.constant 0 : i32
    %c0_i32_2 = arith.constant 0 : i32
    return %c0_i32, %c0_i32_0, %c0_i32_1 : i32, i32, i32
  }
  func.func @transform_2(%arg0: i32) -> (i32, i32) {
    %c0_i32 = arith.constant 0 : i32
    %c0_i32_0 = arith.constant 0 : i32
    %c0_i32_1 = arith.constant 0 : i32
    return %c0_i32, %c0_i32_0 : i32, i32
  }
  func.func @transform_3(%arg0: i32) -> (i32, i32) {
    %c0_i32 = arith.constant 0 : i32
    %c0_i32_0 = arith.constant 0 : i32
    %c0_i32_1 = arith.constant 0 : i32
    return %c0_i32, %c0_i32_0 : i32, i32
  }
  func.func @transform_4(%arg0: i32) -> (i32, i32) {
    %c0_i32 = arith.constant 0 : i32
    %c0_i32_0 = arith.constant 0 : i32
    %c0_i32_1 = arith.constant 0 : i32
    return %c0_i32, %c0_i32_0 : i32, i32
  }
  func.func @transform_5(%arg0: i32) -> (i32, i32) {
    %c0_i32 = arith.constant 0 : i32
    %c0_i32_0 = arith.constant 0 : i32
    %c0_i32_1 = arith.constant 0 : i32
    return %c0_i32, %c0_i32_0 : i32, i32
  }
  func.func @transform_6(%arg0: i32) -> (i32, i32) {
    %c0_i32 = arith.constant 0 : i32
    %c0_i32_0 = arith.constant 0 : i32
    %c0_i32_1 = arith.constant 0 : i32
    return %c0_i32, %c0_i32_0 : i32, i32
  }
  func.func @transform_7(%arg0: i32) -> (i32, i32) {
    %c0_i32 = arith.constant 0 : i32
    %c0_i32_0 = arith.constant 0 : i32
    %c0_i32_1 = arith.constant 0 : i32
    return %c0_i32, %c0_i32_0 : i32, i32
  }
  func.func @transform_8(%arg0: i32) -> (i32, i32) {
    %c0_i32 = arith.constant 0 : i32
    %c0_i32_0 = arith.constant 0 : i32
    %c0_i32_1 = arith.constant 0 : i32
    return %c0_i32, %c0_i32_0 : i32, i32
  }
  func.func @transform_9(%arg0: i32) -> (i32, i32) {
    %c0_i32 = arith.constant 0 : i32
    %c0_i32_0 = arith.constant 0 : i32
    %c0_i32_1 = arith.constant 0 : i32
    return %c0_i32, %c0_i32_0 : i32, i32
  }
  func.func @transform_10(%arg0: i32) -> (i32, i32) {
    %c0_i32 = arith.constant 0 : i32
    %c0_i32_0 = arith.constant 0 : i32
    %c0_i32_1 = arith.constant 0 : i32
    return %c0_i32, %c0_i32_0 : i32, i32
  }
  func.func @transform_11(%arg0: i32) -> (i32, i32) {
    %c0_i32 = arith.constant 0 : i32
    %c0_i32_0 = arith.constant 0 : i32
    %c0_i32_1 = arith.constant 0 : i32
    return %c0_i32, %c0_i32_0 : i32, i32
  }
  func.func @transform_12(%arg0: i32) -> (i32, i32) {
    %c0_i32 = arith.constant 0 : i32
    %c0_i32_0 = arith.constant 0 : i32
    %c0_i32_1 = arith.constant 0 : i32
    return %c0_i32, %c0_i32_0 : i32, i32
  }
  func.func @transform_13(%arg0: i32) -> (i32, i32) {
    %c0_i32 = arith.constant 0 : i32
    %c0_i32_0 = arith.constant 0 : i32
    %c0_i32_1 = arith.constant 0 : i32
    return %c0_i32, %c0_i32_0 : i32, i32
  }
  func.func @transform_14(%arg0: i32) -> (i32, i32) {
    %c0_i32 = arith.constant 0 : i32
    %c0_i32_0 = arith.constant 0 : i32
    %c0_i32_1 = arith.constant 0 : i32
    return %c0_i32, %c0_i32_0 : i32, i32
  }
  func.func @transform_15(%arg0: i32) -> (i32, i32) {
    %c0_i32 = arith.constant 0 : i32
    %c0_i32_0 = arith.constant 0 : i32
    %c0_i32_1 = arith.constant 0 : i32
    return %c0_i32, %c0_i32_0 : i32, i32
  }
  func.func @transform_16(%arg0: i32) -> (i32, i32) {
    %c0_i32 = arith.constant 0 : i32
    %c0_i32_0 = arith.constant 0 : i32
    %c0_i32_1 = arith.constant 0 : i32
    return %c0_i32, %c0_i32_0 : i32, i32
  }
  func.func @transform_17(%arg0: i32) -> (i32, i32) {
    %c0_i32 = arith.constant 0 : i32
    %c0_i32_0 = arith.constant 0 : i32
    %c0_i32_1 = arith.constant 0 : i32
    return %c0_i32, %c0_i32_0 : i32, i32
  }
  func.func @transform_18(%arg0: i32) -> (i32, i32) {
    %c0_i32 = arith.constant 0 : i32
    %c0_i32_0 = arith.constant 0 : i32
    %c0_i32_1 = arith.constant 0 : i32
    return %c0_i32, %c0_i32_0 : i32, i32
  }
  func.func @transform_19(%arg0: i32) -> (i32, i32) {
    %c0_i32 = arith.constant 0 : i32
    %c0_i32_0 = arith.constant 0 : i32
    %c0_i32_1 = arith.constant 0 : i32
    return %c0_i32, %c0_i32_0 : i32, i32
  }
  func.func @transform_20(%arg0: i32) -> (i32, i32) {
    %c0_i32 = arith.constant 0 : i32
    %c0_i32_0 = arith.constant 0 : i32
    %c0_i32_1 = arith.constant 0 : i32
    return %c0_i32, %c0_i32_0 : i32, i32
  }
  func.func @transform_21(%arg0: i32) -> (i32, i32) {
    %c0_i32 = arith.constant 0 : i32
    %c0_i32_0 = arith.constant 0 : i32
    %c0_i32_1 = arith.constant 0 : i32
    return %c0_i32, %c0_i32_0 : i32, i32
  }
  func.func @transform_22(%arg0: i32) -> (i32, i32) {
    %c0_i32 = arith.constant 0 : i32
    %c0_i32_0 = arith.constant 0 : i32
    %c0_i32_1 = arith.constant 0 : i32
    return %c0_i32, %c0_i32_0 : i32, i32
  }
  func.func @transform_23(%arg0: i32) -> (i32, i32) {
    %c0_i32 = arith.constant 0 : i32
    %c0_i32_0 = arith.constant 0 : i32
    %c0_i32_1 = arith.constant 0 : i32
    return %c0_i32, %c0_i32_0 : i32, i32
  }
  func.func @transform_24(%arg0: i32) -> (i32, i32) {
    %c0_i32 = arith.constant 0 : i32
    %c0_i32_0 = arith.constant 0 : i32
    %c0_i32_1 = arith.constant 0 : i32
    return %c0_i32, %c0_i32_0 : i32, i32
  }
  func.func @transform_25(%arg0: i32) -> (i32, i32) {
    %c0_i32 = arith.constant 0 : i32
    %c0_i32_0 = arith.constant 0 : i32
    %c0_i32_1 = arith.constant 0 : i32
    return %c0_i32, %c0_i32_0 : i32, i32
  }
  func.func @transform_26(%arg0: i32) -> (i32, i32, i32) {
    %c0_i32 = arith.constant 0 : i32
    %c0_i32_0 = arith.constant 0 : i32
    %c0_i32_1 = arith.constant 0 : i32
    return %arg0, %c0_i32, %c0_i32_0 : i32, i32, i32
  }
}

</mosaic_0001>

<llo_original>
// kernel: slot_attention_forward.1
$region0: #{slot_attention_forward.1}
  #allocation0 [shape = 'u32[]', space=smem, size = 0x4, offset = 0x4, fixed_abs, tag = 'smem constant byte address 0x4 - core index']
  #allocation1 [shape = 'u32[72,128]{1,0:T(1,128)}', space=vmem, size = 0x9000, scoped, tag = 'internal scratch']
  %s0 = inlined_call_operand.vmem [shape: f32[2,64,34], index: 0, kind: input, shape index: {}]
  %s1 = inlined_call_operand.vmem [shape: f32[1,4,32], index: 1, kind: input, shape index: {}]
  %s2 = inlined_call_operand.vmem [shape: f32[1,32], index: 2, kind: input, shape index: {}]
  %s3 = inlined_call_operand.hbm [shape: f32[1,32], index: 3, kind: input, shape index: {}]
  %s4 = inlined_call_operand.vmem [shape: f32[32,64], index: 4, kind: input, shape index: {}]
  %s5 = inlined_call_operand.vmem [shape: f32[2,32], index: 5, kind: input, shape index: {}]
  %s6 = inlined_call_operand.vmem [shape: f32[1,32], index: 6, kind: input, shape index: {}]
  %s7 = inlined_call_operand.vmem [shape: f32[1,32], index: 7, kind: input, shape index: {}]
  %s8 = inlined_call_operand.vmem [shape: f32[1,32], index: 8, kind: input, shape index: {}]
  %s9 = inlined_call_operand.vmem [shape: f32[32,32], index: 9, kind: input, shape index: {}]
  %s10 = inlined_call_operand.vmem [shape: f32[1,32], index: 10, kind: input, shape index: {}]
  %s11 = inlined_call_operand.vmem [shape: f32[32,32], index: 11, kind: input, shape index: {}]
  %s12 = inlined_call_operand.vmem [shape: f32[1,32], index: 12, kind: input, shape index: {}]
  %s13 = inlined_call_operand.vmem [shape: f32[1,32], index: 13, kind: input, shape index: {}]
  %s14 = inlined_call_operand.hbm [shape: f32[1,32], index: 14, kind: input, shape index: {}]
  %s15 = inlined_call_operand.vmem [shape: f32[32,32], index: 15, kind: input, shape index: {}]
  %s16 = inlined_call_operand.vmem [shape: f32[32,96], index: 16, kind: input, shape index: {}]
  %s17 = inlined_call_operand.vmem [shape: f32[32,96], index: 17, kind: input, shape index: {}]
  %s18 = inlined_call_operand.hbm [shape: f32[1,96], index: 18, kind: input, shape index: {}]
  %s19 = inlined_call_operand.hbm [shape: f32[1,96], index: 19, kind: input, shape index: {}]
  %s20 = inlined_call_operand.hbm [shape: f32[1,32], index: 20, kind: input, shape index: {}]
  %s21 = inlined_call_operand.hbm [shape: f32[1,32], index: 21, kind: input, shape index: {}]
  %s22 = inlined_call_operand.hbm [shape: f32[32,32], index: 22, kind: input, shape index: {}]
  %s23 = inlined_call_operand.vmem [shape: f32[1,32], index: 23, kind: input, shape index: {}]
  %s24 = inlined_call_operand.hbm [shape: f32[32,32], index: 24, kind: input, shape index: {}]
  %s25 = inlined_call_operand.vmem [shape: f32[1,32], index: 25, kind: input, shape index: {}]
  %s26 = inlined_call_operand.hbm [shape: f32[2,4,32], index: 26, kind: output, shape index: {}]
  %s27 = sld [smem:[#allocation0]]
  $region169: #{slot_attention_forward.1} parent=0
    _
  %s29 = ssub.s32 1, %s27
  %s30 = scalar_select 0, %s29, %s27
  $region1: #{slot_attention_forward.1} parent=0
    #allocation2 [shape = 'u8[512]{0}', space=vmem, size = 0x400, scoped, tag = 'input window, operand 3, single buffered']
    #allocation3 [shape = 's32[2]{0}', space=sflag, size = 0x8, scoped, tag = 'scoped memory for slot_attention_forward.1']
    #allocation4 [shape = 's32[2]{0}', space=sflag, size = 0x8, scoped, tag = 'scoped memory for slot_attention_forward.1']
    #allocation5 [shape = 'u8[512]{0}', space=vmem, size = 0x400, scoped, tag = 'input window, operand 14, single buffered']
    #allocation6 [shape = 's32[1]{0}', space=sflag, size = 0x4, scoped, tag = 'scoped memory for slot_attention_forward.1']
    #allocation7 [shape = 'u8[512]{0}', space=vmem, size = 0x400, scoped, tag = 'input window, operand 18, single buffered']
    #allocation8 [shape = 'u8[512]{0}', space=vmem, size = 0x400, scoped, tag = 'input window, operand 19, single buffered']
    #allocation9 [shape = 's32[1]{0}', space=sflag, size = 0x4, scoped, tag = 'scoped memory for slot_attention_forward.1']
    #allocation10 [shape = 'u8[512]{0}', space=vmem, size = 0x400, scoped, tag = 'input window, operand 20, single buffered']
    #allocation11 [shape = 'u8[512]{0}', space=vmem, size = 0x400, scoped, tag = 'input window, operand 21, single buffered']
    #allocation12 [shape = 's32[1]{0}', space=sflag, size = 0x4, scoped, tag = 'scoped memory for slot_attention_forward.1']
    #allocation13 [shape = 'u8[16384]{0}', space=vmem, size = 0x4000, scoped, tag = 'input window, operand 22, single buffered']
    #allocation14 [shape = 'u8[16384]{0}', space=vmem, size = 0x4000, scoped, tag = 'input window, operand 24, single buffered']
    #allocation15 [shape = 's32[1]{0}', space=sflag, size = 0x4, scoped, tag = 'scoped memory for slot_attention_forward.1']
    #allocation16 [shape = 'u8[4096]{0}', space=vmem, size = 0x1000, scoped, tag = 'output window, operand 0']
    %31 = vsyncpa [#allocation3], 0
    %32 = vsyncpa [#allocation6], 0
    %33 = vsyncpa [#allocation9], 0
    %34 = vsyncpa [#allocation12], 0
    %35 = vsyncpa [#allocation15], 0
    %36 = vsyncpa [#allocation4], 0
    %s37 = scalar_lea.sflag [#allocation4], 1
    %38 = vsyncpa %s37, 0
    loop: start=0, step=1, limit=4
    $region2: #{slot_attention_forward.1} parent=1 // loop_pre_header
      _
    $region3: #{slot_attention_forward.1} parent=1 // loop_header
      %s40 = sphi 0, %s44
      %p41 = scmp.ge.s32.totalorder %s40, 4
      %s50 = sphi 0, %s52
      %s53 = sphi 0, %s50
      %s54 = sphi 0, %s53
      %s70 = sphi 0, %s54
      %s74 = sphi 0, %s74
      %s76 = sphi 0, %s74
      %s77 = sphi 0, %s76
      %s91 = sphi 0, %s77
      %s95 = sphi 0, %s95
      %s97 = sphi 0, %s95
      %s98 = sphi 0, %s97
      %s112 = sphi 0, %s98
      %s116 = sphi 0, %s116
      %s118 = sphi 0, %s116
      %s119 = sphi 0, %s118
      %s133 = sphi 0, %s119
      %s137 = sphi 0, %s137
      %s139 = sphi 0, %s137
      %s140 = sphi 0, %s139
      %s154 = sphi 0, %s140
      %s158 = sphi 0, %s158
      %s160 = sphi 0, %s158
      %s161 = sphi 0, %s160
      %s175 = sphi 0, %s161
      %s179 = sphi 0, %s179
      %s181 = sphi 0, %s179
      %s182 = sphi 0, %s181
      %s196 = sphi 0, %s182
      %s200 = sphi 0, %s200
      %s202 = sphi 0, %s200
      %s203 = sphi 0, %s202
      %s217 = sphi 0, %s203
      %s221 = sphi 0, %s221
      %s223 = sphi 0, %s221
      %s224 = sphi 0, %s223
      %s238 = sphi 0, %s224
      %s242 = sphi 0, %s242
      %s244 = sphi 0, %s242
      %s245 = sphi 0, %s244
      %s259 = sphi 0, %s245
      %s263 = sphi 0, %s263
      %s265 = sphi 0, %s263
      %s266 = sphi 0, %s265
      %s280 = sphi 0, %s266
      %s284 = sphi 0, %s284
      %s286 = sphi 0, %s284
      %s287 = sphi 0, %s286
      %s301 = sphi 0, %s287
      %s305 = sphi 0, %s305
      %s307 = sphi 0, %s305
      %s308 = sphi 0, %s307
      %s322 = sphi 0, %s308
      %s326 = sphi 0, %s326
      %s328 = sphi 0, %s326
      %s329 = sphi 0, %s328
      %s343 = sphi 0, %s329
      %s347 = sphi 0, %s347
      %s349 = sphi 0, %s347
      %s350 = sphi 0, %s349
      %s364 = sphi 0, %s350
      %s368 = sphi 0, %s368
      %s370 = sphi 0, %s368
      %s371 = sphi 0, %s370
      %s385 = sphi 0, %s371
      %s389 = sphi 0, %s389
      %s391 = sphi 0, %s389
      %s392 = sphi 0, %s391
      %s406 = sphi 0, %s392
      %s410 = sphi 0, %s410
      %s412 = sphi 0, %s410
      %s413 = sphi 0, %s412
      %s427 = sphi 0, %s413
      %s431 = sphi 0, %s431
      %s433 = sphi 0, %s431
      %s434 = sphi 0, %s433
      %s448 = sphi 0, %s434
      %s452 = sphi 0, %s452
      %s454 = sphi 0, %s452
      %s455 = sphi 0, %s454
      %s469 = sphi 0, %s455
      %s473 = sphi 0, %s473
      %s475 = sphi 0, %s473
      %s476 = sphi 0, %s475
      %s490 = sphi 0, %s476
      %s494 = sphi 0, %s494
      %s496 = sphi 0, %s494
      %s497 = sphi 0, %s496
      %s511 = sphi 0, %s497
      %s515 = sphi 0, %s515
      %s517 = sphi 0, %s515
      %s518 = sphi 0, %s517
      %s532 = sphi 0, %s518
      %s536 = sphi 0, %s536
      %s538 = sphi 0, %s536
      %s539 = sphi 0, %s538
      %s553 = sphi 0, %s539
      %s557 = sphi 0, %s557
      %s559 = sphi 0, %s557
      %s560 = sphi 0, %s559
      %s574 = sphi 0, %s560
      %s578 = sphi 0, %s578
      %s580 = sphi 0, %s578
      %s581 = sphi 0, %s580
      %s595 = sphi 0, %s581
      %s601 = sphi 0, %s603
      %s604 = sphi 0, %s601
      %s605 = sphi 0, %s604
      %s621 = sphi 0, %s605
    $region4: #{slot_attention_forward.1} parent=1 // loop_header_branch
      %43 = sbr.rel (%p41) target = $region8
    $region5: #{slot_attention_forward.1} parent=1 // loop_body
      %s45 = ssub.s32 %s40, 1
      %s46 = ssub.s32 %s40, 2
      %s47 = sadd.s32 %s40, 1
      %s48 = ssub.s32 %s40, %s47
      %p49 = scmp.eq.s32.totalorder %s48, 0
      %s51 = sadd.s32 %s50, 1
      %s52 = scalar_select %p49, %s50, %s51
      %p55 = pneg %p49
      %p56 = scmp.eq.s32.totalorder %s40, 1
      %p57 = por %p55, %p56
      %p58 = scmp.ne.s32.totalorder %s50, %s53
      %p59 = scmp.eq.s32.totalorder %s40, 0
      %p60 = por %p58, %p59
      %p61 = scmp.ne.s32.totalorder %s50, %s53
      %p62 = scmp.eq.s32.totalorder %s45, 1
      %p63 = por %p61, %p62
      %p64 = scmp.ne.s32.totalorder %s53, %s54
      %p65 = scmp.eq.s32.totalorder %s45, 0
      %p66 = por %p64, %p65
      %p67 = scmp.ne.s32.totalorder %s53, %s54
      %p68 = scmp.eq.s32.totalorder %s46, 1
      %p69 = por %p67, %p68
      %p71 = scmp.ne.s32.totalorder %s54, %s70
      %p72 = scmp.eq.s32.totalorder %s46, 0
      %p73 = por %p71, %p72
      %s75 = sadd.s32 %s74, 1
      %p78 = scmp.eq.s32.totalorder %s40, 1
      %p79 = scmp.ne.s32.totalorder %s74, %s76
      %p80 = scmp.eq.s32.totalorder %s40, 0
      %p81 = por %p79, %p80
      %p82 = scmp.ne.s32.totalorder %s74, %s76
      %p83 = scmp.eq.s32.totalorder %s45, 1
      %p84 = por %p82, %p83
      %p85 = scmp.ne.s32.totalorder %s76, %s77
      %p86 = scmp.eq.s32.totalorder %s45, 0
      %p87 = por %p85, %p86
      %p88 = scmp.ne.s32.totalorder %s76, %s77
      %p89 = scmp.eq.s32.totalorder %s46, 1
      %p90 = por %p88, %p89
      %p92 = scmp.ne.s32.totalorder %s77, %s91
      %p93 = scmp.eq.s32.totalorder %s46, 0
      %p94 = por %p92, %p93
      %s96 = sadd.s32 %s95, 1
      %p99 = scmp.eq.s32.totalorder %s40, 1
      %p100 = scmp.ne.s32.totalorder %s95, %s97
      %p101 = scmp.eq.s32.totalorder %s40, 0
      %p102 = por %p100, %p101
      %p103 = scmp.ne.s32.totalorder %s95, %s97
      %p104 = scmp.eq.s32.totalorder %s45, 1
      %p105 = por %p103, %p104
      %p106 = scmp.ne.s32.totalorder %s97, %s98
      %p107 = scmp.eq.s32.totalorder %s45, 0
      %p108 = por %p106, %p107
      %p109 = scmp.ne.s32.totalorder %s97, %s98
      %p110 = scmp.eq.s32.totalorder %s46, 1
      %p111 = por %p109, %p110
      %p113 = scmp.ne.s32.totalorder %s98, %s112
      %p114 = scmp.eq.s32.totalorder %s46, 0
      %p115 = por %p113, %p114
      %s117 = sadd.s32 %s116, 1
      %p120 = scmp.eq.s32.totalorder %s40, 1
      %p121 = scmp.ne.s32.totalorder %s116, %s118
      %p122 = scmp.eq.s32.totalorder %s40, 0
      %p123 = por %p121, %p122
      %p124 = scmp.ne.s32.totalorder %s116, %s118
      %p125 = scmp.eq.s32.totalorder %s45, 1
      %p126 = por %p124, %p125
      %p127 = scmp.ne.s32.totalorder %s118, %s119
      %p128 = scmp.eq.s32.totalorder %s45, 0
      %p129 = por %p127, %p128
      %p130 = scmp.ne.s32.totalorder %s118, %s119
      %p131 = scmp.eq.s32.totalorder %s46, 1
      %p132 = por %p130, %p131
      %p134 = scmp.ne.s32.totalorder %s119, %s133
      %p135 = scmp.eq.s32.totalorder %s46, 0
      %p136 = por %p134, %p135
      %s138 = sadd.s32 %s137, 1
      %p141 = scmp.eq.s32.totalorder %s40, 1
      %p142 = scmp.ne.s32.totalorder %s137, %s139
      %p143 = scmp.eq.s32.totalorder %s40, 0
      %p144 = por %p142, %p143
      %p145 = scmp.ne.s32.totalorder %s137, %s139
      %p146 = scmp.eq.s32.totalorder %s45, 1
      %p147 = por %p145, %p146
      %p148 = scmp.ne.s32.totalorder %s139, %s140
      %p149 = scmp.eq.s32.totalorder %s45, 0
      %p150 = por %p148, %p149
      %p151 = scmp.ne.s32.totalorder %s139, %s140
      %p152 = scmp.eq.s32.totalorder %s46, 1
      %p153 = por %p151, %p152
      %p155 = scmp.ne.s32.totalorder %s140, %s154
      %p156 = scmp.eq.s32.totalorder %s46, 0
      %p157 = por %p155, %p156
      %s159 = sadd.s32 %s158, 1
      %p162 = scmp.eq.s32.totalorder %s40, 1
      %p163 = scmp.ne.s32.totalorder %s158, %s160
      %p164 = scmp.eq.s32.totalorder %s40, 0
      %p165 = por %p163, %p164
      %p166 = scmp.ne.s32.totalorder %s158, %s160
      %p167 = scmp.eq.s32.totalorder %s45, 1
      %p168 = por %p166, %p167
      %p169 = scmp.ne.s32.totalorder %s160, %s161
      %p170 = scmp.eq.s32.totalorder %s45, 0
      %p171 = por %p169, %p170
      %p172 = scmp.ne.s32.totalorder %s160, %s161
      %p173 = scmp.eq.s32.totalorder %s46, 1
      %p174 = por %p172, %p173
      %p176 = scmp.ne.s32.totalorder %s161, %s175
      %p177 = scmp.eq.s32.totalorder %s46, 0
      %p178 = por %p176, %p177
      %s180 = sadd.s32 %s179, 1
      %p183 = scmp.eq.s32.totalorder %s40, 1
      %p184 = scmp.ne.s32.totalorder %s179, %s181
      %p185 = scmp.eq.s32.totalorder %s40, 0
      %p186 = por %p184, %p185
      %p187 = scmp.ne.s32.totalorder %s179, %s181
      %p188 = scmp.eq.s32.totalorder %s45, 1
      %p189 = por %p187, %p188
      %p190 = scmp.ne.s32.totalorder %s181, %s182
      %p191 = scmp.eq.s32.totalorder %s45, 0
      %p192 = por %p190, %p191
      %p193 = scmp.ne.s32.totalorder %s181, %s182
      %p194 = scmp.eq.s32.totalorder %s46, 1
      %p195 = por %p193, %p194
      %p197 = scmp.ne.s32.totalorder %s182, %s196
      %p198 = scmp.eq.s32.totalorder %s46, 0
      %p199 = por %p197, %p198
      %s201 = sadd.s32 %s200, 1
      %p204 = scmp.eq.s32.totalorder %s40, 1
      %p205 = scmp.ne.s32.totalorder %s200, %s202
      %p206 = scmp.eq.s32.totalorder %s40, 0
      %p207 = por %p205, %p206
      %p208 = scmp.ne.s32.totalorder %s200, %s202
      %p209 = scmp.eq.s32.totalorder %s45, 1
      %p210 = por %p208, %p209
      %p211 = scmp.ne.s32.totalorder %s202, %s203
      %p212 = scmp.eq.s32.totalorder %s45, 0
      %p213 = por %p211, %p212
      %p214 = scmp.ne.s32.totalorder %s202, %s203
      %p215 = scmp.eq.s32.totalorder %s46, 1
      %p216 = por %p214, %p215
      %p218 = scmp.ne.s32.totalorder %s203, %s217
      %p219 = scmp.eq.s32.totalorder %s46, 0
      %p220 = por %p218, %p219
      %s222 = sadd.s32 %s221, 1
      %p225 = scmp.eq.s32.totalorder %s40, 1
      %p226 = scmp.ne.s32.totalorder %s221, %s223
      %p227 = scmp.eq.s32.totalorder %s40, 0
      %p228 = por %p226, %p227
      %p229 = scmp.ne.s32.totalorder %s221, %s223
      %p230 = scmp.eq.s32.totalorder %s45, 1
      %p231 = por %p229, %p230
      %p232 = scmp.ne.s32.totalorder %s223, %s224
      %p233 = scmp.eq.s32.totalorder %s45, 0
      %p234 = por %p232, %p233
      %p235 = scmp.ne.s32.totalorder %s223, %s224
      %p236 = scmp.eq.s32.totalorder %s46, 1
      %p237 = por %p235, %p236
      %p239 = scmp.ne.s32.totalorder %s224, %s238
      %p240 = scmp.eq.s32.totalorder %s46, 0
      %p241 = por %p239, %p240
      %s243 = sadd.s32 %s242, 1
      %p246 = scmp.eq.s32.totalorder %s40, 1
      %p247 = scmp.ne.s32.totalorder %s242, %s244
      %p248 = scmp.eq.s32.totalorder %s40, 0
      %p249 = por %p247, %p248
      %p250 = scmp.ne.s32.totalorder %s242, %s244
      %p251 = scmp.eq.s32.totalorder %s45, 1
      %p252 = por %p250, %p251
      %p253 = scmp.ne.s32.totalorder %s244, %s245
      %p254 = scmp.eq.s32.totalorder %s45, 0
      %p255 = por %p253, %p254
      %p256 = scmp.ne.s32.totalorder %s244, %s245
      %p257 = scmp.eq.s32.totalorder %s46, 1
      %p258 = por %p256, %p257
      %p260 = scmp.ne.s32.totalorder %s245, %s259
      %p261 = scmp.eq.s32.totalorder %s46, 0
      %p262 = por %p260, %p261
      %s264 = sadd.s32 %s263, 1
      %p267 = scmp.eq.s32.totalorder %s40, 1
      %p268 = scmp.ne.s32.totalorder %s263, %s265
      %p269 = scmp.eq.s32.totalorder %s40, 0
      %p270 = por %p268, %p269
      %p271 = scmp.ne.s32.totalorder %s263, %s265
      %p272 = scmp.eq.s32.totalorder %s45, 1
      %p273 = por %p271, %p272
      %p274 = scmp.ne.s32.totalorder %s265, %s266
      %p275 = scmp.eq.s32.totalorder %s45, 0
      %p276 = por %p274, %p275
      %p277 = scmp.ne.s32.totalorder %s265, %s266
      %p278 = scmp.eq.s32.totalorder %s46, 1
      %p279 = por %p277, %p278
      %p281 = scmp.ne.s32.totalorder %s266, %s280
      %p282 = scmp.eq.s32.totalorder %s46, 0
      %p283 = por %p281, %p282
      %s285 = sadd.s32 %s284, 1
      %p288 = scmp.eq.s32.totalorder %s40, 1
      %p289 = scmp.ne.s32.totalorder %s284, %s286
      %p290 = scmp.eq.s32.totalorder %s40, 0
      %p291 = por %p289, %p290
      %p292 = scmp.ne.s32.totalorder %s284, %s286
      %p293 = scmp.eq.s32.totalorder %s45, 1
      %p294 = por %p292, %p293
      %p295 = scmp.ne.s32.totalorder %s286, %s287
      %p296 = scmp.eq.s32.totalorder %s45, 0
      %p297 = por %p295, %p296
      %p298 = scmp.ne.s32.totalorder %s286, %s287
      %p299 = scmp.eq.s32.totalorder %s46, 1
      %p300 = por %p298, %p299
      %p302 = scmp.ne.s32.totalorder %s287, %s301
      %p303 = scmp.eq.s32.totalorder %s46, 0
      %p304 = por %p302, %p303
      %s306 = sadd.s32 %s305, 1
      %p309 = scmp.eq.s32.totalorder %s40, 1
      %p310 = scmp.ne.s32.totalorder %s305, %s307
      %p311 = scmp.eq.s32.totalorder %s40, 0
      %p312 = por %p310, %p311
      %p313 = scmp.ne.s32.totalorder %s305, %s307
      %p314 = scmp.eq.s32.totalorder %s45, 1
      %p315 = por %p313, %p314
      %p316 = scmp.ne.s32.totalorder %s307, %s308
      %p317 = scmp.eq.s32.totalorder %s45, 0
      %p318 = por %p316, %p317
      %p319 = scmp.ne.s32.totalorder %s307, %s308
      %p320 = scmp.eq.s32.totalorder %s46, 1
      %p321 = por %p319, %p320
      %p323 = scmp.ne.s32.totalorder %s308, %s322
      %p324 = scmp.eq.s32.totalorder %s46, 0
      %p325 = por %p323, %p324
      %s327 = sadd.s32 %s326, 1
      %p330 = scmp.eq.s32.totalorder %s40, 1
      %p331 = scmp.ne.s32.totalorder %s326, %s328
      %p332 = scmp.eq.s32.totalorder %s40, 0
      %p333 = por %p331, %p332
      %p334 = scmp.ne.s32.totalorder %s326, %s328
      %p335 = scmp.eq.s32.totalorder %s45, 1
      %p336 = por %p334, %p335
      %p337 = scmp.ne.s32.totalorder %s328, %s329
      %p338 = scmp.eq.s32.totalorder %s45, 0
      %p339 = por %p337, %p338
      %p340 = scmp.ne.s32.totalorder %s328, %s329
      %p341 = scmp.eq.s32.totalorder %s46, 1
      %p342 = por %p340, %p341
      %p344 = scmp.ne.s32.totalorder %s329, %s343
      %p345 = scmp.eq.s32.totalorder %s46, 0
      %p346 = por %p344, %p345
      %s348 = sadd.s32 %s347, 1
      %p351 = scmp.eq.s32.totalorder %s40, 1
      %p352 = scmp.ne.s32.totalorder %s347, %s349
      %p353 = scmp.eq.s32.totalorder %s40, 0
      %p354 = por %p352, %p353
      %p355 = scmp.ne.s32.totalorder %s347, %s349
      %p356 = scmp.eq.s32.totalorder %s45, 1
      %p357 = por %p355, %p356
      %p358 = scmp.ne.s32.totalorder %s349, %s350
      %p359 = scmp.eq.s32.totalorder %s45, 0
      %p360 = por %p358, %p359
      %p361 = scmp.ne.s32.totalorder %s349, %s350
      %p362 = scmp.eq.s32.totalorder %s46, 1
      %p363 = por %p361, %p362
      %p365 = scmp.ne.s32.totalorder %s350, %s364
      %p366 = scmp.eq.s32.totalorder %s46, 0
      %p367 = por %p365, %p366
      %s369 = sadd.s32 %s368, 1
      %p372 = scmp.eq.s32.totalorder %s40, 1
      %p373 = scmp.ne.s32.totalorder %s368, %s370
      %p374 = scmp.eq.s32.totalorder %s40, 0
      %p375 = por %p373, %p374
      %p376 = scmp.ne.s32.totalorder %s368, %s370
      %p377 = scmp.eq.s32.totalorder %s45, 1
      %p378 = por %p376, %p377
      %p379 = scmp.ne.s32.totalorder %s370, %s371
      %p380 = scmp.eq.s32.totalorder %s45, 0
      %p381 = por %p379, %p380
      %p382 = scmp.ne.s32.totalorder %s370, %s371
      %p383 = scmp.eq.s32.totalorder %s46, 1
      %p384 = por %p382, %p383
      %p386 = scmp.ne.s32.totalorder %s371, %s385
      %p387 = scmp.eq.s32.totalorder %s46, 0
      %p388 = por %p386, %p387
      %s390 = sadd.s32 %s389, 1
      %p393 = scmp.eq.s32.totalorder %s40, 1
      %p394 = scmp.ne.s32.totalorder %s389, %s391
      %p395 = scmp.eq.s32.totalorder %s40, 0
      %p396 = por %p394, %p395
      %p397 = scmp.ne.s32.totalorder %s389, %s391
      %p398 = scmp.eq.s32.totalorder %s45, 1
      %p399 = por %p397, %p398
      %p400 = scmp.ne.s32.totalorder %s391, %s392
      %p401 = scmp.eq.s32.totalorder %s45, 0
      %p402 = por %p400, %p401
      %p403 = scmp.ne.s32.totalorder %s391, %s392
      %p404 = scmp.eq.s32.totalorder %s46, 1
      %p405 = por %p403, %p404
      %p407 = scmp.ne.s32.totalorder %s392, %s406
      %p408 = scmp.eq.s32.totalorder %s46, 0
      %p409 = por %p407, %p408
      %s411 = sadd.s32 %s410, 1
      %p414 = scmp.eq.s32.totalorder %s40, 1
      %p415 = scmp.ne.s32.totalorder %s410, %s412
      %p416 = scmp.eq.s32.totalorder %s40, 0
      %p417 = por %p415, %p416
      %p418 = scmp.ne.s32.totalorder %s410, %s412
      %p419 = scmp.eq.s32.totalorder %s45, 1
      %p420 = por %p418, %p419
      %p421 = scmp.ne.s32.totalorder %s412, %s413
      %p422 = scmp.eq.s32.totalorder %s45, 0
      %p423 = por %p421, %p422
      %p424 = scmp.ne.s32.totalorder %s412, %s413
      %p425 = scmp.eq.s32.totalorder %s46, 1
      %p426 = por %p424, %p425
      %p428 = scmp.ne.s32.totalorder %s413, %s427
      %p429 = scmp.eq.s32.totalorder %s46, 0
      %p430 = por %p428, %p429
      %s432 = sadd.s32 %s431, 1
      %p435 = scmp.eq.s32.totalorder %s40, 1
      %p436 = scmp.ne.s32.totalorder %s431, %s433
      %p437 = scmp.eq.s32.totalorder %s40, 0
      %p438 = por %p436, %p437
      %p439 = scmp.ne.s32.totalorder %s431, %s433
      %p440 = scmp.eq.s32.totalorder %s45, 1
      %p441 = por %p439, %p440
      %p442 = scmp.ne.s32.totalorder %s433, %s434
      %p443 = scmp.eq.s32.totalorder %s45, 0
      %p444 = por %p442, %p443
      %p445 = scmp.ne.s32.totalorder %s433, %s434
      %p446 = scmp.eq.s32.totalorder %s46, 1
      %p447 = por %p445, %p446
      %p449 = scmp.ne.s32.totalorder %s434, %s448
      %p450 = scmp.eq.s32.totalorder %s46, 0
      %p451 = por %p449, %p450
      %s453 = sadd.s32 %s452, 1
      %p456 = scmp.eq.s32.totalorder %s40, 1
      %p457 = scmp.ne.s32.totalorder %s452, %s454
      %p458 = scmp.eq.s32.totalorder %s40, 0
      %p459 = por %p457, %p458
      %p460 = scmp.ne.s32.totalorder %s452, %s454
      %p461 = scmp.eq.s32.totalorder %s45, 1
      %p462 = por %p460, %p461
      %p463 = scmp.ne.s32.totalorder %s454, %s455
      %p464 = scmp.eq.s32.totalorder %s45, 0
      %p465 = por %p463, %p464
      %p466 = scmp.ne.s32.totalorder %s454, %s455
      %p467 = scmp.eq.s32.totalorder %s46, 1
      %p468 = por %p466, %p467
      %p470 = scmp.ne.s32.totalorder %s455, %s469
      %p471 = scmp.eq.s32.totalorder %s46, 0
      %p472 = por %p470, %p471
      %s474 = sadd.s32 %s473, 1
      %p477 = scmp.eq.s32.totalorder %s40, 1
      %p478 = scmp.ne.s32.totalorder %s473, %s475
      %p479 = scmp.eq.s32.totalorder %s40, 0
      %p480 = por %p478, %p479
      %p481 = scmp.ne.s32.totalorder %s473, %s475
      %p482 = scmp.eq.s32.totalorder %s45, 1
      %p483 = por %p481, %p482
      %p484 = scmp.ne.s32.totalorder %s475, %s476
      %p485 = scmp.eq.s32.totalorder %s45, 0
      %p486 = por %p484, %p485
      %p487 = scmp.ne.s32.totalorder %s475, %s476
      %p488 = scmp.eq.s32.totalorder %s46, 1
      %p489 = por %p487, %p488
      %p491 = scmp.ne.s32.totalorder %s476, %s490
      %p492 = scmp.eq.s32.totalorder %s46, 0
      %p493 = por %p491, %p492
      %s495 = sadd.s32 %s494, 1
      %p498 = scmp.eq.s32.totalorder %s40, 1
      %p499 = scmp.ne.s32.totalorder %s494, %s496
      %p500 = scmp.eq.s32.totalorder %s40, 0
      %p501 = por %p499, %p500
      %p502 = scmp.ne.s32.totalorder %s494, %s496
      %p503 = scmp.eq.s32.totalorder %s45, 1
      %p504 = por %p502, %p503
      %p505 = scmp.ne.s32.totalorder %s496, %s497
      %p506 = scmp.eq.s32.totalorder %s45, 0
      %p507 = por %p505, %p506
      %p508 = scmp.ne.s32.totalorder %s496, %s497
      %p509 = scmp.eq.s32.totalorder %s46, 1
      %p510 = por %p508, %p509
      %p512 = scmp.ne.s32.totalorder %s497, %s511
      %p513 = scmp.eq.s32.totalorder %s46, 0
      %p514 = por %p512, %p513
      %s516 = sadd.s32 %s515, 1
      %p519 = scmp.eq.s32.totalorder %s40, 1
      %p520 = scmp.ne.s32.totalorder %s515, %s517
      %p521 = scmp.eq.s32.totalorder %s40, 0
      %p522 = por %p520, %p521
      %p523 = scmp.ne.s32.totalorder %s515, %s517
      %p524 = scmp.eq.s32.totalorder %s45, 1
      %p525 = por %p523, %p524
      %p526 = scmp.ne.s32.totalorder %s517, %s518
      %p527 = scmp.eq.s32.totalorder %s45, 0
      %p528 = por %p526, %p527
      %p529 = scmp.ne.s32.totalorder %s517, %s518
      %p530 = scmp.eq.s32.totalorder %s46, 1
      %p531 = por %p529, %p530
      %p533 = scmp.ne.s32.totalorder %s518, %s532
      %p534 = scmp.eq.s32.totalorder %s46, 0
      %p535 = por %p533, %p534
      %s537 = sadd.s32 %s536, 1
      %p540 = scmp.eq.s32.totalorder %s40, 1
      %p541 = scmp.ne.s32.totalorder %s536, %s538
      %p542 = scmp.eq.s32.totalorder %s40, 0
      %p543 = por %p541, %p542
      %p544 = scmp.ne.s32.totalorder %s536, %s538
      %p545 = scmp.eq.s32.totalorder %s45, 1
      %p546 = por %p544, %p545
      %p547 = scmp.ne.s32.totalorder %s538, %s539
      %p548 = scmp.eq.s32.totalorder %s45, 0
      %p549 = por %p547, %p548
      %p550 = scmp.ne.s32.totalorder %s538, %s539
      %p551 = scmp.eq.s32.totalorder %s46, 1
      %p552 = por %p550, %p551
      %p554 = scmp.ne.s32.totalorder %s539, %s553
      %p555 = scmp.eq.s32.totalorder %s46, 0
      %p556 = por %p554, %p555
      %s558 = sadd.s32 %s557, 1
      %p561 = scmp.eq.s32.totalorder %s40, 1
      %p562 = scmp.ne.s32.totalorder %s557, %s559
      %p563 = scmp.eq.s32.totalorder %s40, 0
      %p564 = por %p562, %p563
      %p565 = scmp.ne.s32.totalorder %s557, %s559
      %p566 = scmp.eq.s32.totalorder %s45, 1
      %p567 = por %p565, %p566
      %p568 = scmp.ne.s32.totalorder %s559, %s560
      %p569 = scmp.eq.s32.totalorder %s45, 0
      %p570 = por %p568, %p569
      %p571 = scmp.ne.s32.totalorder %s559, %s560
      %p572 = scmp.eq.s32.totalorder %s46, 1
      %p573 = por %p571, %p572
      %p575 = scmp.ne.s32.totalorder %s560, %s574
      %p576 = scmp.eq.s32.totalorder %s46, 0
      %p577 = por %p575, %p576
      %s579 = sadd.s32 %s578, 1
      %p582 = scmp.eq.s32.totalorder %s40, 1
      %p583 = scmp.ne.s32.totalorder %s578, %s580
      %p584 = scmp.eq.s32.totalorder %s40, 0
      %p585 = por %p583, %p584
      %p586 = scmp.ne.s32.totalorder %s578, %s580
      %p587 = scmp.eq.s32.totalorder %s45, 1
      %p588 = por %p586, %p587
      %p589 = scmp.ne.s32.totalorder %s580, %s581
      %p590 = scmp.eq.s32.totalorder %s45, 0
      %p591 = por %p589, %p590
      %p592 = scmp.ne.s32.totalorder %s580, %s581
      %p593 = scmp.eq.s32.totalorder %s46, 1
      %p594 = por %p592, %p593
      %p596 = scmp.ne.s32.totalorder %s581, %s595
      %p597 = scmp.eq.s32.totalorder %s46, 0
      %p598 = por %p596, %p597
      %s599 = ssub.s32 %s40, %s47
      %p600 = scmp.eq.s32.totalorder %s599, 0
      %s602 = sadd.s32 %s601, 1
      %s603 = scalar_select %p600, %s601, %s602
      %p606 = pneg %p600
      %p607 = scmp.eq.s32.totalorder %s40, 1
      %p608 = por %p606, %p607
      %p609 = scmp.ne.s32.totalorder %s601, %s604
      %p610 = scmp.eq.s32.totalorder %s40, 0
      %p611 = por %p609, %p610
      %p612 = scmp.ne.s32.totalorder %s601, %s604
      %p613 = scmp.eq.s32.totalorder %s45, 1
      %p614 = por %p612, %p613
      %p615 = scmp.ne.s32.totalorder %s604, %s605
      %p616 = scmp.eq.s32.totalorder %s45, 0
      %p617 = por %p615, %p616
      %p618 = scmp.ne.s32.totalorder %s604, %s605
      %p619 = scmp.eq.s32.totalorder %s46, 1
      %p620 = por %p618, %p619
      %p622 = scmp.ne.s32.totalorder %s605, %s621
      %p623 = scmp.eq.s32.totalorder %s46, 0
      %p624 = por %p622, %p623
      %p625 = scmp.le.s32.totalorder 1, %s40
      %p626 = scmp.lt.s32.totalorder %s40, 3
      %p627 = pnand %p625, %p626
      %p628 = pneg %p627
      // Predicated region
      $region9: #{slot_attention_forward.1} parent=5 // pred_check
        _
      $region10: #{slot_attention_forward.1} parent=5 // pred_check_branch
        %630 = sbr.rel (%p627) target = $region12
      $region11: #{slot_attention_forward.1} parent=5 // pred_region
        %s631 = ssub.s32 %s40, 1
        // Predicated region
        $region13: #{slot_attention_forward.1} parent=11 // pred_check
          %p632 = pneg %p87
        $region14: #{slot_attention_forward.1} parent=11 // pred_check_branch
          %634 = sbr.rel (%p632) target = $region16
        $region15: #{slot_attention_forward.1} parent=11 // pred_region
          _
        $region16: #{slot_attention_forward.1} parent=11 // pred_fallthru
          _
        // Predicated region
        $region17: #{slot_attention_forward.1} parent=11 // pred_check
          %p635 = pneg %p108
        $region18: #{slot_attention_forward.1} parent=11 // pred_check_branch
          %637 = sbr.rel (%p635) target = $region20
        $region19: #{slot_attention_forward.1} parent=11 // pred_region
          _
        $region20: #{slot_attention_forward.1} parent=11 // pred_fallthru
          _
        // Predicated region
        $region21: #{slot_attention_forward.1} parent=11 // pred_check
          %p638 = pneg %p129
        $region22: #{slot_attention_forward.1} parent=11 // pred_check_branch
          %640 = sbr.rel (%p638) target = $region24
        $region23: #{slot_attention_forward.1} parent=11 // pred_region
          %642 = vsyncadd [#allocation3], 0
          %s644 = sshll.u32 %s3, 4
          %s645 = int_to_ptr.hbm [resolvable:$true] %s644
          %s646 = sshll.u32 [#allocation2], 4
          %s647 = int_to_ptr.vmem [resolvable:$true] %s646
          %649 = dma.hbm_to_vmem [thread:$0]  %s645, 16, %s647, [#allocation3]
        $region24: #{slot_attention_forward.1} parent=11 // pred_fallthru
          _
        // Predicated region
        $region25: #{slot_attention_forward.1} parent=11 // pred_check
          %p650 = pneg %p150
        $region26: #{slot_attention_forward.1} parent=11 // pred_check_branch
          %652 = sbr.rel (%p650) target = $region28
        $region27: #{slot_attention_forward.1} parent=11 // pred_region
          _
        $region28: #{slot_attention_forward.1} parent=11 // pred_fallthru
          _
        // Predicated region
        $region29: #{slot_attention_forward.1} parent=11 // pred_check
          %p653 = pneg %p171
        $region30: #{slot_attention_forward.1} parent=11 // pred_check_branch
          %655 = sbr.rel (%p653) target = $region32
        $region31: #{slot_attention_forward.1} parent=11 // pred_region
          _
        $region32: #{slot_attention_forward.1} parent=11 // pred_fallthru
          _
        // Predicated region
        $region33: #{slot_attention_forward.1} parent=11 // pred_check
          %p656 = pneg %p192
        $region34: #{slot_attention_forward.1} parent=11 // pred_check_branch
          %658 = sbr.rel (%p656) target = $region36
        $region35: #{slot_attention_forward.1} parent=11 // pred_region
          _
        $region36: #{slot_attention_forward.1} parent=11 // pred_fallthru
          _
        // Predicated region
        $region37: #{slot_attention_forward.1} parent=11 // pred_check
          %p659 = pneg %p213
        $region38: #{slot_attention_forward.1} parent=11 // pred_check_branch
          %661 = sbr.rel (%p659) target = $region40
        $region39: #{slot_attention_forward.1} parent=11 // pred_region
          _
        $region40: #{slot_attention_forward.1} parent=11 // pred_fallthru
          _
        // Predicated region
        $region41: #{slot_attention_forward.1} parent=11 // pred_check
          %p662 = pneg %p234
        $region42: #{slot_attention_forward.1} parent=11 // pred_check_branch
          %664 = sbr.rel (%p662) target = $region44
        $region43: #{slot_attention_forward.1} parent=11 // pred_region
          _
        $region44: #{slot_attention_forward.1} parent=11 // pred_fallthru
          _
        // Predicated region
        $region45: #{slot_attention_forward.1} parent=11 // pred_check
          %p665 = pneg %p255
        $region46: #{slot_attention_forward.1} parent=11 // pred_check_branch
          %667 = sbr.rel (%p665) target = $region48
        $region47: #{slot_attention_forward.1} parent=11 // pred_region
          _
        $region48: #{slot_attention_forward.1} parent=11 // pred_fallthru
          _
        // Predicated region
        $region49: #{slot_attention_forward.1} parent=11 // pred_check
          %p668 = pneg %p276
        $region50: #{slot_attention_forward.1} parent=11 // pred_check_branch
          %670 = sbr.rel (%p668) target = $region52
        $region51: #{slot_attention_forward.1} parent=11 // pred_region
          _
        $region52: #{slot_attention_forward.1} parent=11 // pred_fallthru
          _
        // Predicated region
        $region53: #{slot_attention_forward.1} parent=11 // pred_check
          %p671 = pneg %p297
        $region54: #{slot_attention_forward.1} parent=11 // pred_check_branch
          %673 = sbr.rel (%p671) target = $region56
        $region55: #{slot_attention_forward.1} parent=11 // pred_region
          _
        $region56: #{slot_attention_forward.1} parent=11 // pred_fallthru
          _
        // Predicated region
        $region57: #{slot_attention_forward.1} parent=11 // pred_check
          %p674 = pneg %p318
        $region58: #{slot_attention_forward.1} parent=11 // pred_check_branch
          %676 = sbr.rel (%p674) target = $region60
        $region59: #{slot_attention_forward.1} parent=11 // pred_region
          _
        $region60: #{slot_attention_forward.1} parent=11 // pred_fallthru
          _
        // Predicated region
        $region61: #{slot_attention_forward.1} parent=11 // pred_check
          %p677 = pneg %p339
        $region62: #{slot_attention_forward.1} parent=11 // pred_check_branch
          %679 = sbr.rel (%p677) target = $region64
        $region63: #{slot_attention_forward.1} parent=11 // pred_region
          _
        $region64: #{slot_attention_forward.1} parent=11 // pred_fallthru
          _
        // Predicated region
        $region65: #{slot_attention_forward.1} parent=11 // pred_check
          %p680 = pneg %p360
        $region66: #{slot_attention_forward.1} parent=11 // pred_check_branch
          %682 = sbr.rel (%p680) target = $region68
        $region67: #{slot_attention_forward.1} parent=11 // pred_region
          %684 = vsyncadd [#allocation6], 0
          %s686 = sshll.u32 %s14, 4
          %s687 = int_to_ptr.hbm [resolvable:$true] %s686
          %s688 = sshll.u32 [#allocation5], 4
          %s689 = int_to_ptr.vmem [resolvable:$true] %s688
          %691 = dma.hbm_to_vmem [thread:$0]  %s687, 16, %s689, [#allocation6]
        $region68: #{slot_attention_forward.1} parent=11 // pred_fallthru
          _
        // Predicated region
        $region69: #{slot_attention_forward.1} parent=11 // pred_check
          %p692 = pneg %p381
        $region70: #{slot_attention_forward.1} parent=11 // pred_check_branch
          %694 = sbr.rel (%p692) target = $region72
        $region71: #{slot_attention_forward.1} parent=11 // pred_region
          _
        $region72: #{slot_attention_forward.1} parent=11 // pred_fallthru
          _
        // Predicated region
        $region73: #{slot_attention_forward.1} parent=11 // pred_check
          %p695 = pneg %p402
        $region74: #{slot_attention_forward.1} parent=11 // pred_check_branch
          %697 = sbr.rel (%p695) target = $region76
        $region75: #{slot_attention_forward.1} parent=11 // pred_region
          _
        $region76: #{slot_attention_forward.1} parent=11 // pred_fallthru
          _
        // Predicated region
        $region77: #{slot_attention_forward.1} parent=11 // pred_check
          %p698 = pneg %p423
        $region78: #{slot_attention_forward.1} parent=11 // pred_check_branch
          %700 = sbr.rel (%p698) target = $region80
        $region79: #{slot_attention_forward.1} parent=11 // pred_region
          _
        $region80: #{slot_attention_forward.1} parent=11 // pred_fallthru
          _
        // Predicated region
        $region81: #{slot_attention_forward.1} parent=11 // pred_check
          %p701 = pneg %p444
        $region82: #{slot_attention_forward.1} parent=11 // pred_check_branch
          %703 = sbr.rel (%p701) target = $region84
        $region83: #{slot_attention_forward.1} parent=11 // pred_region
          %705 = vsyncadd [#allocation6], 0
          %s707 = sshll.u32 %s18, 4
          %s708 = int_to_ptr.hbm [resolvable:$true] %s707
          %s709 = sshll.u32 [#allocation7], 4
          %s710 = int_to_ptr.vmem [resolvable:$true] %s709
          %712 = dma.hbm_to_vmem [thread:$0]  %s708, 16, %s710, [#allocation6]
        $region84: #{slot_attention_forward.1} parent=11 // pred_fallthru
          _
        // Predicated region
        $region85: #{slot_attention_forward.1} parent=11 // pred_check
          %p713 = pneg %p465
        $region86: #{slot_attention_forward.1} parent=11 // pred_check_branch
          %715 = sbr.rel (%p713) target = $region88
        $region87: #{slot_attention_forward.1} parent=11 // pred_region
          %717 = vsyncadd [#allocation9], 0
          %s719 = sshll.u32 %s19, 4
          %s720 = int_to_ptr.hbm [resolvable:$true] %s719
          %s721 = sshll.u32 [#allocation8], 4
          %s722 = int_to_ptr.vmem [resolvable:$true] %s721
          %724 = dma.hbm_to_vmem [thread:$0]  %s720, 16, %s722, [#allocation9]
        $region88: #{slot_attention_forward.1} parent=11 // pred_fallthru
          _
        // Predicated region
        $region89: #{slot_attention_forward.1} parent=11 // pred_check
          %p725 = pneg %p486
        $region90: #{slot_attention_forward.1} parent=11 // pred_check_branch
          %727 = sbr.rel (%p725) target = $region92
        $region91: #{slot_attention_forward.1} parent=11 // pred_region
          %729 = vsyncadd [#allocation9], 0
          %s731 = sshll.u32 %s20, 4
          %s732 = int_to_ptr.hbm [resolvable:$true] %s731
          %s733 = sshll.u32 [#allocation10], 4
          %s734 = int_to_ptr.vmem [resolvable:$true] %s733
          %736 = dma.hbm_to_vmem [thread:$0]  %s732, 16, %s734, [#allocation9]
        $region92: #{slot_attention_forward.1} parent=11 // pred_fallthru
          _
        // Predicated region
        $region93: #{slot_attention_forward.1} parent=11 // pred_check
          %p737 = pneg %p507
        $region94: #{slot_attention_forward.1} parent=11 // pred_check_branch
          %739 = sbr.rel (%p737) target = $region96
        $region95: #{slot_attention_forward.1} parent=11 // pred_region
          %741 = vsyncadd [#allocation12], 0
          %s743 = sshll.u32 %s21, 4
          %s744 = int_to_ptr.hbm [resolvable:$true] %s743
          %s745 = sshll.u32 [#allocation11], 4
          %s746 = int_to_ptr.vmem [resolvable:$true] %s745
          %748 = dma.hbm_to_vmem [thread:$0]  %s744, 16, %s746, [#allocation12]
        $region96: #{slot_attention_forward.1} parent=11 // pred_fallthru
          _
        // Predicated region
        $region97: #{slot_attention_forward.1} parent=11 // pred_check
          %p749 = pneg %p528
        $region98: #{slot_attention_forward.1} parent=11 // pred_check_branch
          %751 = sbr.rel (%p749) target = $region100
        $region99: #{slot_attention_forward.1} parent=11 // pred_region
          %753 = vsyncadd [#allocation12], 0
          %s754 = sshll.u32 %s22, 4
          %s755 = int_to_ptr.hbm [resolvable:$true] %s754
          %s756 = sshll.u32 [#allocation13], 4
          %s757 = int_to_ptr.vmem [resolvable:$true] %s756
          %762 = dma.hbm_to_vmem [thread:$0]  %s755, 512, %s757, [#allocation12], 128, 128, 8
        $region100: #{slot_attention_forward.1} parent=11 // pred_fallthru
          _
        // Predicated region
        $region101: #{slot_attention_forward.1} parent=11 // pred_check
          %p763 = pneg %p549
        $region102: #{slot_attention_forward.1} parent=11 // pred_check_branch
          %765 = sbr.rel (%p763) target = $region104
        $region103: #{slot_attention_forward.1} parent=11 // pred_region
          _
        $region104: #{slot_attention_forward.1} parent=11 // pred_fallthru
          _
        // Predicated region
        $region105: #{slot_attention_forward.1} parent=11 // pred_check
          %p766 = pneg %p570
        $region106: #{slot_attention_forward.1} parent=11 // pred_check_branch
          %768 = sbr.rel (%p766) target = $region108
        $region107: #{slot_attention_forward.1} parent=11 // pred_region
          %770 = vsyncadd [#allocation15], 0
          %s771 = sshll.u32 %s24, 4
          %s772 = int_to_ptr.hbm [resolvable:$true] %s771
          %s773 = sshll.u32 [#allocation14], 4
          %s774 = int_to_ptr.vmem [resolvable:$true] %s773
          %779 = dma.hbm_to_vmem [thread:$0]  %s772, 512, %s774, [#allocation15], 128, 128, 8
        $region108: #{slot_attention_forward.1} parent=11 // pred_fallthru
          _
        // Predicated region
        $region109: #{slot_attention_forward.1} parent=11 // pred_check
          %p780 = pneg %p591
        $region110: #{slot_attention_forward.1} parent=11 // pred_check_branch
          %782 = sbr.rel (%p780) target = $region112
        $region111: #{slot_attention_forward.1} parent=11 // pred_region
          _
        $region112: #{slot_attention_forward.1} parent=11 // pred_fallthru
          _
      $region12: #{slot_attention_forward.1} parent=5 // pred_fallthru
        _
      %p783 = scmp.lt.s32.totalorder %s40, 2
      // Predicated region
      $region113: #{slot_attention_forward.1} parent=5 // pred_check
        %p784 = pneg %p783
      $region114: #{slot_attention_forward.1} parent=5 // pred_check_branch
        %786 = sbr.rel (%p784) target = $region116
      $region115: #{slot_attention_forward.1} parent=5 // pred_region
        // Predicated region
        $region117: #{slot_attention_forward.1} parent=115 // pred_check
          %p787 = pneg %p60
        $region118: #{slot_attention_forward.1} parent=115 // pred_check_branch
          %789 = sbr.rel (%p787) target = $region120
        $region119: #{slot_attention_forward.1} parent=115 // pred_region
          %p790 = scmp.lt.s32.totalorder %s40, 1
          %s791 = scalar_select %p790, %s40, 1
          %s792 = smul.addr %s791, 8
          %s793 = smul.addr %s792, 8
          %s794 = scalar_lea.vmem %s0, %s793
        $region120: #{slot_attention_forward.1} parent=115 // pred_fallthru
          _
      $region116: #{slot_attention_forward.1} parent=5 // pred_fallthru
        _
      %p795 = scmp.le.s32.totalorder 1, %s40
      %p796 = scmp.lt.s32.totalorder %s40, 3
      %p797 = pnand %p795, %p796
      %p798 = pneg %p797
      // Predicated region
      $region121: #{slot_attention_forward.1} parent=5 // pred_check
        _
      $region122: #{slot_attention_forward.1} parent=5 // pred_check_branch
        %800 = sbr.rel (%p797) target = $region124
      $region123: #{slot_attention_forward.1} parent=5 // pred_region
        %s801 = ssub.s32 %s40, 1
        // Predicated region
        $region125: #{slot_attention_forward.1} parent=123 // pred_check
          %p802 = pneg %p129
        $region126: #{slot_attention_forward.1} parent=123 // pred_check_branch
          %804 = sbr.rel (%p802) target = $region128
        $region127: #{slot_attention_forward.1} parent=123 // pred_region
          %806 = dma.done [#allocation3], 16
        $region128: #{slot_attention_forward.1} parent=123 // pred_fallthru
          _
        // Predicated region
        $region129: #{slot_attention_forward.1} parent=123 // pred_check
          %p807 = pneg %p360
        $region130: #{slot_attention_forward.1} parent=123 // pred_check_branch
          %809 = sbr.rel (%p807) target = $region132
        $region131: #{slot_attention_forward.1} parent=123 // pred_region
          %811 = dma.done [#allocation6], 16
        $region132: #{slot_attention_forward.1} parent=123 // pred_fallthru
          _
        // Predicated region
        $region133: #{slot_attention_forward.1} parent=123 // pred_check
          %p812 = pneg %p444
        $region134: #{slot_attention_forward.1} parent=123 // pred_check_branch
          %814 = sbr.rel (%p812) target = $region136
        $region135: #{slot_attention_forward.1} parent=123 // pred_region
          %816 = dma.done [#allocation6], 16
        $region136: #{slot_attention_forward.1} parent=123 // pred_fallthru
          _
        // Predicated region
        $region137: #{slot_attention_forward.1} parent=123 // pred_check
          %p817 = pneg %p465
        $region138: #{slot_attention_forward.1} parent=123 // pred_check_branch
          %819 = sbr.rel (%p817) target = $region140
        $region139: #{slot_attention_forward.1} parent=123 // pred_region
          %821 = dma.done [#allocation9], 16
        $region140: #{slot_attention_forward.1} parent=123 // pred_fallthru
          _
        // Predicated region
        $region141: #{slot_attention_forward.1} parent=123 // pred_check
          %p822 = pneg %p486
        $region142: #{slot_attention_forward.1} parent=123 // pred_check_branch
          %824 = sbr.rel (%p822) target = $region144
        $region143: #{slot_attention_forward.1} parent=123 // pred_region
          %826 = dma.done [#allocation9], 16
        $region144: #{slot_attention_forward.1} parent=123 // pred_fallthru
          _
        // Predicated region
        $region145: #{slot_attention_forward.1} parent=123 // pred_check
          %p827 = pneg %p507
        $region146: #{slot_attention_forward.1} parent=123 // pred_check_branch
          %829 = sbr.rel (%p827) target = $region148
        $region147: #{slot_attention_forward.1} parent=123 // pred_region
          %831 = dma.done [#allocation12], 16
        $region148: #{slot_attention_forward.1} parent=123 // pred_fallthru
          _
        // Predicated region
        $region149: #{slot_attention_forward.1} parent=123 // pred_check
          %p832 = pneg %p528
        $region150: #{slot_attention_forward.1} parent=123 // pred_check_branch
          %834 = sbr.rel (%p832) target = $region152
        $region151: #{slot_attention_forward.1} parent=123 // pred_region
          %836 = dma.done [#allocation12], 512
        $region152: #{slot_attention_forward.1} parent=123 // pred_fallthru
          _
        // Predicated region
        $region153: #{slot_attention_forward.1} parent=123 // pred_check
          %p837 = pneg %p570
        $region154: #{slot_attention_forward.1} parent=123 // pred_check_branch
          %839 = sbr.rel (%p837) target = $region156
        $region155: #{slot_attention_forward.1} parent=123 // pred_region
          %841 = dma.done [#allocation15], 512
        $region156: #{slot_attention_forward.1} parent=123 // pred_fallthru
          _
        %p842 = scmp.lt.s32.totalorder %s45, 1
        %s843 = scalar_select %p842, %s45, 1
        %s844 = smul.addr %s843, 8
        %s845 = smul.addr %s844, 8
        %s846 = scalar_lea.vmem %s0, %s845
        %p847 = pneg %p66
        %p848 = pneg %p63
        %p849 = pneg %p87
        %p850 = pneg %p84
        %p851 = pneg %p108
        %p852 = pneg %p105
        %p853 = pneg %p129
        %p854 = pneg %p126
        %p855 = pneg %p150
        %p856 = pneg %p147
        %p857 = pneg %p171
        %p858 = pneg %p168
        %p859 = pneg %p192
        %p860 = pneg %p189
        %p861 = pneg %p213
        %p862 = pneg %p210
        %p863 = pneg %p234
        %p864 = pneg %p231
        %p865 = pneg %p255
        %p866 = pneg %p252
        %p867 = pneg %p276
        %p868 = pneg %p273
        %p869 = pneg %p297
        %p870 = pneg %p294
        %p871 = pneg %p318
        %p872 = pneg %p315
        %p873 = pneg %p339
        %p874 = pneg %p336
        %p875 = pneg %p360
        %p876 = pneg %p357
        %p877 = pneg %p381
        %p878 = pneg %p378
        %p879 = pneg %p402
        %p880 = pneg %p399
        %p881 = pneg %p423
        %p882 = pneg %p420
        %p883 = pneg %p444
        %p884 = pneg %p441
        %p885 = pneg %p465
        %p886 = pneg %p462
        %p887 = pneg %p486
        %p888 = pneg %p483
        %p889 = pneg %p507
        %p890 = pneg %p504
        %p891 = pneg %p528
        %p892 = pneg %p525
        %p893 = pneg %p549
        %p894 = pneg %p546
        %p895 = pneg %p570
        %p896 = pneg %p567
        %p897 = pneg %p591
        %p898 = pneg %p588
        %p899 = pneg %p617
        %p900 = pneg %p614
        %s901 = sand.u32 %s604, 1
        %s902 = scalar_lea.sflag [#allocation4], %s901
        %s903 = sand.u32 %s604, 1
        %s904 = smul.addr %s903, 4
        %s905 = scalar_lea.vmem [#allocation16], %s904
        %p906 = scmp.lt.s32.totalorder %s45, 1
        %s907 = scalar_select %p906, %s45, 1
        %s908 = smul.addr %s907, 8
        %s909 = smul.addr %s908, 8
        %s910 = scalar_lea.vmem %s0, %s909
        %v911 = vld [vmem:[%s910] sm:$0xff]
        %v912 = vld [vmem:[%s910 + $0x8] sm:$0xff]
        %v913 = vld [vmem:[%s910 + $0x10] sm:$0xff]
        %v914 = vld [vmem:[%s910 + $0x18] sm:$0xff]
        %v915 = vld [vmem:[%s910 + $0x20] sm:$0xff]
        %v916 = vld [vmem:[%s910 + $0x28] sm:$0xff]
        %v917 = vld [vmem:[%s910 + $0x30] sm:$0xff]
        %v918 = vld [vmem:[%s910 + $0x38] sm:$0xff]
        %v919 = vld [vmem:[%s2] sm:$0x1]
        %v920 = vld [vmem:[#allocation2] sm:$0x1]
        %vm921 = vcmask 261120
        %v922 = vsel %vm921, %v911, 0.0
        %923 = vadd.xlane.f32.xlu0 %v922
        %v924 = vpop.xlane.xlu0 %923
        %v925 = vsel %vm921, %v912, 0.0
        %926 = vadd.xlane.f32.xlu0 %v925
        %v927 = vpop.xlane.xlu0 %926
        %v928 = vsel %vm921, %v913, 0.0
        %929 = vadd.xlane.f32.xlu0 %v928
        %v930 = vpop.xlane.xlu0 %929
        %v931 = vsel %vm921, %v914, 0.0
        %932 = vadd.xlane.f32.xlu0 %v931
        %v933 = vpop.xlane.xlu0 %932
        %v934 = vsel %vm921, %v915, 0.0
        %935 = vadd.xlane.f32.xlu0 %v934
        %v936 = vpop.xlane.xlu0 %935
        %v937 = vsel %vm921, %v916, 0.0
        %938 = vadd.xlane.f32.xlu0 %v937
        %v939 = vpop.xlane.xlu0 %938
        %v940 = vsel %vm921, %v917, 0.0
        %941 = vadd.xlane.f32.xlu0 %v940
        %v942 = vpop.xlane.xlu0 %941
        %v943 = vsel %vm921, %v918, 0.0
        %944 = vadd.xlane.f32.xlu0 %v943
        %v945 = vpop.xlane.xlu0 %944
        %v946 = vrcp.pop 32.0
        %v947 = vmul.f32 32.0, %v946
        %v948 = vsub.f32 1.0, %v947
        %v949 = vmul.f32 %v946, %v948
        %v950 = vadd.f32 %v946, %v949
        %vm951 = vweird.f32 %v946
        %v952 = vsel %vm951, %v946, %v950
        %v953 = vmul.f32 %v924, %v952
        %v954 = vmul.f32 %v927, %v952
        %v955 = vmul.f32 %v930, %v952
        %v956 = vmul.f32 %v933, %v952
        %v957 = vmul.f32 %v936, %v952
        %v958 = vmul.f32 %v939, %v952
        %v959 = vmul.f32 %v942, %v952
        %v960 = vmul.f32 %v945, %v952
        %v961 = vsub.f32 %v911, %v953
        %v962 = vsub.f32 %v912, %v954
        %v963 = vsub.f32 %v913, %v955
        %v964 = vsub.f32 %v914, %v956
        %v965 = vsub.f32 %v915, %v957
        %v966 = vsub.f32 %v916, %v958
        %v967 = vsub.f32 %v917, %v959
        %v968 = vsub.f32 %v918, %v960
        %v969 = vmul.f32 %v961, %v961
        %v970 = vmul.f32 %v962, %v962
        %v971 = vmul.f32 %v963, %v963
        %v972 = vmul.f32 %v964, %v964
        %v973 = vmul.f32 %v965, %v965
        %v974 = vmul.f32 %v966, %v966
        %v975 = vmul.f32 %v967, %v967
        %v976 = vmul.f32 %v968, %v968
        %v977 = vsel %vm921, %v969, 0.0
        %978 = vadd.xlane.f32.xlu0 %v977
        %v979 = vpop.xlane.xlu0 %978
        %v980 = vsel %vm921, %v970, 0.0
        %981 = vadd.xlane.f32.xlu0 %v980
        %v982 = vpop.xlane.xlu0 %981
        %v983 = vsel %vm921, %v971, 0.0
        %984 = vadd.xlane.f32.xlu0 %v983
        %v985 = vpop.xlane.xlu0 %984
        %v986 = vsel %vm921, %v972, 0.0
        %987 = vadd.xlane.f32.xlu0 %v986
        %v988 = vpop.xlane.xlu0 %987
        %v989 = vsel %vm921, %v973, 0.0
        %990 = vadd.xlane.f32.xlu0 %v989
        %v991 = vpop.xlane.xlu0 %990
        %v992 = vsel %vm921, %v974, 0.0
        %993 = vadd.xlane.f32.xlu0 %v992
        %v994 = vpop.xlane.xlu0 %993
        %v995 = vsel %vm921, %v975, 0.0
        %996 = vadd.xlane.f32.xlu0 %v995
        %v997 = vpop.xlane.xlu0 %996
        %v998 = vsel %vm921, %v976, 0.0
        %999 = vadd.xlane.f32.xlu0 %v998
        %v1000 = vpop.xlane.xlu0 %999
        %v1001 = vmul.f32 %v979, %v952
        %v1002 = vmul.f32 %v982, %v952
        %v1003 = vmul.f32 %v985, %v952
        %v1004 = vmul.f32 %v988, %v952
        %v1005 = vmul.f32 %v991, %v952
        %v1006 = vmul.f32 %v994, %v952
        %v1007 = vmul.f32 %v997, %v952
        %v1008 = vmul.f32 %v1000, %v952
        %v1009 = vadd.f32 %v1001, 1e-05
        %v1010 = vadd.f32 %v1002, 1e-05
        %v1011 = vadd.f32 %v1003, 1e-05
        %v1012 = vadd.f32 %v1004, 1e-05
        %v1013 = vadd.f32 %v1005, 1e-05
        %v1014 = vadd.f32 %v1006, 1e-05
        %v1015 = vadd.f32 %v1007, 1e-05
        %v1016 = vadd.f32 %v1008, 1e-05
        %v1017 = vrsqrt.pop %v1009
        %v1018 = vmul.f32 %v1017, %v1009
        %v1019 = vmul.f32 %v1018, %v1017
        %v1020 = vmul.f32 0.5, %v1019
        %v1021 = vsub.f32 1.5, %v1020
        %v1022 = vmul.f32 %v1017, %v1021
        %vm1023 = vweird.f32 %v1009
        %vm1024 = vweird.f32 %v1017
        %vm1025 = vmor %vm1023, %vm1024
        %v1026 = vsel %vm1025, %v1017, %v1022
        %v1027 = vrsqrt.pop %v1010
        %v1028 = vmul.f32 %v1027, %v1010
        %v1029 = vmul.f32 %v1028, %v1027
        %v1030 = vmul.f32 0.5, %v1029
        %v1031 = vsub.f32 1.5, %v1030
        %v1032 = vmul.f32 %v1027, %v1031
        %vm1033 = vweird.f32 %v1010
        %vm1034 = vweird.f32 %v1027
        %vm1035 = vmor %vm1033, %vm1034
        %v1036 = vsel %vm1035, %v1027, %v1032
        %v1037 = vrsqrt.pop %v1011
        %v1038 = vmul.f32 %v1037, %v1011
        %v1039 = vmul.f32 %v1038, %v1037
        %v1040 = vmul.f32 0.5, %v1039
        %v1041 = vsub.f32 1.5, %v1040
        %v1042 = vmul.f32 %v1037, %v1041
        %vm1043 = vweird.f32 %v1011
        %vm1044 = vweird.f32 %v1037
        %vm1045 = vmor %vm1043, %vm1044
        %v1046 = vsel %vm1045, %v1037, %v1042
        %v1047 = vrsqrt.pop %v1012
        %v1048 = vmul.f32 %v1047, %v1012
        %v1049 = vmul.f32 %v1048, %v1047
        %v1050 = vmul.f32 0.5, %v1049
        %v1051 = vsub.f32 1.5, %v1050
        %v1052 = vmul.f32 %v1047, %v1051
        %vm1053 = vweird.f32 %v1012
        %vm1054 = vweird.f32 %v1047
        %vm1055 = vmor %vm1053, %vm1054
        %v1056 = vsel %vm1055, %v1047, %v1052
        %v1057 = vrsqrt.pop %v1013
        %v1058 = vmul.f32 %v1057, %v1013
        %v1059 = vmul.f32 %v1058, %v1057
        %v1060 = vmul.f32 0.5, %v1059
        %v1061 = vsub.f32 1.5, %v1060
        %v1062 = vmul.f32 %v1057, %v1061
        %vm1063 = vweird.f32 %v1013
        %vm1064 = vweird.f32 %v1057
        %vm1065 = vmor %vm1063, %vm1064
        %v1066 = vsel %vm1065, %v1057, %v1062
        %v1067 = vrsqrt.pop %v1014
        %v1068 = vmul.f32 %v1067, %v1014
        %v1069 = vmul.f32 %v1068, %v1067
        %v1070 = vmul.f32 0.5, %v1069
        %v1071 = vsub.f32 1.5, %v1070
        %v1072 = vmul.f32 %v1067, %v1071
        %vm1073 = vweird.f32 %v1014
        %vm1074 = vweird.f32 %v1067
        %vm1075 = vmor %vm1073, %vm1074
        %v1076 = vsel %vm1075, %v1067, %v1072
        %v1077 = vrsqrt.pop %v1015
        %v1078 = vmul.f32 %v1077, %v1015
        %v1079 = vmul.f32 %v1078, %v1077
        %v1080 = vmul.f32 0.5, %v1079
        %v1081 = vsub.f32 1.5, %v1080
        %v1082 = vmul.f32 %v1077, %v1081
        %vm1083 = vweird.f32 %v1015
        %vm1084 = vweird.f32 %v1077
        %vm1085 = vmor %vm1083, %vm1084
        %v1086 = vsel %vm1085, %v1077, %v1082
        %v1087 = vrsqrt.pop %v1016
        %v1088 = vmul.f32 %v1087, %v1016
        %v1089 = vmul.f32 %v1088, %v1087
        %v1090 = vmul.f32 0.5, %v1089
        %v1091 = vsub.f32 1.5, %v1090
        %v1092 = vmul.f32 %v1087, %v1091
        %vm1093 = vweird.f32 %v1016
        %vm1094 = vweird.f32 %v1087
        %vm1095 = vmor %vm1093, %vm1094
        %v1096 = vsel %vm1095, %v1087, %v1092
        %v1097 = vmul.f32 %v961, %v1026
        %v1098 = vmul.f32 %v962, %v1036
        %v1099 = vmul.f32 %v963, %v1046
        %v1100 = vmul.f32 %v964, %v1056
        %v1101 = vmul.f32 %v965, %v1066
        %v1102 = vmul.f32 %v966, %v1076
        %v1103 = vmul.f32 %v967, %v1086
        %v1104 = vmul.f32 %v968, %v1096
        %v1106 = vperm.slane %v919, 0
        %v1108 = vmul.f32 %v1097, %v1106
        %v1109 = vmul.f32 %v1098, %v1106
        %v1110 = vmul.f32 %v1099, %v1106
        %v1111 = vmul.f32 %v1100, %v1106
        %v1112 = vmul.f32 %v1101, %v1106
        %v1113 = vmul.f32 %v1102, %v1106
        %v1114 = vmul.f32 %v1103, %v1106
        %v1115 = vmul.f32 %v1104, %v1106
        %v1117 = vperm.slane %v920, 0
        %v1119 = vadd.f32 %v1108, %v1117
        %v1120 = vadd.f32 %v1109, %v1117
        %v1121 = vadd.f32 %v1110, %v1117
        %v1122 = vadd.f32 %v1111, %v1117
        %v1123 = vadd.f32 %v1112, %v1117
        %v1124 = vadd.f32 %v1113, %v1117
        %v1125 = vadd.f32 %v1114, %v1117
        %v1126 = vadd.f32 %v1115, %v1117
        %v1127 = vld [vmem:[%s4] sm:$0xff]
        %v1128 = vld [vmem:[%s4 + $0x8] sm:$0xff]
        %v1129 = vld [vmem:[%s4 + $0x10] sm:$0xff]
        %v1130 = vld [vmem:[%s4 + $0x18] sm:$0xff]
        %v1132 = vsel %vm921, %v1119, 0
        %v1135 = vsel %vm921, %v1120, 0
        %v1138 = vsel %vm921, %v1121, 0
        %v1141 = vsel %vm921, %v1122, 0
        %v1144 = vsel %vm921, %v1123, 0
        %v1147 = vsel %vm921, %v1124, 0
        %v1150 = vsel %vm921, %v1125, 0
        %v1153 = vsel %vm921, %v1126, 0
        %1155 = vmatpush.msra.mxu0 0.0
        %1156 = vmatpush.msra.mxu0 0.0
        %1157 = vmatpush.msra.mxu0 0.0
        %1158 = vmatpush.msra.mxu0 0.0
        %1159 = vmatpush.msra.mxu0 0.0
        %1160 = vmatpush.msra.mxu0 0.0
        %1161 = vmatpush.msra.mxu0 0.0
        %1162 = vmatpush.msra.mxu0 0.0
        %1163 = vmatpush.msra.mxu0 0.0
        %1164 = vmatpush.msra.mxu0 0.0
        %1165 = vmatpush.msra.mxu0 0.0
        %1166 = vmatpush.msra.mxu0 0.0
        %1167 = vmatpush.msra.mxu0 %v1130
        %1168 = vmatpush.msra.mxu0 %v1129
        %1169 = vmatpush.msra.mxu0 %v1128
        %1170 = vmatpush.msra.mxu0 %v1127
        %1171 = vmatmul.f32.gmra.mxu0 %v1132
        %v1172 = vpop.f32.mrf.mxu0
        %v1173 = vadd.f32 0.0, %v1172
        %1174 = vmatmul.f32.gmra.mxu0 %v1135
        %v1175 = vpop.f32.mrf.mxu0
        %v1176 = vadd.f32 0.0, %v1175
        %1177 = vmatmul.f32.gmra.mxu0 %v1138
        %v1178 = vpop.f32.mrf.mxu0
        %v1179 = vadd.f32 0.0, %v1178
        %1180 = vmatmul.f32.gmra.mxu0 %v1141
        %v1181 = vpop.f32.mrf.mxu0
        %v1182 = vadd.f32 0.0, %v1181
        %1183 = vmatmul.f32.gmra.mxu0 %v1144
        %v1184 = vpop.f32.mrf.mxu0
        %v1185 = vadd.f32 0.0, %v1184
        %1186 = vmatmul.f32.gmra.mxu0 %v1147
        %v1187 = vpop.f32.mrf.mxu0
        %v1188 = vadd.f32 0.0, %v1187
        %1189 = vmatmul.f32.gmra.mxu0 %v1150
        %v1190 = vpop.f32.mrf.mxu0
        %v1191 = vadd.f32 0.0, %v1190
        %1192 = vmatmul.f32.gmra.mxu0 %v1153
        %v1193 = vpop.f32.mrf.mxu0
        %v1194 = vadd.f32 0.0, %v1193
        %1195 = vdwg.mxu0
        %v1196 = vld [vmem:[%s5] sm:$0x1]
        %1198 = vset.pattern.permute.xlu0 32
        %1199 = vperm.xlu0 %1198, %v911
        %v1200 = vpop.permute.xlu0 %1199
        %1203 = vset.pattern.permute.xlu0 32
        %1204 = vperm.xlu0 %1203, %v912
        %v1205 = vpop.permute.xlu0 %1204
        %1208 = vset.pattern.permute.xlu0 32
        %1209 = vperm.xlu0 %1208, %v913
        %v1210 = vpop.permute.xlu0 %1209
        %1213 = vset.pattern.permute.xlu0 32
        %1214 = vperm.xlu0 %1213, %v914
        %v1215 = vpop.permute.xlu0 %1214
        %1218 = vset.pattern.permute.xlu0 32
        %1219 = vperm.xlu0 %1218, %v915
        %v1220 = vpop.permute.xlu0 %1219
        %1223 = vset.pattern.permute.xlu0 32
        %1224 = vperm.xlu0 %1223, %v916
        %v1225 = vpop.permute.xlu0 %1224
        %1228 = vset.pattern.permute.xlu0 32
        %1229 = vperm.xlu0 %1228, %v917
        %v1230 = vpop.permute.xlu0 %1229
        %1233 = vset.pattern.permute.xlu0 32
        %1234 = vperm.xlu0 %1233, %v918
        %v1235 = vpop.permute.xlu0 %1234
        %v1237 = vperm.slane %v1196, 0
        %v1238 = vmul.f32 %v1200, %v1237
        %v1239 = vmul.f32 %v1205, %v1237
        %v1240 = vmul.f32 %v1210, %v1237
        %v1241 = vmul.f32 %v1215, %v1237
        %v1242 = vmul.f32 %v1220, %v1237
        %v1243 = vmul.f32 %v1225, %v1237
        %v1244 = vmul.f32 %v1230, %v1237
        %v1245 = vmul.f32 %v1235, %v1237
        %v1246 = vld [vmem:[%s5 + $0x1] sm:$0x1]
        %1247 = vset.pattern.permute.xlu0 33
        %1248 = vperm.xlu0 %1247, %v911
        %v1249 = vpop.permute.xlu0 %1248
        %1251 = vset.pattern.permute.xlu0 33
        %1252 = vperm.xlu0 %1251, %v912
        %v1253 = vpop.permute.xlu0 %1252
        %1255 = vset.pattern.permute.xlu0 33
        %1256 = vperm.xlu0 %1255, %v913
        %v1257 = vpop.permute.xlu0 %1256
        %1259 = vset.pattern.permute.xlu0 33
        %1260 = vperm.xlu0 %1259, %v914
        %v1261 = vpop.permute.xlu0 %1260
        %1263 = vset.pattern.permute.xlu0 33
        %1264 = vperm.xlu0 %1263, %v915
        %v1265 = vpop.permute.xlu0 %1264
        %1267 = vset.pattern.permute.xlu0 33
        %1268 = vperm.xlu0 %1267, %v916
        %v1269 = vpop.permute.xlu0 %1268
        %1271 = vset.pattern.permute.xlu0 33
        %1272 = vperm.xlu0 %1271, %v917
        %v1273 = vpop.permute.xlu0 %1272
        %1275 = vset.pattern.permute.xlu0 33
        %1276 = vperm.xlu0 %1275, %v918
        %v1277 = vpop.permute.xlu0 %1276
        %v1279 = vperm.slane %v1246, 0
        %v1280 = vmul.f32 %v1249, %v1279
        %v1281 = vmul.f32 %v1253, %v1279
        %v1282 = vmul.f32 %v1257, %v1279
        %v1283 = vmul.f32 %v1261, %v1279
        %v1284 = vmul.f32 %v1265, %v1279
        %v1285 = vmul.f32 %v1269, %v1279
        %v1286 = vmul.f32 %v1273, %v1279
        %v1287 = vmul.f32 %v1277, %v1279
        %v1288 = vadd.f32 %v1238, %v1280
        %v1289 = vadd.f32 %v1239, %v1281
        %v1290 = vadd.f32 %v1240, %v1282
        %v1291 = vadd.f32 %v1241, %v1283
        %v1292 = vadd.f32 %v1242, %v1284
        %v1293 = vadd.f32 %v1243, %v1285
        %v1294 = vadd.f32 %v1244, %v1286
        %v1295 = vadd.f32 %v1245, %v1287
        %v1296 = vld [vmem:[%s6] sm:$0x1]
        %v1298 = vperm.slane %v1296, 0
        %v1300 = vadd.f32 %v1288, %v1298
        %v1301 = vadd.f32 %v1289, %v1298
        %v1302 = vadd.f32 %v1290, %v1298
        %v1303 = vadd.f32 %v1291, %v1298
        %v1304 = vadd.f32 %v1292, %v1298
        %v1305 = vadd.f32 %v1293, %v1298
        %v1306 = vadd.f32 %v1294, %v1298
        %v1307 = vadd.f32 %v1295, %v1298
        %1316 = vrot.lane.b32.xlu0 %v1173, 96
        %v1317 = vpop.permute.xlu0 %1316
        %1318 = vrot.lane.b32.xlu0 %v1176, 96
        %v1319 = vpop.permute.xlu0 %1318
        %1320 = vrot.lane.b32.xlu0 %v1179, 96
        %v1321 = vpop.permute.xlu0 %1320
        %1322 = vrot.lane.b32.xlu0 %v1182, 96
        %v1323 = vpop.permute.xlu0 %1322
        %1324 = vrot.lane.b32.xlu0 %v1185, 96
        %v1325 = vpop.permute.xlu0 %1324
        %1326 = vrot.lane.b32.xlu0 %v1188, 96
        %v1327 = vpop.permute.xlu0 %1326
        %1328 = vrot.lane.b32.xlu0 %v1191, 96
        %v1329 = vpop.permute.xlu0 %1328
        %1330 = vrot.lane.b32.xlu0 %v1194, 96
        %v1331 = vpop.permute.xlu0 %1330
        %v1340 = vadd.f32 %v1173, %v1300
        %v1341 = vadd.f32 %v1176, %v1301
        %v1342 = vadd.f32 %v1179, %v1302
        %v1343 = vadd.f32 %v1182, %v1303
        %v1344 = vadd.f32 %v1185, %v1304
        %v1345 = vadd.f32 %v1188, %v1305
        %v1346 = vadd.f32 %v1191, %v1306
        %v1347 = vadd.f32 %v1194, %v1307
        %v1348 = vadd.f32 %v1317, %v1300
        %v1349 = vadd.f32 %v1319, %v1301
        %v1350 = vadd.f32 %v1321, %v1302
        %v1351 = vadd.f32 %v1323, %v1303
        %v1352 = vadd.f32 %v1325, %v1304
        %v1353 = vadd.f32 %v1327, %v1305
        %v1354 = vadd.f32 %v1329, %v1306
        %v1355 = vadd.f32 %v1331, %v1307
        %v1356 = vld [vmem:[%s7] sm:$0x1]
        %v1357 = vld [vmem:[%s8] sm:$0x1]
        %v1358 = vsel %vm921, %v1340, 0.0
        %1359 = vadd.xlane.f32.xlu0 %v1358
        %v1360 = vpop.xlane.xlu0 %1359
        %v1361 = vsel %vm921, %v1341, 0.0
        %1362 = vadd.xlane.f32.xlu0 %v1361
        %v1363 = vpop.xlane.xlu0 %1362
        %v1364 = vsel %vm921, %v1342, 0.0
        %1365 = vadd.xlane.f32.xlu0 %v1364
        %v1366 = vpop.xlane.xlu0 %1365
        %v1367 = vsel %vm921, %v1343, 0.0
        %1368 = vadd.xlane.f32.xlu0 %v1367
        %v1369 = vpop.xlane.xlu0 %1368
        %v1370 = vsel %vm921, %v1344, 0.0
        %1371 = vadd.xlane.f32.xlu0 %v1370
        %v1372 = vpop.xlane.xlu0 %1371
        %v1373 = vsel %vm921, %v1345, 0.0
        %1374 = vadd.xlane.f32.xlu0 %v1373
        %v1375 = vpop.xlane.xlu0 %1374
        %v1376 = vsel %vm921, %v1346, 0.0
        %1377 = vadd.xlane.f32.xlu0 %v1376
        %v1378 = vpop.xlane.xlu0 %1377
        %v1379 = vsel %vm921, %v1347, 0.0
        %1380 = vadd.xlane.f32.xlu0 %v1379
        %v1381 = vpop.xlane.xlu0 %1380
        %v1382 = vsel %vm921, %v1348, 0.0
        %1383 = vadd.xlane.f32.xlu0 %v1382
        %v1384 = vpop.xlane.xlu0 %1383
        %v1385 = vsel %vm921, %v1349, 0.0
        %1386 = vadd.xlane.f32.xlu0 %v1385
        %v1387 = vpop.xlane.xlu0 %1386
        %v1388 = vsel %vm921, %v1350, 0.0
        %1389 = vadd.xlane.f32.xlu0 %v1388
        %v1390 = vpop.xlane.xlu0 %1389
        %v1391 = vsel %vm921, %v1351, 0.0
        %1392 = vadd.xlane.f32.xlu0 %v1391
        %v1393 = vpop.xlane.xlu0 %1392
        %v1394 = vsel %vm921, %v1352, 0.0
        %1395 = vadd.xlane.f32.xlu0 %v1394
        %v1396 = vpop.xlane.xlu0 %1395
        %v1397 = vsel %vm921, %v1353, 0.0
        %1398 = vadd.xlane.f32.xlu0 %v1397
        %v1399 = vpop.xlane.xlu0 %1398
        %v1400 = vsel %vm921, %v1354, 0.0
        %1401 = vadd.xlane.f32.xlu0 %v1400
        %v1402 = vpop.xlane.xlu0 %1401
        %v1403 = vsel %vm921, %v1355, 0.0
        %1404 = vadd.xlane.f32.xlu0 %v1403
        %v1405 = vpop.xlane.xlu0 %1404
        %v1406 = vmul.f32 %v1360, %v952
        %v1407 = vmul.f32 %v1363, %v952
        %v1408 = vmul.f32 %v1366, %v952
        %v1409 = vmul.f32 %v1369, %v952
        %v1410 = vmul.f32 %v1372, %v952
        %v1411 = vmul.f32 %v1375, %v952
        %v1412 = vmul.f32 %v1378, %v952
        %v1413 = vmul.f32 %v1381, %v952
        %v1414 = vmul.f32 %v1384, %v952
        %v1415 = vmul.f32 %v1387, %v952
        %v1416 = vmul.f32 %v1390, %v952
        %v1417 = vmul.f32 %v1393, %v952
        %v1418 = vmul.f32 %v1396, %v952
        %v1419 = vmul.f32 %v1399, %v952
        %v1420 = vmul.f32 %v1402, %v952
        %v1421 = vmul.f32 %v1405, %v952
        %v1422 = vsub.f32 %v1340, %v1406
        %v1423 = vsub.f32 %v1341, %v1407
        %v1424 = vsub.f32 %v1342, %v1408
        %v1425 = vsub.f32 %v1343, %v1409
        %v1426 = vsub.f32 %v1344, %v1410
        %v1427 = vsub.f32 %v1345, %v1411
        %v1428 = vsub.f32 %v1346, %v1412
        %v1429 = vsub.f32 %v1347, %v1413
        %v1430 = vsub.f32 %v1348, %v1414
        %v1431 = vsub.f32 %v1349, %v1415
        %v1432 = vsub.f32 %v1350, %v1416
        %v1433 = vsub.f32 %v1351, %v1417
        %v1434 = vsub.f32 %v1352, %v1418
        %v1435 = vsub.f32 %v1353, %v1419
        %v1436 = vsub.f32 %v1354, %v1420
        %v1437 = vsub.f32 %v1355, %v1421
        %v1438 = vmul.f32 %v1422, %v1422
        %v1439 = vmul.f32 %v1423, %v1423
        %v1440 = vmul.f32 %v1424, %v1424
        %v1441 = vmul.f32 %v1425, %v1425
        %v1442 = vmul.f32 %v1426, %v1426
        %v1443 = vmul.f32 %v1427, %v1427
        %v1444 = vmul.f32 %v1428, %v1428
        %v1445 = vmul.f32 %v1429, %v1429
        %v1446 = vmul.f32 %v1430, %v1430
        %v1447 = vmul.f32 %v1431, %v1431
        %v1448 = vmul.f32 %v1432, %v1432
        %v1449 = vmul.f32 %v1433, %v1433
        %v1450 = vmul.f32 %v1434, %v1434
        %v1451 = vmul.f32 %v1435, %v1435
        %v1452 = vmul.f32 %v1436, %v1436
        %v1453 = vmul.f32 %v1437, %v1437
        %v1454 = vsel %vm921, %v1438, 0.0
        %1455 = vadd.xlane.f32.xlu0 %v1454
        %v1456 = vpop.xlane.xlu0 %1455
        %v1457 = vsel %vm921, %v1439, 0.0
        %1458 = vadd.xlane.f32.xlu0 %v1457
        %v1459 = vpop.xlane.xlu0 %1458
        %v1460 = vsel %vm921, %v1440, 0.0
        %1461 = vadd.xlane.f32.xlu0 %v1460
        %v1462 = vpop.xlane.xlu0 %1461
        %v1463 = vsel %vm921, %v1441, 0.0
        %1464 = vadd.xlane.f32.xlu0 %v1463
        %v1465 = vpop.xlane.xlu0 %1464
        %v1466 = vsel %vm921, %v1442, 0.0
        %1467 = vadd.xlane.f32.xlu0 %v1466
        %v1468 = vpop.xlane.xlu0 %1467
        %v1469 = vsel %vm921, %v1443, 0.0
        %1470 = vadd.xlane.f32.xlu0 %v1469
        %v1471 = vpop.xlane.xlu0 %1470
        %v1472 = vsel %vm921, %v1444, 0.0
        %1473 = vadd.xlane.f32.xlu0 %v1472
        %v1474 = vpop.xlane.xlu0 %1473
        %v1475 = vsel %vm921, %v1445, 0.0
        %1476 = vadd.xlane.f32.xlu0 %v1475
        %v1477 = vpop.xlane.xlu0 %1476
        %v1478 = vsel %vm921, %v1446, 0.0
        %1479 = vadd.xlane.f32.xlu0 %v1478
        %v1480 = vpop.xlane.xlu0 %1479
        %v1481 = vsel %vm921, %v1447, 0.0
        %1482 = vadd.xlane.f32.xlu0 %v1481
        %v1483 = vpop.xlane.xlu0 %1482
        %v1484 = vsel %vm921, %v1448, 0.0
        %1485 = vadd.xlane.f32.xlu0 %v1484
        %v1486 = vpop.xlane.xlu0 %1485
        %v1487 = vsel %vm921, %v1449, 0.0
        %1488 = vadd.xlane.f32.xlu0 %v1487
        %v1489 = vpop.xlane.xlu0 %1488
        %v1490 = vsel %vm921, %v1450, 0.0
        %1491 = vadd.xlane.f32.xlu0 %v1490
        %v1492 = vpop.xlane.xlu0 %1491
        %v1493 = vsel %vm921, %v1451, 0.0
        %1494 = vadd.xlane.f32.xlu0 %v1493
        %v1495 = vpop.xlane.xlu0 %1494
        %v1496 = vsel %vm921, %v1452, 0.0
        %1497 = vadd.xlane.f32.xlu0 %v1496
        %v1498 = vpop.xlane.xlu0 %1497
        %v1499 = vsel %vm921, %v1453, 0.0
        %1500 = vadd.xlane.f32.xlu0 %v1499
        %v1501 = vpop.xlane.xlu0 %1500
        %v1502 = vmul.f32 %v1456, %v952
        %v1503 = vmul.f32 %v1459, %v952
        %v1504 = vmul.f32 %v1462, %v952
        %v1505 = vmul.f32 %v1465, %v952
        %v1506 = vmul.f32 %v1468, %v952
        %v1507 = vmul.f32 %v1471, %v952
        %v1508 = vmul.f32 %v1474, %v952
        %v1509 = vmul.f32 %v1477, %v952
        %v1510 = vmul.f32 %v1480, %v952
        %v1511 = vmul.f32 %v1483, %v952
        %v1512 = vmul.f32 %v1486, %v952
        %v1513 = vmul.f32 %v1489, %v952
        %v1514 = vmul.f32 %v1492, %v952
        %v1515 = vmul.f32 %v1495, %v952
        %v1516 = vmul.f32 %v1498, %v952
        %v1517 = vmul.f32 %v1501, %v952
        %v1518 = vadd.f32 %v1502, 1e-05
        %v1519 = vadd.f32 %v1503, 1e-05
        %v1520 = vadd.f32 %v1504, 1e-05
        %v1521 = vadd.f32 %v1505, 1e-05
        %v1522 = vadd.f32 %v1506, 1e-05
        %v1523 = vadd.f32 %v1507, 1e-05
        %v1524 = vadd.f32 %v1508, 1e-05
        %v1525 = vadd.f32 %v1509, 1e-05
        %v1526 = vadd.f32 %v1510, 1e-05
        %v1527 = vadd.f32 %v1511, 1e-05
        %v1528 = vadd.f32 %v1512, 1e-05
        %v1529 = vadd.f32 %v1513, 1e-05
        %v1530 = vadd.f32 %v1514, 1e-05
        %v1531 = vadd.f32 %v1515, 1e-05
        %v1532 = vadd.f32 %v1516, 1e-05
        %v1533 = vadd.f32 %v1517, 1e-05
        %v1534 = vrsqrt.pop %v1518
        %v1535 = vmul.f32 %v1534, %v1518
        %v1536 = vmul.f32 %v1535, %v1534
        %v1537 = vmul.f32 0.5, %v1536
        %v1538 = vsub.f32 1.5, %v1537
        %v1539 = vmul.f32 %v1534, %v1538
        %vm1540 = vweird.f32 %v1518
        %vm1541 = vweird.f32 %v1534
        %vm1542 = vmor %vm1540, %vm1541
        %v1543 = vsel %vm1542, %v1534, %v1539
        %v1544 = vrsqrt.pop %v1519
        %v1545 = vmul.f32 %v1544, %v1519
        %v1546 = vmul.f32 %v1545, %v1544
        %v1547 = vmul.f32 0.5, %v1546
        %v1548 = vsub.f32 1.5, %v1547
        %v1549 = vmul.f32 %v1544, %v1548
        %vm1550 = vweird.f32 %v1519
        %vm1551 = vweird.f32 %v1544
        %vm1552 = vmor %vm1550, %vm1551
        %v1553 = vsel %vm1552, %v1544, %v1549
        %v1554 = vrsqrt.pop %v1520
        %v1555 = vmul.f32 %v1554, %v1520
        %v1556 = vmul.f32 %v1555, %v1554
        %v1557 = vmul.f32 0.5, %v1556
        %v1558 = vsub.f32 1.5, %v1557
        %v1559 = vmul.f32 %v1554, %v1558
        %vm1560 = vweird.f32 %v1520
        %vm1561 = vweird.f32 %v1554
        %vm1562 = vmor %vm1560, %vm1561
        %v1563 = vsel %vm1562, %v1554, %v1559
        %v1564 = vrsqrt.pop %v1521
        %v1565 = vmul.f32 %v1564, %v1521
        %v1566 = vmul.f32 %v1565, %v1564
        %v1567 = vmul.f32 0.5, %v1566
        %v1568 = vsub.f32 1.5, %v1567
        %v1569 = vmul.f32 %v1564, %v1568
        %vm1570 = vweird.f32 %v1521
        %vm1571 = vweird.f32 %v1564
        %vm1572 = vmor %vm1570, %vm1571
        %v1573 = vsel %vm1572, %v1564, %v1569
        %v1574 = vrsqrt.pop %v1522
        %v1575 = vmul.f32 %v1574, %v1522
        %v1576 = vmul.f32 %v1575, %v1574
        %v1577 = vmul.f32 0.5, %v1576
        %v1578 = vsub.f32 1.5, %v1577
        %v1579 = vmul.f32 %v1574, %v1578
        %vm1580 = vweird.f32 %v1522
        %vm1581 = vweird.f32 %v1574
        %vm1582 = vmor %vm1580, %vm1581
        %v1583 = vsel %vm1582, %v1574, %v1579
        %v1584 = vrsqrt.pop %v1523
        %v1585 = vmul.f32 %v1584, %v1523
        %v1586 = vmul.f32 %v1585, %v1584
        %v1587 = vmul.f32 0.5, %v1586
        %v1588 = vsub.f32 1.5, %v1587
        %v1589 = vmul.f32 %v1584, %v1588
        %vm1590 = vweird.f32 %v1523
        %vm1591 = vweird.f32 %v1584
        %vm1592 = vmor %vm1590, %vm1591
        %v1593 = vsel %vm1592, %v1584, %v1589
        %v1594 = vrsqrt.pop %v1524
        %v1595 = vmul.f32 %v1594, %v1524
        %v1596 = vmul.f32 %v1595, %v1594
        %v1597 = vmul.f32 0.5, %v1596
        %v1598 = vsub.f32 1.5, %v1597
        %v1599 = vmul.f32 %v1594, %v1598
        %vm1600 = vweird.f32 %v1524
        %vm1601 = vweird.f32 %v1594
        %vm1602 = vmor %vm1600, %vm1601
        %v1603 = vsel %vm1602, %v1594, %v1599
        %v1604 = vrsqrt.pop %v1525
        %v1605 = vmul.f32 %v1604, %v1525
        %v1606 = vmul.f32 %v1605, %v1604
        %v1607 = vmul.f32 0.5, %v1606
        %v1608 = vsub.f32 1.5, %v1607
        %v1609 = vmul.f32 %v1604, %v1608
        %vm1610 = vweird.f32 %v1525
        %vm1611 = vweird.f32 %v1604
        %vm1612 = vmor %vm1610, %vm1611
        %v1613 = vsel %vm1612, %v1604, %v1609
        %v1614 = vrsqrt.pop %v1526
        %v1615 = vmul.f32 %v1614, %v1526
        %v1616 = vmul.f32 %v1615, %v1614
        %v1617 = vmul.f32 0.5, %v1616
        %v1618 = vsub.f32 1.5, %v1617
        %v1619 = vmul.f32 %v1614, %v1618
        %vm1620 = vweird.f32 %v1526
        %vm1621 = vweird.f32 %v1614
        %vm1622 = vmor %vm1620, %vm1621
        %v1623 = vsel %vm1622, %v1614, %v1619
        %v1624 = vrsqrt.pop %v1527
        %v1625 = vmul.f32 %v1624, %v1527
        %v1626 = vmul.f32 %v1625, %v1624
        %v1627 = vmul.f32 0.5, %v1626
        %v1628 = vsub.f32 1.5, %v1627
        %v1629 = vmul.f32 %v1624, %v1628
        %vm1630 = vweird.f32 %v1527
        %vm1631 = vweird.f32 %v1624
        %vm1632 = vmor %vm1630, %vm1631
        %v1633 = vsel %vm1632, %v1624, %v1629
        %v1634 = vrsqrt.pop %v1528
        %v1635 = vmul.f32 %v1634, %v1528
        %v1636 = vmul.f32 %v1635, %v1634
        %v1637 = vmul.f32 0.5, %v1636
        %v1638 = vsub.f32 1.5, %v1637
        %v1639 = vmul.f32 %v1634, %v1638
        %vm1640 = vweird.f32 %v1528
        %vm1641 = vweird.f32 %v1634
        %vm1642 = vmor %vm1640, %vm1641
        %v1643 = vsel %vm1642, %v1634, %v1639
        %v1644 = vrsqrt.pop %v1529
        %v1645 = vmul.f32 %v1644, %v1529
        %v1646 = vmul.f32 %v1645, %v1644
        %v1647 = vmul.f32 0.5, %v1646
        %v1648 = vsub.f32 1.5, %v1647
        %v1649 = vmul.f32 %v1644, %v1648
        %vm1650 = vweird.f32 %v1529
        %vm1651 = vweird.f32 %v1644
        %vm1652 = vmor %vm1650, %vm1651
        %v1653 = vsel %vm1652, %v1644, %v1649
        %v1654 = vrsqrt.pop %v1530
        %v1655 = vmul.f32 %v1654, %v1530
        %v1656 = vmul.f32 %v1655, %v1654
        %v1657 = vmul.f32 0.5, %v1656
        %v1658 = vsub.f32 1.5, %v1657
        %v1659 = vmul.f32 %v1654, %v1658
        %vm1660 = vweird.f32 %v1530
        %vm1661 = vweird.f32 %v1654
        %vm1662 = vmor %vm1660, %vm1661
        %v1663 = vsel %vm1662, %v1654, %v1659
        %v1664 = vrsqrt.pop %v1531
        %v1665 = vmul.f32 %v1664, %v1531
        %v1666 = vmul.f32 %v1665, %v1664
        %v1667 = vmul.f32 0.5, %v1666
        %v1668 = vsub.f32 1.5, %v1667
        %v1669 = vmul.f32 %v1664, %v1668
        %vm1670 = vweird.f32 %v1531
        %vm1671 = vweird.f32 %v1664
        %vm1672 = vmor %vm1670, %vm1671
        %v1673 = vsel %vm1672, %v1664, %v1669
        %v1674 = vrsqrt.pop %v1532
        %v1675 = vmul.f32 %v1674, %v1532
        %v1676 = vmul.f32 %v1675, %v1674
        %v1677 = vmul.f32 0.5, %v1676
        %v1678 = vsub.f32 1.5, %v1677
        %v1679 = vmul.f32 %v1674, %v1678
        %vm1680 = vweird.f32 %v1532
        %vm1681 = vweird.f32 %v1674
        %vm1682 = vmor %vm1680, %vm1681
        %v1683 = vsel %vm1682, %v1674, %v1679
        %v1684 = vrsqrt.pop %v1533
        %v1685 = vmul.f32 %v1684, %v1533
        %v1686 = vmul.f32 %v1685, %v1684
        %v1687 = vmul.f32 0.5, %v1686
        %v1688 = vsub.f32 1.5, %v1687
        %v1689 = vmul.f32 %v1684, %v1688
        %vm1690 = vweird.f32 %v1533
        %vm1691 = vweird.f32 %v1684
        %vm1692 = vmor %vm1690, %vm1691
        %v1693 = vsel %vm1692, %v1684, %v1689
        %v1694 = vmul.f32 %v1422, %v1543
        %v1695 = vmul.f32 %v1423, %v1553
        %v1696 = vmul.f32 %v1424, %v1563
        %v1697 = vmul.f32 %v1425, %v1573
        %v1698 = vmul.f32 %v1426, %v1583
        %v1699 = vmul.f32 %v1427, %v1593
        %v1700 = vmul.f32 %v1428, %v1603
        %v1701 = vmul.f32 %v1429, %v1613
        %v1702 = vmul.f32 %v1430, %v1623
        %v1703 = vmul.f32 %v1431, %v1633
        %v1704 = vmul.f32 %v1432, %v1643
        %v1705 = vmul.f32 %v1433, %v1653
        %v1706 = vmul.f32 %v1434, %v1663
        %v1707 = vmul.f32 %v1435, %v1673
        %v1708 = vmul.f32 %v1436, %v1683
        %v1709 = vmul.f32 %v1437, %v1693
        %v1711 = vperm.slane %v1356, 0
        %v1713 = vmul.f32 %v1694, %v1711
        %v1714 = vmul.f32 %v1695, %v1711
        %v1715 = vmul.f32 %v1696, %v1711
        %v1716 = vmul.f32 %v1697, %v1711
        %v1717 = vmul.f32 %v1698, %v1711
        %v1718 = vmul.f32 %v1699, %v1711
        %v1719 = vmul.f32 %v1700, %v1711
        %v1720 = vmul.f32 %v1701, %v1711
        %v1721 = vmul.f32 %v1702, %v1711
        %v1722 = vmul.f32 %v1703, %v1711
        %v1723 = vmul.f32 %v1704, %v1711
        %v1724 = vmul.f32 %v1705, %v1711
        %v1725 = vmul.f32 %v1706, %v1711
        %v1726 = vmul.f32 %v1707, %v1711
        %v1727 = vmul.f32 %v1708, %v1711
        %v1728 = vmul.f32 %v1709, %v1711
        %v1730 = vperm.slane %v1357, 0
        %v1732 = vadd.f32 %v1713, %v1730
        %v1733 = vadd.f32 %v1714, %v1730
        %v1734 = vadd.f32 %v1715, %v1730
        %v1735 = vadd.f32 %v1716, %v1730
        %v1736 = vadd.f32 %v1717, %v1730
        %v1737 = vadd.f32 %v1718, %v1730
        %v1738 = vadd.f32 %v1719, %v1730
        %v1739 = vadd.f32 %v1720, %v1730
        %v1740 = vadd.f32 %v1721, %v1730
        %v1741 = vadd.f32 %v1722, %v1730
        %v1742 = vadd.f32 %v1723, %v1730
        %v1743 = vadd.f32 %v1724, %v1730
        %v1744 = vadd.f32 %v1725, %v1730
        %v1745 = vadd.f32 %v1726, %v1730
        %v1746 = vadd.f32 %v1727, %v1730
        %v1747 = vadd.f32 %v1728, %v1730
        %v1748 = vld [vmem:[%s9] sm:$0xff]
        %v1749 = vld [vmem:[%s9 + $0x8] sm:$0xff]
        %v1750 = vld [vmem:[%s9 + $0x10] sm:$0xff]
        %v1751 = vld [vmem:[%s9 + $0x18] sm:$0xff]
        %v1752 = vld [vmem:[%s10] sm:$0x1]
        %v1754 = vperm.slane %v1752, 0
        %v1757 = vsel %vm921, %v1732, 0
        %v1760 = vsel %vm921, %v1733, 0
        %v1763 = vsel %vm921, %v1734, 0
        %v1766 = vsel %vm921, %v1735, 0
        %v1769 = vsel %vm921, %v1736, 0
        %v1772 = vsel %vm921, %v1737, 0
        %v1775 = vsel %vm921, %v1738, 0
        %v1778 = vsel %vm921, %v1739, 0
        %v1781 = vsel %vm921, %v1740, 0
        %v1784 = vsel %vm921, %v1741, 0
        %v1787 = vsel %vm921, %v1742, 0
        %v1790 = vsel %vm921, %v1743, 0
        %v1793 = vsel %vm921, %v1744, 0
        %v1796 = vsel %vm921, %v1745, 0
        %v1799 = vsel %vm921, %v1746, 0
        %v1802 = vsel %vm921, %v1747, 0
        %1804 = vmatpush.msra.mxu0 0.0
        %1805 = vmatpush.msra.mxu0 0.0
        %1806 = vmatpush.msra.mxu0 0.0
        %1807 = vmatpush.msra.mxu0 0.0
        %1808 = vmatpush.msra.mxu0 0.0
        %1809 = vmatpush.msra.mxu0 0.0
        %1810 = vmatpush.msra.mxu0 0.0
        %1811 = vmatpush.msra.mxu0 0.0
        %1812 = vmatpush.msra.mxu0 0.0
        %1813 = vmatpush.msra.mxu0 0.0
        %1814 = vmatpush.msra.mxu0 0.0
        %1815 = vmatpush.msra.mxu0 0.0
        %1816 = vmatpush.msra.mxu0 %v1751
        %1817 = vmatpush.msra.mxu0 %v1750
        %1818 = vmatpush.msra.mxu0 %v1749
        %1819 = vmatpush.msra.mxu0 %v1748
        %1820 = vmatmul.f32.gmra.mxu0 %v1757
        %v1821 = vpop.f32.mrf.mxu0
        %v1822 = vadd.f32 %v1754, %v1821
        %1823 = vmatmul.f32.gmra.mxu0 %v1760
        %v1824 = vpop.f32.mrf.mxu0
        %v1825 = vadd.f32 %v1754, %v1824
        %1826 = vmatmul.f32.gmra.mxu0 %v1763
        %v1827 = vpop.f32.mrf.mxu0
        %v1828 = vadd.f32 %v1754, %v1827
        %1829 = vmatmul.f32.gmra.mxu0 %v1766
        %v1830 = vpop.f32.mrf.mxu0
        %v1831 = vadd.f32 %v1754, %v1830
        %1832 = vmatmul.f32.gmra.mxu0 %v1769
        %v1833 = vpop.f32.mrf.mxu0
        %v1834 = vadd.f32 %v1754, %v1833
        %1835 = vmatmul.f32.gmra.mxu0 %v1772
        %v1836 = vpop.f32.mrf.mxu0
        %v1837 = vadd.f32 %v1754, %v1836
        %1838 = vmatmul.f32.gmra.mxu0 %v1775
        %v1839 = vpop.f32.mrf.mxu0
        %v1840 = vadd.f32 %v1754, %v1839
        %1841 = vmatmul.f32.gmra.mxu0 %v1778
        %v1842 = vpop.f32.mrf.mxu0
        %v1843 = vadd.f32 %v1754, %v1842
        %1844 = vmatmul.f32.gmra.mxu0 %v1781
        %v1845 = vpop.f32.mrf.mxu0
        %v1846 = vadd.f32 %v1754, %v1845
        %1847 = vmatmul.f32.gmra.mxu0 %v1784
        %v1848 = vpop.f32.mrf.mxu0
        %v1849 = vadd.f32 %v1754, %v1848
        %1850 = vmatmul.f32.gmra.mxu0 %v1787
        %v1851 = vpop.f32.mrf.mxu0
        %v1852 = vadd.f32 %v1754, %v1851
        %1853 = vmatmul.f32.gmra.mxu0 %v1790
        %v1854 = vpop.f32.mrf.mxu0
        %v1855 = vadd.f32 %v1754, %v1854
        %1856 = vmatmul.f32.gmra.mxu0 %v1793
        %v1857 = vpop.f32.mrf.mxu0
        %v1858 = vadd.f32 %v1754, %v1857
        %1859 = vmatmul.f32.gmra.mxu0 %v1796
        %v1860 = vpop.f32.mrf.mxu0
        %v1861 = vadd.f32 %v1754, %v1860
        %1862 = vmatmul.f32.gmra.mxu0 %v1799
        %v1863 = vpop.f32.mrf.mxu0
        %v1864 = vadd.f32 %v1754, %v1863
        %1865 = vmatmul.f32.gmra.mxu0 %v1802
        %v1866 = vpop.f32.mrf.mxu0
        %v1867 = vadd.f32 %v1754, %v1866
        %1868 = vdwg.mxu0
        %v1869 = vmax.f32 %v1822, 0.0
        %v1870 = vmax.f32 %v1825, 0.0
        %v1871 = vmax.f32 %v1828, 0.0
        %v1872 = vmax.f32 %v1831, 0.0
        %v1873 = vmax.f32 %v1834, 0.0
        %v1874 = vmax.f32 %v1837, 0.0
        %v1875 = vmax.f32 %v1840, 0.0
        %v1876 = vmax.f32 %v1843, 0.0
        %v1877 = vmax.f32 %v1846, 0.0
        %v1878 = vmax.f32 %v1849, 0.0
        %v1879 = vmax.f32 %v1852, 0.0
        %v1880 = vmax.f32 %v1855, 0.0
        %v1881 = vmax.f32 %v1858, 0.0
        %v1882 = vmax.f32 %v1861, 0.0
        %v1883 = vmax.f32 %v1864, 0.0
        %v1884 = vmax.f32 %v1867, 0.0
        %v1885 = vld [vmem:[%s11] sm:$0xff]
        %v1886 = vld [vmem:[%s11 + $0x8] sm:$0xff]
        %v1887 = vld [vmem:[%s11 + $0x10] sm:$0xff]
        %v1888 = vld [vmem:[%s11 + $0x18] sm:$0xff]
        %v1889 = vld [vmem:[%s12] sm:$0x1]
        %v1891 = vperm.slane %v1889, 0
        %v1894 = vsel %vm921, %v1869, 0
        %v1897 = vsel %vm921, %v1870, 0
        %v1900 = vsel %vm921, %v1871, 0
        %v1903 = vsel %vm921, %v1872, 0
        %v1906 = vsel %vm921, %v1873, 0
        %v1909 = vsel %vm921, %v1874, 0
        %v1912 = vsel %vm921, %v1875, 0
        %v1915 = vsel %vm921, %v1876, 0
        %v1918 = vsel %vm921, %v1877, 0
        %v1921 = vsel %vm921, %v1878, 0
        %v1924 = vsel %vm921, %v1879, 0
        %v1927 = vsel %vm921, %v1880, 0
        %v1930 = vsel %vm921, %v1881, 0
        %v1933 = vsel %vm921, %v1882, 0
        %v1936 = vsel %vm921, %v1883, 0
        %v1939 = vsel %vm921, %v1884, 0
        %1941 = vmatpush.msra.mxu0 0.0
        %1942 = vmatpush.msra.mxu0 0.0
        %1943 = vmatpush.msra.mxu0 0.0
        %1944 = vmatpush.msra.mxu0 0.0
        %1945 = vmatpush.msra.mxu0 0.0
        %1946 = vmatpush.msra.mxu0 0.0
        %1947 = vmatpush.msra.mxu0 0.0
        %1948 = vmatpush.msra.mxu0 0.0
        %1949 = vmatpush.msra.mxu0 0.0
        %1950 = vmatpush.msra.mxu0 0.0
        %1951 = vmatpush.msra.mxu0 0.0
        %1952 = vmatpush.msra.mxu0 0.0
        %1953 = vmatpush.msra.mxu0 %v1888
        %1954 = vmatpush.msra.mxu0 %v1887
        %1955 = vmatpush.msra.mxu0 %v1886
        %1956 = vmatpush.msra.mxu0 %v1885
        %1957 = vmatmul.f32.gmra.mxu0 %v1894
        %v1958 = vpop.f32.mrf.mxu0
        %v1959 = vadd.f32 %v1891, %v1958
        %1960 = vmatmul.f32.gmra.mxu0 %v1897
        %v1961 = vpop.f32.mrf.mxu0
        %v1962 = vadd.f32 %v1891, %v1961
        %1963 = vmatmul.f32.gmra.mxu0 %v1900
        %v1964 = vpop.f32.mrf.mxu0
        %v1965 = vadd.f32 %v1891, %v1964
        %1966 = vmatmul.f32.gmra.mxu0 %v1903
        %v1967 = vpop.f32.mrf.mxu0
        %v1968 = vadd.f32 %v1891, %v1967
        %1969 = vmatmul.f32.gmra.mxu0 %v1906
        %v1970 = vpop.f32.mrf.mxu0
        %v1971 = vadd.f32 %v1891, %v1970
        %1972 = vmatmul.f32.gmra.mxu0 %v1909
        %v1973 = vpop.f32.mrf.mxu0
        %v1974 = vadd.f32 %v1891, %v1973
        %1975 = vmatmul.f32.gmra.mxu0 %v1912
        %v1976 = vpop.f32.mrf.mxu0
        %v1977 = vadd.f32 %v1891, %v1976
        %1978 = vmatmul.f32.gmra.mxu0 %v1915
        %v1979 = vpop.f32.mrf.mxu0
        %v1980 = vadd.f32 %v1891, %v1979
        %1981 = vmatmul.f32.gmra.mxu0 %v1918
        %v1982 = vpop.f32.mrf.mxu0
        %v1983 = vadd.f32 %v1891, %v1982
        %1984 = vmatmul.f32.gmra.mxu0 %v1921
        %v1985 = vpop.f32.mrf.mxu0
        %v1986 = vadd.f32 %v1891, %v1985
        %1987 = vmatmul.f32.gmra.mxu0 %v1924
        %v1988 = vpop.f32.mrf.mxu0
        %v1989 = vadd.f32 %v1891, %v1988
        %1990 = vmatmul.f32.gmra.mxu0 %v1927
        %v1991 = vpop.f32.mrf.mxu0
        %v1992 = vadd.f32 %v1891, %v1991
        %1993 = vmatmul.f32.gmra.mxu0 %v1930
        %v1994 = vpop.f32.mrf.mxu0
        %v1995 = vadd.f32 %v1891, %v1994
        %1996 = vmatmul.f32.gmra.mxu0 %v1933
        %v1997 = vpop.f32.mrf.mxu0
        %v1998 = vadd.f32 %v1891, %v1997
        %1999 = vmatmul.f32.gmra.mxu0 %v1936
        %v2000 = vpop.f32.mrf.mxu0
        %v2001 = vadd.f32 %v1891, %v2000
        %2002 = vmatmul.f32.gmra.mxu0 %v1939
        %v2003 = vpop.f32.mrf.mxu0
        %v2004 = vadd.f32 %v1891, %v2003
        %2005 = vdwg.mxu0
        %v2006 = vld [vmem:[%s1] sm:$0xf]
        %v2007 = vld [vmem:[%s13] sm:$0x1]
        %v2008 = vld [vmem:[#allocation5] sm:$0x1]
        %vm2009 = vcmask 257024
        %v2010 = vsel %vm2009, %v2006, 0.0
        %2011 = vadd.xlane.f32.xlu0 %v2010
        %v2012 = vpop.xlane.xlu0 %2011
        %v2013 = vmul.f32 %v2012, %v952
        %v2014 = vsub.f32 %v2006, %v2013
        %v2015 = vmul.f32 %v2014, %v2014
        %v2016 = vsel %vm2009, %v2015, 0.0
        %2017 = vadd.xlane.f32.xlu0 %v2016
        %v2018 = vpop.xlane.xlu0 %2017
        %v2019 = vmul.f32 %v2018, %v952
        %v2020 = vadd.f32 %v2019, 1e-05
        %v2021 = vrsqrt.pop %v2020
        %v2022 = vmul.f32 %v2021, %v2020
        %v2023 = vmul.f32 %v2022, %v2021
        %v2024 = vmul.f32 0.5, %v2023
        %v2025 = vsub.f32 1.5, %v2024
        %v2026 = vmul.f32 %v2021, %v2025
        %vm2027 = vweird.f32 %v2020
        %vm2028 = vweird.f32 %v2021
        %vm2029 = vmor %vm2027, %vm2028
        %v2030 = vsel %vm2029, %v2021, %v2026
        %v2031 = vmul.f32 %v2014, %v2030
        %v2033 = vperm.slane %v2007, 0
        %v2035 = vmul.f32 %v2031, %v2033
        %v2037 = vperm.slane %v2008, 0
        %v2039 = vadd.f32 %v2035, %v2037
        %v2040 = vld [vmem:[%s15] sm:$0xff]
        %v2041 = vld [vmem:[%s15 + $0x8] sm:$0xff]
        %v2042 = vld [vmem:[%s15 + $0x10] sm:$0xff]
        %v2043 = vld [vmem:[%s15 + $0x18] sm:$0xff]
        %v2045 = vsel %vm921, %v2039, 0
        %2047 = vmatpush.msra.mxu0 0.0
        %2048 = vmatpush.msra.mxu0 0.0
        %2049 = vmatpush.msra.mxu0 0.0
        %2050 = vmatpush.msra.mxu0 0.0
        %2051 = vmatpush.msra.mxu0 0.0
        %2052 = vmatpush.msra.mxu0 0.0
        %2053 = vmatpush.msra.mxu0 0.0
        %2054 = vmatpush.msra.mxu0 0.0
        %2055 = vmatpush.msra.mxu0 0.0
        %2056 = vmatpush.msra.mxu0 0.0
        %2057 = vmatpush.msra.mxu0 0.0
        %2058 = vmatpush.msra.mxu0 0.0
        %2059 = vmatpush.msra.mxu0 %v2043
        %2060 = vmatpush.msra.mxu0 %v2042
        %2061 = vmatpush.msra.mxu0 %v2041
        %2062 = vmatpush.msra.mxu0 %v2040
        %2063 = vmatmul.f32.gmra.mxu0 %v2045
        %v2064 = vpop.f32.mrf.mxu0
        %v2065 = vadd.f32 0.0, %v2064
        %2066 = vdwg.mxu0
        %v2068 = vsel %vm921, %v2065, 0
        %v2071 = vsel %vm921, %v1959, 0
        %v2074 = vsel %vm921, %v1962, 0
        %v2077 = vsel %vm921, %v1965, 0
        %v2080 = vsel %vm921, %v1968, 0
        %v2083 = vsel %vm921, %v1971, 0
        %v2086 = vsel %vm921, %v1974, 0
        %v2089 = vsel %vm921, %v1977, 0
        %v2092 = vsel %vm921, %v1980, 0
        %2094 = vmatpush.xpose.msra.mxu0 0.0
        %2095 = vmatpush.xpose.msra.mxu0 0.0
        %2096 = vmatpush.xpose.msra.mxu0 0.0
        %2097 = vmatpush.xpose.msra.mxu0 0.0
        %2098 = vmatpush.xpose.msra.mxu0 0.0
        %2099 = vmatpush.xpose.msra.mxu0 0.0
        %2100 = vmatpush.xpose.msra.mxu0 0.0
        %2101 = vmatpush.xpose.msra.mxu0 0.0
        %2102 = vmatpush.xpose.msra.mxu0 %v2092
        %2103 = vmatpush.xpose.msra.mxu0 %v2089
        %2104 = vmatpush.xpose.msra.mxu0 %v2086
        %2105 = vmatpush.xpose.msra.mxu0 %v2083
        %2106 = vmatpush.xpose.msra.mxu0 %v2080
        %2107 = vmatpush.xpose.msra.mxu0 %v2077
        %2108 = vmatpush.xpose.msra.mxu0 %v2074
        %2109 = vmatpush.xpose.msra.mxu0 %v2071
        %2110 = vmatmul.f32.gmra.mxu0 %v2068
        %v2111 = vpop.f32.mrf.mxu0
        %v2112 = vadd.f32 0.0, %v2111
        %2113 = vdwg.mxu0
        %v2114 = vmul.f32 %v2112, 0.17677669
        %vm2115 = vcmask 519168
        %v2116 = vsel %vm2115, %v2114, -inf
        %v2117 = vrot.slane %v2116, 4
        %v2118 = vmax.f32 %v2116, %v2117
        %v2119 = vrot.slane %v2118, 2
        %v2120 = vmax.f32 %v2118, %v2119
        %v2121 = vrot.slane %v2120, 1
        %v2122 = vmax.f32 %v2120, %v2121
        %v2123 = vsub.f32 %v2114, %v2122
        %v2124 = vmul.f32 %v2123, 1.442695
        %v2125 = vpow.pop %v2124
        %v2126 = vsel %vm2115, %v2125, 0.0
        %v2127 = vrot.slane %v2126, 4
        %v2128 = vadd.f32 %v2126, %v2127
        %v2129 = vrot.slane %v2128, 2
        %v2130 = vadd.f32 %v2128, %v2129
        %v2131 = vrot.slane %v2130, 1
        %v2132 = vadd.f32 %v2130, %v2131
        %v2133 = vrcp.pop %v2132
        %v2134 = vmul.f32 %v2125, %v2133
        %v2135 = vadd.f32 %v2134, 1e-08
        %v2136 = vsel %vm2115, %v2135, 0.0
        %2137 = vadd.xlane.f32.xlu0 %v2136
        %v2138 = vpop.xlane.xlu0 %2137
        %v2139 = vrcp.pop %v2138
        %v2140 = vmul.f32 %v2135, %v2139
        %vm2141 = vcmask 523264
        %v2143 = vsel %vm2141, %v2140, 0
        %2145 = vmatpush.msra.mxu0 0.0
        %2146 = vmatpush.msra.mxu0 0.0
        %2147 = vmatpush.msra.mxu0 0.0
        %2148 = vmatpush.msra.mxu0 0.0
        %2149 = vmatpush.msra.mxu0 0.0
        %2150 = vmatpush.msra.mxu0 0.0
        %2151 = vmatpush.msra.mxu0 0.0
        %2152 = vmatpush.msra.mxu0 0.0
        %2153 = vmatpush.msra.mxu0 %v2004
        %2154 = vmatpush.msra.mxu0 %v2001
        %2155 = vmatpush.msra.mxu0 %v1998
        %2156 = vmatpush.msra.mxu0 %v1995
        %2157 = vmatpush.msra.mxu0 %v1992
        %2158 = vmatpush.msra.mxu0 %v1989
        %2159 = vmatpush.msra.mxu0 %v1986
        %2160 = vmatpush.msra.mxu0 %v1983
        %2161 = vmatmul.f32.gmra.mxu0 %v2143
        %v2162 = vpop.f32.mrf.mxu0
        %v2163 = vadd.f32 0.0, %v2162
        %2164 = vdwg.mxu0
        %v2165 = vld [vmem:[%s16] sm:$0xff]
        %v2166 = vld [vmem:[%s16 + $0x8] sm:$0xff]
        %v2167 = vld [vmem:[%s16 + $0x10] sm:$0xff]
        %v2168 = vld [vmem:[%s16 + $0x18] sm:$0xff]
        %v2169 = vld [vmem:[#allocation7] sm:$0x1]
        %v2171 = vperm.slane %v2169, 0
        %v2174 = vsel %vm921, %v2163, 0
        %2176 = vmatpush.msra.mxu0 0.0
        %2177 = vmatpush.msra.mxu0 0.0
        %2178 = vmatpush.msra.mxu0 0.0
        %2179 = vmatpush.msra.mxu0 0.0
        %2180 = vmatpush.msra.mxu0 0.0
        %2181 = vmatpush.msra.mxu0 0.0
        %2182 = vmatpush.msra.mxu0 0.0
        %2183 = vmatpush.msra.mxu0 0.0
        %2184 = vmatpush.msra.mxu0 0.0
        %2185 = vmatpush.msra.mxu0 0.0
        %2186 = vmatpush.msra.mxu0 0.0
        %2187 = vmatpush.msra.mxu0 0.0
        %2188 = vmatpush.msra.mxu0 %v2168
        %2189 = vmatpush.msra.mxu0 %v2167
        %2190 = vmatpush.msra.mxu0 %v2166
        %2191 = vmatpush.msra.mxu0 %v2165
        %2192 = vmatmul.f32.gmra.mxu0 %v2174
        %v2193 = vpop.f32.mrf.mxu0
        %v2194 = vadd.f32 %v2171, %v2193
        %2195 = vdwg.mxu0
        %v2196 = vld [vmem:[%s17] sm:$0xff]
        %v2197 = vld [vmem:[%s17 + $0x8] sm:$0xff]
        %v2198 = vld [vmem:[%s17 + $0x10] sm:$0xff]
        %v2199 = vld [vmem:[%s17 + $0x18] sm:$0xff]
        %v2200 = vld [vmem:[#allocation8] sm:$0x1]
        %v2202 = vperm.slane %v2200, 0
        %v2205 = vsel %vm921, %v2006, 0
        %2207 = vmatpush.msra.mxu0 0.0
        %2208 = vmatpush.msra.mxu0 0.0
        %2209 = vmatpush.msra.mxu0 0.0
        %2210 = vmatpush.msra.mxu0 0.0
        %2211 = vmatpush.msra.mxu0 0.0
        %2212 = vmatpush.msra.mxu0 0.0
        %2213 = vmatpush.msra.mxu0 0.0
        %2214 = vmatpush.msra.mxu0 0.0
        %2215 = vmatpush.msra.mxu0 0.0
        %2216 = vmatpush.msra.mxu0 0.0
        %2217 = vmatpush.msra.mxu0 0.0
        %2218 = vmatpush.msra.mxu0 0.0
        %2219 = vmatpush.msra.mxu0 %v2199
        %2220 = vmatpush.msra.mxu0 %v2198
        %2221 = vmatpush.msra.mxu0 %v2197
        %2222 = vmatpush.msra.mxu0 %v2196
        %2223 = vmatmul.f32.gmra.mxu0 %v2205
        %v2224 = vpop.f32.mrf.mxu0
        %v2225 = vadd.f32 %v2202, %v2224
        %2226 = vdwg.mxu0
        %v2227 = vadd.f32 %v2194, %v2225
        %v2228 = vsub.f32 0.0, %v2227
        %v2229 = vmul.f32 %v2228, 1.442695
        %v2230 = vpow.pop %v2229
        %v2231 = vadd.f32 %v2230, 1.0
        %v2232 = vrcp.pop %v2231
        %v2233 = vmul.f32 %v2231, %v2232
        %v2234 = vsub.f32 1.0, %v2233
        %v2235 = vmul.f32 %v2232, %v2234
        %v2236 = vadd.f32 %v2232, %v2235
        %vm2237 = vweird.f32 %v2231
        %vm2238 = vweird.f32 %v2232
        %vm2239 = vmor %vm2237, %vm2238
        %v2240 = vsel %vm2239, %v2232, %v2236
        %v2241 = vand.u32 2147483647, %v2231
        %vm2242 = vcmp.eq.f32.partialorder %v2241, 8.507059e+37
        %v2243 = vand.u32 %v2231, 2147483648
        %v2244 = vor.u32 1.1754944e-38, %v2243
        %v2245 = vsel %vm2242, %v2244, %v2240
        %v2246 = vmul.f32 1.0, %v2245
        %2248 = vrot.lane.b32.xlu0 %v2225, 64
        %v2249 = vpop.permute.xlu0 %2248
        %v2251 = vmul.f32 %v2246, %v2249
        %2253 = vrot.lane.b32.xlu0 %v2251, 64
        %v2254 = vpop.permute.xlu0 %2253
        %v2256 = vadd.f32 %v2194, %v2254
        %v2257 = vtanh.pop %v2256
        %v2258 = vsub.f32 1.0, %v2246
        %2260 = vrot.lane.b32.xlu0 %v2257, 96
        %v2261 = vpop.permute.xlu0 %2260
        %v2263 = vmul.f32 %v2258, %v2261
        %2264 = vrot.lane.b32.xlu0 %v2006, 32
        %v2265 = vpop.permute.xlu0 %2264
        %v2267 = vmul.f32 %v2246, %v2265
        %v2268 = vadd.f32 %v2263, %v2267
        %v2269 = vld [vmem:[#allocation10] sm:$0x1]
        %v2270 = vld [vmem:[#allocation11] sm:$0x1]
        %2272 = vrot.lane.b32.xlu0 %v2268, 96
        %v2273 = vpop.permute.xlu0 %2272
        %v2275 = vsel %vm2009, %v2273, 0.0
        %2276 = vadd.xlane.f32.xlu0 %v2275
        %v2277 = vpop.xlane.xlu0 %2276
        %v2278 = vmul.f32 %v2277, %v952
        %v2279 = vsub.f32 %v2268, %v2278
        %v2280 = vmul.f32 %v2279, %v2279
        %2282 = vrot.lane.b32.xlu0 %v2280, 96
        %v2283 = vpop.permute.xlu0 %2282
        %v2285 = vsel %vm2009, %v2283, 0.0
        %2286 = vadd.xlane.f32.xlu0 %v2285
        %v2287 = vpop.xlane.xlu0 %2286
        %v2288 = vmul.f32 %v2287, %v952
        %v2289 = vadd.f32 %v2288, 1e-05
        %v2290 = vrsqrt.pop %v2289
        %v2291 = vmul.f32 %v2290, %v2289
        %v2292 = vmul.f32 %v2291, %v2290
        %v2293 = vmul.f32 0.5, %v2292
        %v2294 = vsub.f32 1.5, %v2293
        %v2295 = vmul.f32 %v2290, %v2294
        %vm2296 = vweird.f32 %v2289
        %vm2297 = vweird.f32 %v2290
        %vm2298 = vmor %vm2296, %vm2297
        %v2299 = vsel %vm2298, %v2290, %v2295
        %v2300 = vmul.f32 %v2279, %v2299
        %v2302 = vperm.slane %v2269, 0
        %2303 = vrot.lane.b32.xlu0 %v2302, 32
        %v2304 = vpop.permute.xlu0 %2303
        %v2306 = vmul.f32 %v2300, %v2304
        %v2308 = vperm.slane %v2270, 0
        %2309 = vrot.lane.b32.xlu0 %v2308, 32
        %v2310 = vpop.permute.xlu0 %2309
        %v2312 = vadd.f32 %v2306, %v2310
        %v2313 = vld [vmem:[#allocation13] sm:$0xff]
        %v2314 = vld [vmem:[#allocation13 + $0x8] sm:$0xff]
        %v2315 = vld [vmem:[#allocation13 + $0x10] sm:$0xff]
        %v2316 = vld [vmem:[#allocation13 + $0x18] sm:$0xff]
        %v2317 = vld [vmem:[%s23] sm:$0x1]
        %v2319 = vperm.slane %v2317, 0
        %2322 = vrot.lane.b32.xlu0 %v2312, 96
        %v2323 = vpop.permute.xlu0 %2322
        %v2324 = vsel %vm921, %v2323, 0
        %2326 = vmatpush.msra.mxu0 0.0
        %2327 = vmatpush.msra.mxu0 0.0
        %2328 = vmatpush.msra.mxu0 0.0
        %2329 = vmatpush.msra.mxu0 0.0
        %2330 = vmatpush.msra.mxu0 0.0
        %2331 = vmatpush.msra.mxu0 0.0
        %2332 = vmatpush.msra.mxu0 0.0
        %2333 = vmatpush.msra.mxu0 0.0
        %2334 = vmatpush.msra.mxu0 0.0
        %2335 = vmatpush.msra.mxu0 0.0
        %2336 = vmatpush.msra.mxu0 0.0
        %2337 = vmatpush.msra.mxu0 0.0
        %2338 = vmatpush.msra.mxu0 %v2316
        %2339 = vmatpush.msra.mxu0 %v2315
        %2340 = vmatpush.msra.mxu0 %v2314
        %2341 = vmatpush.msra.mxu0 %v2313
        %2342 = vmatmul.f32.gmra.mxu0 %v2324
        %v2343 = vpop.f32.mrf.mxu0
        %v2344 = vadd.f32 %v2319, %v2343
        %2345 = vdwg.mxu0
        %v2346 = vmax.f32 %v2344, 0.0
        %v2347 = vld [vmem:[#allocation14] sm:$0xff]
        %v2348 = vld [vmem:[#allocation14 + $0x8] sm:$0xff]
        %v2349 = vld [vmem:[#allocation14 + $0x10] sm:$0xff]
        %v2350 = vld [vmem:[#allocation14 + $0x18] sm:$0xff]
        %v2352 = vsel %vm921, %v2346, 0
        %2354 = vmatpush.msra.mxu0 0.0
        %2355 = vmatpush.msra.mxu0 0.0
        %2356 = vmatpush.msra.mxu0 0.0
        %2357 = vmatpush.msra.mxu0 0.0
        %2358 = vmatpush.msra.mxu0 0.0
        %2359 = vmatpush.msra.mxu0 0.0
        %2360 = vmatpush.msra.mxu0 0.0
        %2361 = vmatpush.msra.mxu0 0.0
        %2362 = vmatpush.msra.mxu0 0.0
        %2363 = vmatpush.msra.mxu0 0.0
        %2364 = vmatpush.msra.mxu0 0.0
        %2365 = vmatpush.msra.mxu0 0.0
        %2366 = vmatpush.msra.mxu0 %v2350
        %2367 = vmatpush.msra.mxu0 %v2349
        %2368 = vmatpush.msra.mxu0 %v2348
        %2369 = vmatpush.msra.mxu0 %v2347
        %2370 = vmatmul.f32.gmra.mxu0 %v2352
        %v2371 = vpop.f32.mrf.mxu0
        %v2372 = vadd.f32 0.0, %v2371
        %2373 = vdwg.mxu0
        %2375 = vrot.lane.b32.xlu0 %v2372, 32
        %v2376 = vpop.permute.xlu0 %2375
        %v2378 = vadd.f32 %v2268, %v2376
        %v2379 = vld [vmem:[%s25] sm:$0x1]
        %v2381 = vperm.slane %v2379, 0
        %2382 = vrot.lane.b32.xlu0 %v2381, 32
        %v2383 = vpop.permute.xlu0 %2382
        %v2385 = vadd.f32 %v2378, %v2383
        %2387 = vrot.lane.b32.xlu0 %v2385, 96
        %v2388 = vpop.permute.xlu0 %2387
        %v2390 = vsel %vm2009, %v2388, 0.0
        %2391 = vadd.xlane.f32.xlu0 %v2390
        %v2392 = vpop.xlane.xlu0 %2391
        %v2393 = vmul.f32 %v2392, %v952
        %v2394 = vsub.f32 %v2385, %v2393
        %v2395 = vmul.f32 %v2394, %v2394
        %2397 = vrot.lane.b32.xlu0 %v2395, 96
        %v2398 = vpop.permute.xlu0 %2397
        %v2400 = vsel %vm2009, %v2398, 0.0
        %2401 = vadd.xlane.f32.xlu0 %v2400
        %v2402 = vpop.xlane.xlu0 %2401
        %v2403 = vmul.f32 %v2402, %v952
        %v2404 = vadd.f32 %v2403, 1e-05
        %v2405 = vrsqrt.pop %v2404
        %v2406 = vmul.f32 %v2405, %v2404
        %v2407 = vmul.f32 %v2406, %v2405
        %v2408 = vmul.f32 0.5, %v2407
        %v2409 = vsub.f32 1.5, %v2408
        %v2410 = vmul.f32 %v2405, %v2409
        %vm2411 = vweird.f32 %v2404
        %vm2412 = vweird.f32 %v2405
        %vm2413 = vmor %vm2411, %vm2412
        %v2414 = vsel %vm2413, %v2405, %v2410
        %v2415 = vmul.f32 %v2394, %v2414
        %2416 = vrot.lane.b32.xlu0 %v2033, 32
        %v2417 = vpop.permute.xlu0 %2416
        %v2419 = vmul.f32 %v2415, %v2417
        %2420 = vrot.lane.b32.xlu0 %v2037, 32
        %v2421 = vpop.permute.xlu0 %2420
        %v2423 = vadd.f32 %v2419, %v2421
        %2425 = vrot.lane.b32.xlu0 %v2423, 96
        %v2426 = vpop.permute.xlu0 %2425
        %v2427 = vsel %vm921, %v2426, 0
        %2429 = vmatpush.msra.mxu0 0.0
        %2430 = vmatpush.msra.mxu0 0.0
        %2431 = vmatpush.msra.mxu0 0.0
        %2432 = vmatpush.msra.mxu0 0.0
        %2433 = vmatpush.msra.mxu0 0.0
        %2434 = vmatpush.msra.mxu0 0.0
        %2435 = vmatpush.msra.mxu0 0.0
        %2436 = vmatpush.msra.mxu0 0.0
        %2437 = vmatpush.msra.mxu0 0.0
        %2438 = vmatpush.msra.mxu0 0.0
        %2439 = vmatpush.msra.mxu0 0.0
        %2440 = vmatpush.msra.mxu0 0.0
        %2441 = vmatpush.msra.mxu0 %v2043
        %2442 = vmatpush.msra.mxu0 %v2042
        %2443 = vmatpush.msra.mxu0 %v2041
        %2444 = vmatpush.msra.mxu0 %v2040
        %2445 = vmatmul.f32.gmra.mxu0 %v2427
        %v2446 = vpop.f32.mrf.mxu0
        %v2447 = vadd.f32 0.0, %v2446
        %2448 = vdwg.mxu0
        %v2450 = vsel %vm921, %v2447, 0
        %2452 = vmatpush.xpose.msra.mxu0 0.0
        %2453 = vmatpush.xpose.msra.mxu0 0.0
        %2454 = vmatpush.xpose.msra.mxu0 0.0
        %2455 = vmatpush.xpose.msra.mxu0 0.0
        %2456 = vmatpush.xpose.msra.mxu0 0.0
        %2457 = vmatpush.xpose.msra.mxu0 0.0
        %2458 = vmatpush.xpose.msra.mxu0 0.0
        %2459 = vmatpush.xpose.msra.mxu0 0.0
        %2460 = vmatpush.xpose.msra.mxu0 %v2092
        %2461 = vmatpush.xpose.msra.mxu0 %v2089
        %2462 = vmatpush.xpose.msra.mxu0 %v2086
        %2463 = vmatpush.xpose.msra.mxu0 %v2083
        %2464 = vmatpush.xpose.msra.mxu0 %v2080
        %2465 = vmatpush.xpose.msra.mxu0 %v2077
        %2466 = vmatpush.xpose.msra.mxu0 %v2074
        %2467 = vmatpush.xpose.msra.mxu0 %v2071
        %2468 = vmatmul.f32.gmra.mxu0 %v2450
        %v2469 = vpop.f32.mrf.mxu0
        %v2470 = vadd.f32 0.0, %v2469
        %2471 = vdwg.mxu0
        %v2472 = vmul.f32 %v2470, 0.17677669
        %v2473 = vsel %vm2115, %v2472, -inf
        %v2474 = vrot.slane %v2473, 4
        %v2475 = vmax.f32 %v2473, %v2474
        %v2476 = vrot.slane %v2475, 2
        %v2477 = vmax.f32 %v2475, %v2476
        %v2478 = vrot.slane %v2477, 1
        %v2479 = vmax.f32 %v2477, %v2478
        %v2480 = vsub.f32 %v2472, %v2479
        %v2481 = vmul.f32 %v2480, 1.442695
        %v2482 = vpow.pop %v2481
        %v2483 = vsel %vm2115, %v2482, 0.0
        %v2484 = vrot.slane %v2483, 4
        %v2485 = vadd.f32 %v2483, %v2484
        %v2486 = vrot.slane %v2485, 2
        %v2487 = vadd.f32 %v2485, %v2486
        %v2488 = vrot.slane %v2487, 1
        %v2489 = vadd.f32 %v2487, %v2488
        %v2490 = vrcp.pop %v2489
        %v2491 = vmul.f32 %v2482, %v2490
        %v2492 = vadd.f32 %v2491, 1e-08
        %v2493 = vsel %vm2115, %v2492, 0.0
        %2494 = vadd.xlane.f32.xlu0 %v2493
        %v2495 = vpop.xlane.xlu0 %2494
        %v2496 = vrcp.pop %v2495
        %v2497 = vmul.f32 %v2492, %v2496
        %v2499 = vsel %vm2141, %v2497, 0
        %2501 = vmatpush.msra.mxu0 0.0
        %2502 = vmatpush.msra.mxu0 0.0
        %2503 = vmatpush.msra.mxu0 0.0
        %2504 = vmatpush.msra.mxu0 0.0
        %2505 = vmatpush.msra.mxu0 0.0
        %2506 = vmatpush.msra.mxu0 0.0
        %2507 = vmatpush.msra.mxu0 0.0
        %2508 = vmatpush.msra.mxu0 0.0
        %2509 = vmatpush.msra.mxu0 %v2004
        %2510 = vmatpush.msra.mxu0 %v2001
        %2511 = vmatpush.msra.mxu0 %v1998
        %2512 = vmatpush.msra.mxu0 %v1995
        %2513 = vmatpush.msra.mxu0 %v1992
        %2514 = vmatpush.msra.mxu0 %v1989
        %2515 = vmatpush.msra.mxu0 %v1986
        %2516 = vmatpush.msra.mxu0 %v1983
        %2517 = vmatmul.f32.gmra.mxu0 %v2499
        %v2518 = vpop.f32.mrf.mxu0
        %v2519 = vadd.f32 0.0, %v2518
        %2520 = vdwg.mxu0
        %v2522 = vsel %vm921, %v2519, 0
        %2524 = vmatpush.msra.mxu0 0.0
        %2525 = vmatpush.msra.mxu0 0.0
        %2526 = vmatpush.msra.mxu0 0.0
        %2527 = vmatpush.msra.mxu0 0.0
        %2528 = vmatpush.msra.mxu0 0.0
        %2529 = vmatpush.msra.mxu0 0.0
        %2530 = vmatpush.msra.mxu0 0.0
        %2531 = vmatpush.msra.mxu0 0.0
        %2532 = vmatpush.msra.mxu0 0.0
        %2533 = vmatpush.msra.mxu0 0.0
        %2534 = vmatpush.msra.mxu0 0.0
        %2535 = vmatpush.msra.mxu0 0.0
        %2536 = vmatpush.msra.mxu0 %v2168
        %2537 = vmatpush.msra.mxu0 %v2167
        %2538 = vmatpush.msra.mxu0 %v2166
        %2539 = vmatpush.msra.mxu0 %v2165
        %2540 = vmatmul.f32.gmra.mxu0 %v2522
        %v2541 = vpop.f32.mrf.mxu0
        %v2542 = vadd.f32 %v2171, %v2541
        %2543 = vdwg.mxu0
        %v2544 = vsel %vm921, %v2388, 0
        %2546 = vmatpush.msra.mxu0 0.0
        %2547 = vmatpush.msra.mxu0 0.0
        %2548 = vmatpush.msra.mxu0 0.0
        %2549 = vmatpush.msra.mxu0 0.0
        %2550 = vmatpush.msra.mxu0 0.0
        %2551 = vmatpush.msra.mxu0 0.0
        %2552 = vmatpush.msra.mxu0 0.0
        %2553 = vmatpush.msra.mxu0 0.0
        %2554 = vmatpush.msra.mxu0 0.0
        %2555 = vmatpush.msra.mxu0 0.0
        %2556 = vmatpush.msra.mxu0 0.0
        %2557 = vmatpush.msra.mxu0 0.0
        %2558 = vmatpush.msra.mxu0 %v2199
        %2559 = vmatpush.msra.mxu0 %v2198
        %2560 = vmatpush.msra.mxu0 %v2197
        %2561 = vmatpush.msra.mxu0 %v2196
        %2562 = vmatmul.f32.gmra.mxu0 %v2544
        %v2563 = vpop.f32.mrf.mxu0
        %v2564 = vadd.f32 %v2202, %v2563
        %2565 = vdwg.mxu0
        %v2566 = vadd.f32 %v2542, %v2564
        %v2567 = vsub.f32 0.0, %v2566
        %v2568 = vmul.f32 %v2567, 1.442695
        %v2569 = vpow.pop %v2568
        %v2570 = vadd.f32 %v2569, 1.0
        %v2571 = vrcp.pop %v2570
        %v2572 = vmul.f32 %v2570, %v2571
        %v2573 = vsub.f32 1.0, %v2572
        %v2574 = vmul.f32 %v2571, %v2573
        %v2575 = vadd.f32 %v2571, %v2574
        %vm2576 = vweird.f32 %v2570
        %vm2577 = vweird.f32 %v2571
        %vm2578 = vmor %vm2576, %vm2577
        %v2579 = vsel %vm2578, %v2571, %v2575
        %v2580 = vand.u32 2147483647, %v2570
        %vm2581 = vcmp.eq.f32.partialorder %v2580, 8.507059e+37
        %v2582 = vand.u32 %v2570, 2147483648
        %v2583 = vor.u32 1.1754944e-38, %v2582
        %v2584 = vsel %vm2581, %v2583, %v2579
        %v2585 = vmul.f32 1.0, %v2584
        %2587 = vrot.lane.b32.xlu0 %v2564, 64
        %v2588 = vpop.permute.xlu0 %2587
        %v2590 = vmul.f32 %v2585, %v2588
        %2592 = vrot.lane.b32.xlu0 %v2590, 64
        %v2593 = vpop.permute.xlu0 %2592
        %v2595 = vadd.f32 %v2542, %v2593
        %v2596 = vtanh.pop %v2595
        %v2597 = vsub.f32 1.0, %v2585
        %2599 = vrot.lane.b32.xlu0 %v2596, 96
        %v2600 = vpop.permute.xlu0 %2599
        %v2602 = vmul.f32 %v2597, %v2600
        %v2603 = vmul.f32 %v2585, %v2385
        %v2604 = vadd.f32 %v2602, %v2603
        %2606 = vrot.lane.b32.xlu0 %v2604, 96
        %v2607 = vpop.permute.xlu0 %2606
        %v2609 = vsel %vm2009, %v2607, 0.0
        %2610 = vadd.xlane.f32.xlu0 %v2609
        %v2611 = vpop.xlane.xlu0 %2610
        %v2612 = vmul.f32 %v2611, %v952
        %v2613 = vsub.f32 %v2604, %v2612
        %v2614 = vmul.f32 %v2613, %v2613
        %2616 = vrot.lane.b32.xlu0 %v2614, 96
        %v2617 = vpop.permute.xlu0 %2616
        %v2619 = vsel %vm2009, %v2617, 0.0
        %2620 = vadd.xlane.f32.xlu0 %v2619
        %v2621 = vpop.xlane.xlu0 %2620
        %v2622 = vmul.f32 %v2621, %v952
        %v2623 = vadd.f32 %v2622, 1e-05
        %v2624 = vrsqrt.pop %v2623
        %v2625 = vmul.f32 %v2624, %v2623
        %v2626 = vmul.f32 %v2625, %v2624
        %v2627 = vmul.f32 0.5, %v2626
        %v2628 = vsub.f32 1.5, %v2627
        %v2629 = vmul.f32 %v2624, %v2628
        %vm2630 = vweird.f32 %v2623
        %vm2631 = vweird.f32 %v2624
        %vm2632 = vmor %vm2630, %vm2631
        %v2633 = vsel %vm2632, %v2624, %v2629
        %v2634 = vmul.f32 %v2613, %v2633
        %v2635 = vmul.f32 %v2634, %v2304
        %v2636 = vadd.f32 %v2635, %v2310
        %2638 = vrot.lane.b32.xlu0 %v2636, 96
        %v2639 = vpop.permute.xlu0 %2638
        %v2640 = vsel %vm921, %v2639, 0
        %2642 = vmatpush.msra.mxu0 0.0
        %2643 = vmatpush.msra.mxu0 0.0
        %2644 = vmatpush.msra.mxu0 0.0
        %2645 = vmatpush.msra.mxu0 0.0
        %2646 = vmatpush.msra.mxu0 0.0
        %2647 = vmatpush.msra.mxu0 0.0
        %2648 = vmatpush.msra.mxu0 0.0
        %2649 = vmatpush.msra.mxu0 0.0
        %2650 = vmatpush.msra.mxu0 0.0
        %2651 = vmatpush.msra.mxu0 0.0
        %2652 = vmatpush.msra.mxu0 0.0
        %2653 = vmatpush.msra.mxu0 0.0
        %2654 = vmatpush.msra.mxu0 %v2316
        %2655 = vmatpush.msra.mxu0 %v2315
        %2656 = vmatpush.msra.mxu0 %v2314
        %2657 = vmatpush.msra.mxu0 %v2313
        %2658 = vmatmul.f32.gmra.mxu0 %v2640
        %v2659 = vpop.f32.mrf.mxu0
        %v2660 = vadd.f32 %v2319, %v2659
        %2661 = vdwg.mxu0
        %v2662 = vmax.f32 %v2660, 0.0
        %v2664 = vsel %vm921, %v2662, 0
        %2666 = vmatpush.msra.mxu0 0.0
        %2667 = vmatpush.msra.mxu0 0.0
        %2668 = vmatpush.msra.mxu0 0.0
        %2669 = vmatpush.msra.mxu0 0.0
        %2670 = vmatpush.msra.mxu0 0.0
        %2671 = vmatpush.msra.mxu0 0.0
        %2672 = vmatpush.msra.mxu0 0.0
        %2673 = vmatpush.msra.mxu0 0.0
        %2674 = vmatpush.msra.mxu0 0.0
        %2675 = vmatpush.msra.mxu0 0.0
        %2676 = vmatpush.msra.mxu0 0.0
        %2677 = vmatpush.msra.mxu0 0.0
        %2678 = vmatpush.msra.mxu0 %v2350
        %2679 = vmatpush.msra.mxu0 %v2349
        %2680 = vmatpush.msra.mxu0 %v2348
        %2681 = vmatpush.msra.mxu0 %v2347
        %2682 = vmatmul.f32.gmra.mxu0 %v2664
        %v2683 = vpop.f32.mrf.mxu0
        %v2684 = vadd.f32 0.0, %v2683
        %2685 = vdwg.mxu0
        %2687 = vrot.lane.b32.xlu0 %v2684, 32
        %v2688 = vpop.permute.xlu0 %2687
        %v2690 = vadd.f32 %v2604, %v2688
        %v2691 = vadd.f32 %v2690, %v2383
        %2693 = vrot.lane.b32.xlu0 %v2691, 96
        %v2694 = vpop.permute.xlu0 %2693
        %v2696 = vsel %vm2009, %v2694, 0.0
        %2697 = vadd.xlane.f32.xlu0 %v2696
        %v2698 = vpop.xlane.xlu0 %2697
        %v2699 = vmul.f32 %v2698, %v952
        %v2700 = vsub.f32 %v2691, %v2699
        %v2701 = vmul.f32 %v2700, %v2700
        %2703 = vrot.lane.b32.xlu0 %v2701, 96
        %v2704 = vpop.permute.xlu0 %2703
        %v2706 = vsel %vm2009, %v2704, 0.0
        %2707 = vadd.xlane.f32.xlu0 %v2706
        %v2708 = vpop.xlane.xlu0 %2707
        %v2709 = vmul.f32 %v2708, %v952
        %v2710 = vadd.f32 %v2709, 1e-05
        %v2711 = vrsqrt.pop %v2710
        %v2712 = vmul.f32 %v2711, %v2710
        %v2713 = vmul.f32 %v2712, %v2711
        %v2714 = vmul.f32 0.5, %v2713
        %v2715 = vsub.f32 1.5, %v2714
        %v2716 = vmul.f32 %v2711, %v2715
        %vm2717 = vweird.f32 %v2710
        %vm2718 = vweird.f32 %v2711
        %vm2719 = vmor %vm2717, %vm2718
        %v2720 = vsel %vm2719, %v2711, %v2716
        %v2721 = vmul.f32 %v2700, %v2720
        %v2722 = vmul.f32 %v2721, %v2417
        %v2723 = vadd.f32 %v2722, %v2421
        %2725 = vrot.lane.b32.xlu0 %v2723, 96
        %v2726 = vpop.permute.xlu0 %2725
        %v2727 = vsel %vm921, %v2726, 0
        %2729 = vmatpush.msra.mxu0 0.0
        %2730 = vmatpush.msra.mxu0 0.0
        %2731 = vmatpush.msra.mxu0 0.0
        %2732 = vmatpush.msra.mxu0 0.0
        %2733 = vmatpush.msra.mxu0 0.0
        %2734 = vmatpush.msra.mxu0 0.0
        %2735 = vmatpush.msra.mxu0 0.0
        %2736 = vmatpush.msra.mxu0 0.0
        %2737 = vmatpush.msra.mxu0 0.0
        %2738 = vmatpush.msra.mxu0 0.0
        %2739 = vmatpush.msra.mxu0 0.0
        %2740 = vmatpush.msra.mxu0 0.0
        %2741 = vmatpush.msra.mxu0 %v2043
        %2742 = vmatpush.msra.mxu0 %v2042
        %2743 = vmatpush.msra.mxu0 %v2041
        %2744 = vmatpush.msra.mxu0 %v2040
        %2745 = vmatmul.f32.gmra.mxu0 %v2727
        %v2746 = vpop.f32.mrf.mxu0
        %v2747 = vadd.f32 0.0, %v2746
        %2748 = vdwg.mxu0
        %v2750 = vsel %vm921, %v2747, 0
        %2752 = vmatpush.xpose.msra.mxu0 0.0
        %2753 = vmatpush.xpose.msra.mxu0 0.0
        %2754 = vmatpush.xpose.msra.mxu0 0.0
        %2755 = vmatpush.xpose.msra.mxu0 0.0
        %2756 = vmatpush.xpose.msra.mxu0 0.0
        %2757 = vmatpush.xpose.msra.mxu0 0.0
        %2758 = vmatpush.xpose.msra.mxu0 0.0
        %2759 = vmatpush.xpose.msra.mxu0 0.0
        %2760 = vmatpush.xpose.msra.mxu0 %v2092
        %2761 = vmatpush.xpose.msra.mxu0 %v2089
        %2762 = vmatpush.xpose.msra.mxu0 %v2086
        %2763 = vmatpush.xpose.msra.mxu0 %v2083
        %2764 = vmatpush.xpose.msra.mxu0 %v2080
        %2765 = vmatpush.xpose.msra.mxu0 %v2077
        %2766 = vmatpush.xpose.msra.mxu0 %v2074
        %2767 = vmatpush.xpose.msra.mxu0 %v2071
        %2768 = vmatmul.f32.gmra.mxu0 %v2750
        %v2769 = vpop.f32.mrf.mxu0
        %v2770 = vadd.f32 0.0, %v2769
        %2771 = vdwg.mxu0
        %v2772 = vmul.f32 %v2770, 0.17677669
        %v2773 = vsel %vm2115, %v2772, -inf
        %v2774 = vrot.slane %v2773, 4
        %v2775 = vmax.f32 %v2773, %v2774
        %v2776 = vrot.slane %v2775, 2
        %v2777 = vmax.f32 %v2775, %v2776
        %v2778 = vrot.slane %v2777, 1
        %v2779 = vmax.f32 %v2777, %v2778
        %v2780 = vsub.f32 %v2772, %v2779
        %v2781 = vmul.f32 %v2780, 1.442695
        %v2782 = vpow.pop %v2781
        %v2783 = vsel %vm2115, %v2782, 0.0
        %v2784 = vrot.slane %v2783, 4
        %v2785 = vadd.f32 %v2783, %v2784
        %v2786 = vrot.slane %v2785, 2
        %v2787 = vadd.f32 %v2785, %v2786
        %v2788 = vrot.slane %v2787, 1
        %v2789 = vadd.f32 %v2787, %v2788
        %v2790 = vrcp.pop %v2789
        %v2791 = vmul.f32 %v2782, %v2790
        %v2792 = vadd.f32 %v2791, 1e-08
        %v2793 = vsel %vm2115, %v2792, 0.0
        %2794 = vadd.xlane.f32.xlu0 %v2793
        %v2795 = vpop.xlane.xlu0 %2794
        %v2796 = vrcp.pop %v2795
        %v2797 = vmul.f32 %v2792, %v2796
        %v2799 = vsel %vm2141, %v2797, 0
        %2801 = vmatpush.msra.mxu0 0.0
        %2802 = vmatpush.msra.mxu0 0.0
        %2803 = vmatpush.msra.mxu0 0.0
        %2804 = vmatpush.msra.mxu0 0.0
        %2805 = vmatpush.msra.mxu0 0.0
        %2806 = vmatpush.msra.mxu0 0.0
        %2807 = vmatpush.msra.mxu0 0.0
        %2808 = vmatpush.msra.mxu0 0.0
        %2809 = vmatpush.msra.mxu0 %v2004
        %2810 = vmatpush.msra.mxu0 %v2001
        %2811 = vmatpush.msra.mxu0 %v1998
        %2812 = vmatpush.msra.mxu0 %v1995
        %2813 = vmatpush.msra.mxu0 %v1992
        %2814 = vmatpush.msra.mxu0 %v1989
        %2815 = vmatpush.msra.mxu0 %v1986
        %2816 = vmatpush.msra.mxu0 %v1983
        %2817 = vmatmul.f32.gmra.mxu0 %v2799
        %v2818 = vpop.f32.mrf.mxu0
        %v2819 = vadd.f32 0.0, %v2818
        %2820 = vdwg.mxu0
        %v2822 = vsel %vm921, %v2819, 0
        %2824 = vmatpush.msra.mxu0 0.0
        %2825 = vmatpush.msra.mxu0 0.0
        %2826 = vmatpush.msra.mxu0 0.0
        %2827 = vmatpush.msra.mxu0 0.0
        %2828 = vmatpush.msra.mxu0 0.0
        %2829 = vmatpush.msra.mxu0 0.0
        %2830 = vmatpush.msra.mxu0 0.0
        %2831 = vmatpush.msra.mxu0 0.0
        %2832 = vmatpush.msra.mxu0 0.0
        %2833 = vmatpush.msra.mxu0 0.0
        %2834 = vmatpush.msra.mxu0 0.0
        %2835 = vmatpush.msra.mxu0 0.0
        %2836 = vmatpush.msra.mxu0 %v2168
        %2837 = vmatpush.msra.mxu0 %v2167
        %2838 = vmatpush.msra.mxu0 %v2166
        %2839 = vmatpush.msra.mxu0 %v2165
        %2840 = vmatmul.f32.gmra.mxu0 %v2822
        %v2841 = vpop.f32.mrf.mxu0
        %v2842 = vadd.f32 %v2171, %v2841
        %2843 = vdwg.mxu0
        %v2844 = vsel %vm921, %v2694, 0
        %2846 = vmatpush.msra.mxu0 0.0
        %2847 = vmatpush.msra.mxu0 0.0
        %2848 = vmatpush.msra.mxu0 0.0
        %2849 = vmatpush.msra.mxu0 0.0
        %2850 = vmatpush.msra.mxu0 0.0
        %2851 = vmatpush.msra.mxu0 0.0
        %2852 = vmatpush.msra.mxu0 0.0
        %2853 = vmatpush.msra.mxu0 0.0
        %2854 = vmatpush.msra.mxu0 0.0
        %2855 = vmatpush.msra.mxu0 0.0
        %2856 = vmatpush.msra.mxu0 0.0
        %2857 = vmatpush.msra.mxu0 0.0
        %2858 = vmatpush.msra.mxu0 %v2199
        %2859 = vmatpush.msra.mxu0 %v2198
        %2860 = vmatpush.msra.mxu0 %v2197
        %2861 = vmatpush.msra.mxu0 %v2196
        %2862 = vmatmul.f32.gmra.mxu0 %v2844
        %v2863 = vpop.f32.mrf.mxu0
        %v2864 = vadd.f32 %v2202, %v2863
        %2865 = vdwg.mxu0
        %v2866 = vadd.f32 %v2842, %v2864
        %v2867 = vsub.f32 0.0, %v2866
        %v2868 = vmul.f32 %v2867, 1.442695
        %v2869 = vpow.pop %v2868
        %v2870 = vadd.f32 %v2869, 1.0
        %v2871 = vrcp.pop %v2870
        %v2872 = vmul.f32 %v2870, %v2871
        %v2873 = vsub.f32 1.0, %v2872
        %v2874 = vmul.f32 %v2871, %v2873
        %v2875 = vadd.f32 %v2871, %v2874
        %vm2876 = vweird.f32 %v2870
        %vm2877 = vweird.f32 %v2871
        %vm2878 = vmor %vm2876, %vm2877
        %v2879 = vsel %vm2878, %v2871, %v2875
        %v2880 = vand.u32 2147483647, %v2870
        %vm2881 = vcmp.eq.f32.partialorder %v2880, 8.507059e+37
        %v2882 = vand.u32 %v2870, 2147483648
        %v2883 = vor.u32 1.1754944e-38, %v2882
        %v2884 = vsel %vm2881, %v2883, %v2879
        %v2885 = vmul.f32 1.0, %v2884
        %2887 = vrot.lane.b32.xlu0 %v2864, 64
        %v2888 = vpop.permute.xlu0 %2887
        %v2890 = vmul.f32 %v2885, %v2888
        %2892 = vrot.lane.b32.xlu0 %v2890, 64
        %v2893 = vpop.permute.xlu0 %2892
        %v2895 = vadd.f32 %v2842, %v2893
        %v2896 = vtanh.pop %v2895
        %v2897 = vsub.f32 1.0, %v2885
        %2899 = vrot.lane.b32.xlu0 %v2896, 96
        %v2900 = vpop.permute.xlu0 %2899
        %v2902 = vmul.f32 %v2897, %v2900
        %v2903 = vmul.f32 %v2885, %v2691
        %v2904 = vadd.f32 %v2902, %v2903
        %2906 = vrot.lane.b32.xlu0 %v2904, 96
        %v2907 = vpop.permute.xlu0 %2906
        %v2909 = vsel %vm2009, %v2907, 0.0
        %2910 = vadd.xlane.f32.xlu0 %v2909
        %v2911 = vpop.xlane.xlu0 %2910
        %v2912 = vmul.f32 %v2911, %v952
        %v2913 = vsub.f32 %v2904, %v2912
        %v2914 = vmul.f32 %v2913, %v2913
        %2916 = vrot.lane.b32.xlu0 %v2914, 96
        %v2917 = vpop.permute.xlu0 %2916
        %v2919 = vsel %vm2009, %v2917, 0.0
        %2920 = vadd.xlane.f32.xlu0 %v2919
        %v2921 = vpop.xlane.xlu0 %2920
        %v2922 = vmul.f32 %v2921, %v952
        %v2923 = vadd.f32 %v2922, 1e-05
        %v2924 = vrsqrt.pop %v2923
        %v2925 = vmul.f32 %v2924, %v2923
        %v2926 = vmul.f32 %v2925, %v2924
        %v2927 = vmul.f32 0.5, %v2926
        %v2928 = vsub.f32 1.5, %v2927
        %v2929 = vmul.f32 %v2924, %v2928
        %vm2930 = vweird.f32 %v2923
        %vm2931 = vweird.f32 %v2924
        %vm2932 = vmor %vm2930, %vm2931
        %v2933 = vsel %vm2932, %v2924, %v2929
        %v2934 = vmul.f32 %v2913, %v2933
        %v2935 = vmul.f32 %v2934, %v2304
        %v2936 = vadd.f32 %v2935, %v2310
        %2938 = vrot.lane.b32.xlu0 %v2936, 96
        %v2939 = vpop.permute.xlu0 %2938
        %v2940 = vsel %vm921, %v2939, 0
        %2942 = vmatpush.msra.mxu0 0.0
        %2943 = vmatpush.msra.mxu0 0.0
        %2944 = vmatpush.msra.mxu0 0.0
        %2945 = vmatpush.msra.mxu0 0.0
        %2946 = vmatpush.msra.mxu0 0.0
        %2947 = vmatpush.msra.mxu0 0.0
        %2948 = vmatpush.msra.mxu0 0.0
        %2949 = vmatpush.msra.mxu0 0.0
        %2950 = vmatpush.msra.mxu0 0.0
        %2951 = vmatpush.msra.mxu0 0.0
        %2952 = vmatpush.msra.mxu0 0.0
        %2953 = vmatpush.msra.mxu0 0.0
        %2954 = vmatpush.msra.mxu0 %v2316
        %2955 = vmatpush.msra.mxu0 %v2315
        %2956 = vmatpush.msra.mxu0 %v2314
        %2957 = vmatpush.msra.mxu0 %v2313
        %2958 = vmatmul.f32.gmra.mxu0 %v2940
        %v2959 = vpop.f32.mrf.mxu0
        %v2960 = vadd.f32 %v2319, %v2959
        %2961 = vdwg.mxu0
        %v2962 = vmax.f32 %v2960, 0.0
        %v2964 = vsel %vm921, %v2962, 0
        %2966 = vmatpush.msra.mxu0 0.0
        %2967 = vmatpush.msra.mxu0 0.0
        %2968 = vmatpush.msra.mxu0 0.0
        %2969 = vmatpush.msra.mxu0 0.0
        %2970 = vmatpush.msra.mxu0 0.0
        %2971 = vmatpush.msra.mxu0 0.0
        %2972 = vmatpush.msra.mxu0 0.0
        %2973 = vmatpush.msra.mxu0 0.0
        %2974 = vmatpush.msra.mxu0 0.0
        %2975 = vmatpush.msra.mxu0 0.0
        %2976 = vmatpush.msra.mxu0 0.0
        %2977 = vmatpush.msra.mxu0 0.0
        %2978 = vmatpush.msra.mxu0 %v2350
        %2979 = vmatpush.msra.mxu0 %v2349
        %2980 = vmatpush.msra.mxu0 %v2348
        %2981 = vmatpush.msra.mxu0 %v2347
        %2982 = vmatmul.f32.gmra.mxu0 %v2964
        %v2983 = vpop.f32.mrf.mxu0
        %v2984 = vadd.f32 0.0, %v2983
        %2985 = vdwg.mxu0
        %2987 = vrot.lane.b32.xlu0 %v2984, 32
        %v2988 = vpop.permute.xlu0 %2987
        %v2990 = vadd.f32 %v2904, %v2988
        %v2991 = vadd.f32 %v2990, %v2383
        %2993 = vrot.lane.b32.xlu0 %v2991, 96
        %v2994 = vpop.permute.xlu0 %2993
        %2996 = vst.msk [vmem:[%s905] sm:$0xf] %vm2009, %v2994
        %s2997 = sand.u32 %s604, 1
        %s2998 = scalar_lea.sflag [#allocation4], %s2997
        %s2999 = sand.u32 %s604, 1
        %s3000 = smul.addr %s2999, 4
        %s3001 = scalar_lea.vmem [#allocation16], %s3000
        // Predicated region
        $region157: #{slot_attention_forward.1} parent=123 // pred_check
          %p3002 = pneg %p614
        $region158: #{slot_attention_forward.1} parent=123 // pred_check_branch
          %3004 = sbr.rel (%p3002) target = $region160
        $region159: #{slot_attention_forward.1} parent=123 // pred_region
          %3006 = vsyncadd %s2998, 0
          %s3007 = smul.addr %s45, 4
          %s3008 = scalar_lea.hbm %s26, %s3007
          %s3010 = sshll.u32 %s3001, 4
          %s3011 = int_to_ptr.vmem [resolvable:$true] %s3010
          %s3012 = sshll.u32 %s3008, 4
          %s3013 = int_to_ptr.hbm [resolvable:$true] %s3012
          %3015 = dma.vmem_to_hbm [thread:$0]  %s3011, 64, %s3013, %s2998
        $region160: #{slot_attention_forward.1} parent=123 // pred_fallthru
          _
      $region124: #{slot_attention_forward.1} parent=5 // pred_fallthru
        _
      %p3016 = scmp.le.s32.totalorder 2, %s40
      // Predicated region
      $region161: #{slot_attention_forward.1} parent=5 // pred_check
        %p3017 = pneg %p3016
      $region162: #{slot_attention_forward.1} parent=5 // pred_check_branch
        %3019 = sbr.rel (%p3017) target = $region164
      $region163: #{slot_attention_forward.1} parent=5 // pred_region
        %s3020 = ssub.s32 %s40, 2
        // Predicated region
        $region165: #{slot_attention_forward.1} parent=163 // pred_check
          %p3021 = pneg %p620
        $region166: #{slot_attention_forward.1} parent=163 // pred_check_branch
          %3023 = sbr.rel (%p3021) target = $region168
        $region167: #{slot_attention_forward.1} parent=163 // pred_region
          %s3024 = sand.u32 %s605, 1
          %s3025 = scalar_lea.sflag [#allocation4], %s3024
          %s3026 = sand.u32 %s605, 1
          %s3027 = smul.addr %s3026, 4
          %s3028 = scalar_lea.vmem [#allocation16], %s3027
          %3030 = dma.done %s3025, 64
        $region168: #{slot_attention_forward.1} parent=163 // pred_fallthru
          _
      $region164: #{slot_attention_forward.1} parent=5 // pred_fallthru
        _
    $region6: #{slot_attention_forward.1} parent=1 // loop_footer
      %s44 = sadd.s32 1, %s40
    $region7: #{slot_attention_forward.1} parent=1 // loop_footer_branch
      %39 = sbr.rel target = $region3
    $region8: #{slot_attention_forward.1} parent=1 // loop_exit
      _
    %3031 = vsyncpa [#allocation3], 1
    %s3032 = scalar_lea.sflag [#allocation3], 1
    %3033 = vsyncpa %s3032, 1
    %3034 = vsyncpa [#allocation6], 1
    %3035 = vsyncpa [#allocation9], 1
    %3036 = vsyncpa [#allocation12], 1
    %3037 = vsyncpa [#allocation15], 1
    %3038 = vsyncpa [#allocation4], 1
    %s3039 = scalar_lea.sflag [#allocation4], 1
    %3040 = vsyncpa %s3039, 1

</llo_original>
